<compile_context>
chip_gen: v5e
topology: v5e:2x2
jax: 0.10.0
libtpu: 0.0.40
codegen_flags: <defaults>
</compile_context>

<pallas_src>
import jax
import jax.numpy as jnp
from jax.experimental import pallas as pl
from jax.experimental.pallas import tpu as pltpu


B_TILE = 8  # batch rows per grid program (= sublane granule); grid axis is "parallel"


# ----------------------------- fused decoder kernel -----------------------------

def _make_decoder_kernel(L, T, H):
    H4 = 4 * H
    bf16, f32 = jnp.bfloat16, jnp.float32

    def _sig(z):
        # sigmoid(z) == 0.5*(tanh(z/2)+1): exact formulation, one EUP push.
        return 0.5 * (jnp.tanh(0.5 * z) + 1.0)

    def _cell(g, c_prev):
        # torch gate order: i, f, g, o   (gate math stays f32 on every chip generation)
        i_g = _sig(g[:, 0 * H:1 * H])
        f_g = _sig(g[:, 1 * H:2 * H])
        g_g = jnp.tanh(g[:, 2 * H:3 * H])
        o_g = _sig(g[:, 3 * H:4 * H])
        c_new = f_g * c_prev + i_g * g_g
        return o_g * jnp.tanh(c_new), c_new

    def kernel(*refs):
        n_w = 3 * L
        x_ref, h0_ref, c0_ref, enc_ref = refs[0:4]
        w_refs = refs[4:4 + n_w]
        (wsq_f_ref, wsq_r_ref, wc_con_ref, wc_top_f_ref, wc_top_r_ref,
         bc_ref, wo_ref, bo_ref) = refs[4 + n_w:12 + n_w]
        pred_ref, state_ref = refs[12 + n_w:14 + n_w]

        x = x_ref[...]                                  # (T, B, H) embedded tokens (eval dropout = id)
        B = x.shape[1]
        flat_in = x.reshape(T * B, H)                   # rows grouped by timestep
        hn_parts, cn_parts = [], []
        h_f = h_r = None

        for l in range(L):
            wih_ref, whh_ref, b_ref = w_refs[3 * l:3 * (l + 1)]
            last_layer = (l == L - 1)

            # ---- hoisted input projection: ONE bf16 MXU matmul covers every timestep
            #      and both directions; bias folded in, kept as a VALUE (no scratch). ----
            gx = (jnp.dot(flat_in.astype(bf16), wih_ref[...],
                          preferred_element_type=f32)
                  + b_ref[...])                         # (T*B, 8H) f32

            # block-diagonal W_hh (2H, 8H): one weight-stationary dot per step for BOTH
            # directions (zero off-blocks contribute exact zeros).
            whh_bd = whh_ref[...]                       # bf16, loaded once per layer
            # TODO(synk): on v5e (4x128^2 MXU) drive this weight-stationary via
            # pltpu.matmul_push_rhs/_acc_lhs/_pop per direction instead of the 512-col
            # block-diagonal form, which wastes two all-zero 128-column tiles there.

            h_f = h0_ref[2 * l]
            c_f = c0_ref[2 * l]
            h_r = h0_ref[2 * l + 1]
            c_r = c0_ref[2 * l + 1]

            outs_f = [None] * T
            outs_r = [None] * T

            # T is small/static -> fully unrolled (static slices, full LLO visibility).
            # TODO(synk): for long decoder sequences move t onto lax.fori_loop / a grid axis.
            for t in range(T):
                h_cat = jnp.concatenate([h_f, h_r], axis=-1).astype(bf16)        # (B, 2H)
                rec = jnp.dot(h_cat, whh_bd, preferred_element_type=f32)         # (B, 8H)
                g_f = gx[t * B:(t + 1) * B, :H4] + rec[:, :H4]            # fwd eats time t
                g_r = gx[(T - 1 - t) * B:(T - t) * B, H4:] + rec[:, H4:]  # rev eats time T-1-t
                h_f, c_f = _cell(g_f, c_f)
                h_r, c_r = _cell(g_r, c_r)
                if not last_layer:                      # last layer's sequence is unused
                    outs_f[t] = h_f
                    outs_r[T - 1 - t] = h_r

            hn_parts += [h_f, h_r]                      # PyTorch order: 2*layer + direction
            cn_parts += [c_f, c_r]

            if not last_layer:
                # next layer's (T*B, 2H) input assembled from values (no VMEM round-trip,
                # no masked sub-128-lane stores, no store->load barrier at the boundary)
                flat_in = jnp.concatenate(
                    [jnp.concatenate([outs_f[t], outs_r[t]], axis=-1) for t in range(T)],
                    axis=0)

        # ---------------- attention + combiner + output head ----------------
        enc = enc_ref[...]                              # (B, S, 2H) f32

        # q = top @ W_s with top = [h_f | h_r]; W_s rows de-interleaved + split in glue.
        q = (jnp.dot(h_f.astype(bf16), wsq_f_ref[...], preferred_element_type=f32)
             + jnp.dot(h_r.astype(bf16), wsq_r_ref[...], preferred_element_type=f32))   # (B, 2H)

        # scores[b, s] = enc[b, s, :] . q[b, :]  (score bias is constant over s -> cancels)
        scores = jnp.sum(enc * q[:, None, :], axis=-1)                                  # (B, S)
        scores = scores - jnp.max(scores, axis=-1, keepdims=True)
        es = jnp.exp(scores)
        attn = es * pl.reciprocal(jnp.sum(es, axis=-1, keepdims=True), approx=True)
        con = jnp.sum(enc * attn[:, :, None], axis=1)                                   # (B, 2H)
        # TODO(synk): for large S switch scores/context to batched MXU einsums and tile S.

        h_tilde = jnp.tanh(
            jnp.dot(con.astype(bf16), wc_con_ref[...], preferred_element_type=f32)
            + jnp.dot(h_f.astype(bf16), wc_top_f_ref[...], preferred_element_type=f32)
            + jnp.dot(h_r.astype(bf16), wc_top_r_ref[...], preferred_element_type=f32)
            + bc_ref[...])                                                              # (B, H)

        logits = (jnp.dot(h_tilde.astype(bf16), wo_ref[...], preferred_element_type=f32)
                  + bo_ref[...])                                                        # (B, Vp)
        shifted = logits - jnp.max(logits, axis=-1, keepdims=True)
        lse = jnp.log(jnp.sum(jnp.exp(shifted), axis=-1, keepdims=True))
        pred_ref[...] = shifted - lse                   # log_softmax; pad cols ~-1e30, sliced in glue

        # lane-dense packed final states: [h(2L dirs) | c(2L dirs)], unpacked in glue
        state_ref[...] = jnp.concatenate(hn_parts + cn_parts, axis=-1)                  # (B, 4LH)

    return kernel


# ----------------------------- wrapper (glue) -----------------------------

@jax.jit
def decoder_attn_forward(params, input_ids, h0, c0, encoder_hiddens):
    T, B = input_ids.shape
    V, H = params["emb"].shape
    L = len(params["lstm"])
    Vp = params["wo_t"].shape[1]
    S = encoder_hiddens.shape[0]
    H2 = 2 * H

    # Embedding lookup (index gather) + nn.Dropout (eval -> identity) in plain-JAX glue.
    x = jnp.take(params["emb"], input_ids, axis=0)            # (T, B, H)
    enc_b = jnp.transpose(encoder_hiddens, (1, 0, 2))         # (B, S, 2H)

    weights = ([w for layer in params["lstm"] for w in layer]             # wih, whh_bd, b per layer
               + [params["wsq_f"], params["wsq_r"], params["wc_con_t"],
                  params["wc_top_f"], params["wc_top_r"], params["bc"],
                  params["wo_t"], params["bo"]])

    bt = B_TILE if B % B_TILE == 0 else B                     # batch rows per grid program
    grid = (B // bt,)

    def full_spec(a):                                         # whole weight resident in VMEM;
        nd = a.ndim                                           # constant block index -> fetched once
        return pl.BlockSpec(a.shape, lambda i: (0,) * nd)

    in_specs = ([pl.BlockSpec((T, bt, H), lambda i: (0, i, 0)),        # x
                 pl.BlockSpec((2 * L, bt, H), lambda i: (0, i, 0)),    # h0
                 pl.BlockSpec((2 * L, bt, H), lambda i: (0, i, 0)),    # c0
                 pl.BlockSpec((bt, S, H2), lambda i: (i, 0, 0))]       # encoder hiddens
                + [full_spec(w) for w in weights])
    out_specs = (pl.BlockSpec((bt, Vp), lambda i: (i, 0)),             # lane-dense logits
                 pl.BlockSpec((bt, 4 * L * H), lambda i: (i, 0)))      # packed (h_n, c_n)

    pred_pad, state = pl.pallas_call(
        _make_decoder_kernel(L=L, T=T, H=H),
        out_shape=(jax.ShapeDtypeStruct((B, Vp), jnp.float32),
                   jax.ShapeDtypeStruct((B, 4 * L * H), jnp.float32)),
        grid=grid,
        in_specs=in_specs,
        out_specs=out_specs,
        compiler_params=pltpu.CompilerParams(dimension_semantics=("parallel",)),
    )(x, h0, c0, enc_b, *weights)
    # TODO(synk): at production scale (hidden_size~1000, real vocab) tile the Vp axis with a
    # lane-dense grid dimension, pad H to 64/128 so 2H is lane-dense, and re-derive VMEM
    # residency for v7x's 64 MiB (vmem_limit_bytes with double-buffer headroom).

    pred = pred_pad[:, :V]                                    # drop lane padding
    st = jnp.transpose(state.reshape(B, 4 * L, H), (1, 0, 2)) # (4L, B, H)
    h_n, c_n = st[:2 * L], st[2 * L:]
    # matches torch return: (log_softmax preds, (h_n, c_n))
    return pred, (h_n, c_n)


# ----------------------------- params -----------------------------

def init_params(key, H, V, L):
    H2, H4, H8 = 2 * H, 4 * H, 8 * H
    Vp = ((V + 127) // 128) * 128
    keys = iter(jax.random.split(key, 64))
    s = 1.0 / (H ** 0.5)

    def u(k, shape):
        return jax.random.uniform(k, shape, jnp.float32, -s, s)

    emb = jax.random.normal(next(keys), (V, H), jnp.float32)

    raw_lstm, packed_lstm = [], []
    for l in range(L):
        in_size = H if l == 0 else H2
        # torch-layout weights per direction; biases folded (b_ih + b_hh)
        w_ih_f = u(next(keys), (H4, in_size)); w_hh_f = u(next(keys), (H4, H))
        b_f = u(next(keys), (H4,)) + u(next(keys), (H4,))
        w_ih_r = u(next(keys), (H4, in_size)); w_hh_r = u(next(keys), (H4, H))
        b_r = u(next(keys), (H4,)) + u(next(keys), (H4,))
        raw_lstm.append((w_ih_f, w_hh_f, b_f, w_ih_r, w_hh_r, b_r))

        # packed for the fused kernel (bf16 MXU operands, f32 biases/accumulation):
        wih = jnp.concatenate([w_ih_f.T, w_ih_r.T], axis=1).astype(jnp.bfloat16)   # (in, 8H)
        whh_bd = (jnp.zeros((H2, H8), jnp.float32)                                  # block-diag
                  .at[:H, :H4].set(w_hh_f.T)
                  .at[H:, H4:].set(w_hh_r.T)).astype(jnp.bfloat16)                  # (2H, 8H)
        b = jnp.concatenate([b_f, b_r])[None, :]                                    # (1, 8H) f32
        packed_lstm.append((wih, whh_bd, b))

    w_s = u(next(keys), (H2, H2))              # score_learner weight (out, in)
    w_c = u(next(keys), (H, 2 * H2))           # context_combiner (4H -> H)
    b_c = u(next(keys), (H,))
    w_o = u(next(keys), (V, H))                # output Linear (H -> V)
    b_o = u(next(keys), (V,))

    raw = dict(emb=emb, lstm=raw_lstm, w_s=w_s, w_c=w_c, b_c=b_c, w_o=w_o, b_o=b_o)

    # torch: top_hidden = h_n[last layer].permute(1,2,0).view(B,2H) -> features interleaved
    # fwd/rev.  The kernel keeps top split as (h_f, h_r); de-interleave + split the rows of
    # every weight that consumes `top` here in glue (free) so the math is identical.
    wc_t = w_c.T                               # (4H, H)
    params = dict(
        emb=emb,
        lstm=packed_lstm,
        wsq_f=w_s[0::2, :].astype(jnp.bfloat16),          # rows for fwd top features
        wsq_r=w_s[1::2, :].astype(jnp.bfloat16),          # rows for rev top features
        wc_con_t=wc_t[:H2].astype(jnp.bfloat16),
        wc_top_f=wc_t[H2:][0::2, :].astype(jnp.bfloat16),
        wc_top_r=wc_t[H2:][1::2, :].astype(jnp.bfloat16),
        bc=b_c[None, :],
        wo_t=jnp.zeros((H, Vp), jnp.float32).at[:, :V].set(w_o.T).astype(jnp.bfloat16),
        bo=jnp.full((1, Vp), -1e30, jnp.float32).at[0, :V].set(b_o),
    )
    # score_learner bias is intentionally absent: it is constant over source positions
    # and cancels in the softmax over S.
    return params, raw


# ----------------------------- plain-JAX reference -----------------------------

def reference_forward(raw, input_ids, h0, c0, encoder_hiddens):
    """Plain-JAX mirror of the PyTorch DecoderAttn forward (eval mode) over RAW
    torch-layout weights; validates the kernel's fused packing / fwd-rev de-interleave.
    Matmul operands are cast to bf16 at the same points as the kernel (its deliberate
    MXU precision choice) so the comparison isolates structural correctness."""
    bf16, f32 = jnp.bfloat16, jnp.float32

    def mm(a, b):
        return jnp.dot(a.astype(bf16), b.astype(bf16), preferred_element_type=f32)

    T, B = input_ids.shape
    H = raw["emb"].shape[1]
    L = len(raw["lstm"])

    x = jnp.take(raw["emb"], input_ids, axis=0)       # embedding; dropout = identity (eval)

    def run_dir(seq, w_ih, w_hh, b, h, c, reverse):
        outs = [None] * T
        order = range(T - 1, -1, -1) if reverse else range(T)
        for t in order:
            g = mm(seq[t], w_ih.T) + mm(h, w_hh.T) + b
            i = jax.nn.sigmoid(g[:, 0 * H:1 * H])
            f = jax.nn.sigmoid(g[:, 1 * H:2 * H])
            gg = jnp.tanh(g[:, 2 * H:3 * H])
            o = jax.nn.sigmoid(g[:, 3 * H:4 * H])
            c = f * c + i * gg
            h = o * jnp.tanh(c)
            outs[t] = h
        return jnp.stack(outs, 0), h, c

    layer_in, h_list, c_list = x, [], []
    for l in range(L):
        w_ih_f, w_hh_f, b_f, w_ih_r, w_hh_r, b_r = raw["lstm"][l]
        out_f, hf, cf = run_dir(layer_in, w_ih_f, w_hh_f, b_f, h0[2 * l], c0[2 * l], False)
        out_r, hr, cr = run_dir(layer_in, w_ih_r, w_hh_r, b_r, h0[2 * l + 1], c0[2 * l + 1], True)
        layer_in = jnp.concatenate([out_f, out_r], axis=-1)
        h_list += [hf, hr]
        c_list += [cf, cr]
    h_n, c_n = jnp.stack(h_list, 0), jnp.stack(c_list, 0)

    # top_hidden = h_n[last layer].permute(1,2,0).view(B, 2H) -> fwd/rev interleaved
    top = jnp.stack([h_n[2 * (L - 1)], h_n[2 * (L - 1) + 1]], axis=-1).reshape(B, 2 * H)

    enc = jnp.transpose(encoder_hiddens, (1, 0, 2))   # (B, S, 2H)
    # bmm(score_learner(enc), top) == enc . (top @ W_s) (bilinear associativity);
    # the score-learner bias is constant over source positions and cancels in softmax.
    q = mm(top, raw["w_s"])
    scores = jnp.einsum("bsj,bj->bs", enc, q)
    attn = jax.nn.softmax(scores, axis=-1)
    con = jnp.einsum("bs,bsj->bj", attn, enc)
    h_tilde = jnp.tanh(mm(jnp.concatenate([con, top], axis=-1), raw["w_c"].T) + raw["b_c"])
    pred = jax.nn.log_softmax(mm(h_tilde, raw["w_o"].T) + raw["b_o"], axis=-1)
    return pred, (h_n, c_n)


# ----------------------------- main -----------------------------

if __name__ == "__main__":
    # B=16 -> two 8-row "parallel" grid programs (both v7x TensorCores busy); small dims.
    H, V, L = 32, 48, 2          # hidden_size, output_size (vocab), num_layers
    B, T_DEC, S_SRC = 16, 3, 8   # batch, decoder seq len, encoder (source) seq len

    key = jax.random.PRNGKey(0)
    k_par, k_ids, k_h, k_c, k_enc = jax.random.split(key, 5)

    params, raw = init_params(k_par, H, V, L)
    input_ids = jax.random.randint(k_ids, (T_DEC, B), 0, V, dtype=jnp.int32)
    h0 = jax.random.normal(k_h, (L * 2, B, H), jnp.float32)
    c0 = jax.random.normal(k_c, (L * 2, B, H), jnp.float32)
    encoder_hiddens = jax.random.normal(k_enc, (S_SRC, B, 2 * H), jnp.float32)

    pred, (h_n, c_n) = decoder_attn_forward(params, input_ids, h0, c0, encoder_hiddens)
    jax.block_until_ready((pred, h_n, c_n))

    assert pred.shape == (B, V)
    assert h_n.shape == (L * 2, B, H) and c_n.shape == (L * 2, B, H)
    assert bool(jnp.all(jnp.isfinite(pred)))

    # parity vs the plain-JAX mirror of the torch forward (catches any packing /
    # de-interleaving bug, which would produce O(1) errors; tolerances only have to
    # cover rounding-point / transcendental-approximation differences).
    pred_ref, (h_ref, c_ref) = reference_forward(raw, input_ids, h0, c0, encoder_hiddens)
    assert float(jnp.max(jnp.abs(pred - pred_ref))) < 5e-2
    assert float(jnp.max(jnp.abs(h_n - h_ref))) < 2e-2
    assert float(jnp.max(jnp.abs(c_n - c_ref))) < 2e-2

    print("KERNEL_OK")
</pallas_src>

<mosaic_0001>
module attributes {stable_mosaic.version = 11 : i64} {
  func.func @kernel(%arg0: i32, %arg1: memref<3x8x32xf32, #tpu.memory_space<vmem>>, %arg2: memref<4x8x32xf32, #tpu.memory_space<vmem>>, %arg3: memref<4x8x32xf32, #tpu.memory_space<vmem>>, %arg4: memref<8x8x64xf32, #tpu.memory_space<vmem>>, %arg5: memref<32x256xbf16, #tpu.memory_space<vmem>>, %arg6: memref<64x256xbf16, #tpu.memory_space<vmem>>, %arg7: memref<1x256xf32, #tpu.memory_space<vmem>>, %arg8: memref<64x256xbf16, #tpu.memory_space<vmem>>, %arg9: memref<64x256xbf16, #tpu.memory_space<vmem>>, %arg10: memref<1x256xf32, #tpu.memory_space<vmem>>, %arg11: memref<32x64xbf16, #tpu.memory_space<vmem>>, %arg12: memref<32x64xbf16, #tpu.memory_space<vmem>>, %arg13: memref<64x32xbf16, #tpu.memory_space<vmem>>, %arg14: memref<32x32xbf16, #tpu.memory_space<vmem>>, %arg15: memref<32x32xbf16, #tpu.memory_space<vmem>>, %arg16: memref<1x32xf32, #tpu.memory_space<vmem>>, %arg17: memref<32x128xbf16, #tpu.memory_space<vmem>>, %arg18: memref<1x128xf32, #tpu.memory_space<vmem>>, %arg19: memref<8x128xf32, #tpu.memory_space<vmem>>, %arg20: memref<8x256xf32, #tpu.memory_space<vmem>>) attributes {dimension_semantics = [#tpu.dimension_semantics<parallel>], iteration_bounds = array<i64: 2>, scalar_prefetch = 0 : i64, scratch_operands = 0 : i64, tpu.core_type = #tpu.core_type<tc>, window_params = [{transform_indices = @transform_0, window_bounds = array<i64: 3, 8, 32>}, {transform_indices = @transform_1, window_bounds = array<i64: 4, 8, 32>}, {transform_indices = @transform_2, window_bounds = array<i64: 4, 8, 32>}, {transform_indices = @transform_3, window_bounds = array<i64: 8, 8, 64>}, {pipeline_mode = #tpu.pipeline_mode<synchronous>, transform_indices = @transform_4, window_bounds = array<i64: 32, 256>}, {pipeline_mode = #tpu.pipeline_mode<synchronous>, transform_indices = @transform_5, window_bounds = array<i64: 64, 256>}, {pipeline_mode = #tpu.pipeline_mode<synchronous>, transform_indices = @transform_6, window_bounds = array<i64: 1, 256>}, {pipeline_mode = #tpu.pipeline_mode<synchronous>, transform_indices = @transform_7, window_bounds = array<i64: 64, 256>}, {pipeline_mode = #tpu.pipeline_mode<synchronous>, transform_indices = @transform_8, window_bounds = array<i64: 64, 256>}, {pipeline_mode = #tpu.pipeline_mode<synchronous>, transform_indices = @transform_9, window_bounds = array<i64: 1, 256>}, {pipeline_mode = #tpu.pipeline_mode<synchronous>, transform_indices = @transform_10, window_bounds = array<i64: 32, 64>}, {pipeline_mode = #tpu.pipeline_mode<synchronous>, transform_indices = @transform_11, window_bounds = array<i64: 32, 64>}, {pipeline_mode = #tpu.pipeline_mode<synchronous>, transform_indices = @transform_12, window_bounds = array<i64: 64, 32>}, {pipeline_mode = #tpu.pipeline_mode<synchronous>, transform_indices = @transform_13, window_bounds = array<i64: 32, 32>}, {pipeline_mode = #tpu.pipeline_mode<synchronous>, transform_indices = @transform_14, window_bounds = array<i64: 32, 32>}, {pipeline_mode = #tpu.pipeline_mode<synchronous>, transform_indices = @transform_15, window_bounds = array<i64: 1, 32>}, {pipeline_mode = #tpu.pipeline_mode<synchronous>, transform_indices = @transform_16, window_bounds = array<i64: 32, 128>}, {pipeline_mode = #tpu.pipeline_mode<synchronous>, transform_indices = @transform_17, window_bounds = array<i64: 1, 128>}, {transform_indices = @transform_18, window_bounds = array<i64: 8, 128>}, {transform_indices = @transform_19, window_bounds = array<i64: 8, 256>}]} {
    %c0 = arith.constant 0 : index
    %c0_0 = arith.constant 0 : index
    %c0_1 = arith.constant 0 : index
    %0 = vector.load %arg1[%c0, %c0_0, %c0_1] : memref<3x8x32xf32, #tpu.memory_space<vmem>>, vector<3x8x32xf32>
    %1 = vector.shape_cast %0 : vector<3x8x32xf32> to vector<24x32xf32>
    %2 = arith.truncf %1 : vector<24x32xf32> to vector<24x32xbf16>
    %c0_2 = arith.constant 0 : index
    %c0_3 = arith.constant 0 : index
    %3 = vector.load %arg5[%c0_2, %c0_3] : memref<32x256xbf16, #tpu.memory_space<vmem>>, vector<32x256xbf16>
    %cst = arith.constant dense<0.000000e+00> : vector<24x256xf32>
    %4 = tpu.matmul %2, %3, %cst {dimension_numbers = #tpu.dot_dimension_numbers<[1], [0], [0], [1], [0, 0, 1, 1], [], []>} : vector<24x32xbf16>, vector<32x256xbf16>, vector<24x256xf32> -> vector<24x256xf32>
    %c0_4 = arith.constant 0 : index
    %c0_5 = arith.constant 0 : index
    %5 = vector.load %arg7[%c0_4, %c0_5] : memref<1x256xf32, #tpu.memory_space<vmem>>, vector<1x256xf32>
    %6 = vector.broadcast %5 : vector<1x256xf32> to vector<24x256xf32>
    %7 = arith.addf %4, %6 : vector<24x256xf32>
    %c0_6 = arith.constant 0 : index
    %c0_7 = arith.constant 0 : index
    %8 = vector.load %arg6[%c0_6, %c0_7] : memref<64x256xbf16, #tpu.memory_space<vmem>>, vector<64x256xbf16>
    %c0_8 = arith.constant 0 : index
    %c0_9 = arith.constant 0 : index
    %c0_10 = arith.constant 0 : index
    %9 = vector.load %arg2[%c0_8, %c0_9, %c0_10] : memref<4x8x32xf32, #tpu.memory_space<vmem>>, vector<1x8x32xf32>
    %10 = vector.shape_cast %9 : vector<1x8x32xf32> to vector<8x32xf32>
    %c0_11 = arith.constant 0 : index
    %c0_12 = arith.constant 0 : index
    %c0_13 = arith.constant 0 : index
    %11 = vector.load %arg3[%c0_11, %c0_12, %c0_13] : memref<4x8x32xf32, #tpu.memory_space<vmem>>, vector<1x8x32xf32>
    %12 = vector.shape_cast %11 : vector<1x8x32xf32> to vector<8x32xf32>
    %c1 = arith.constant 1 : index
    %c0_14 = arith.constant 0 : index
    %c0_15 = arith.constant 0 : index
    %13 = vector.load %arg2[%c1, %c0_14, %c0_15] : memref<4x8x32xf32, #tpu.memory_space<vmem>>, vector<1x8x32xf32>
    %14 = vector.shape_cast %13 : vector<1x8x32xf32> to vector<8x32xf32>
    %c1_16 = arith.constant 1 : index
    %c0_17 = arith.constant 0 : index
    %c0_18 = arith.constant 0 : index
    %15 = vector.load %arg3[%c1_16, %c0_17, %c0_18] : memref<4x8x32xf32, #tpu.memory_space<vmem>>, vector<1x8x32xf32>
    %16 = vector.shape_cast %15 : vector<1x8x32xf32> to vector<8x32xf32>
    %17 = tpu.concatenate %10, %14 in 1 : vector<8x32xf32>, vector<8x32xf32> -> vector<8x64xf32>
    %18 = arith.truncf %17 : vector<8x64xf32> to vector<8x64xbf16>
    %cst_19 = arith.constant dense<0.000000e+00> : vector<8x256xf32>
    %19 = tpu.matmul %18, %8, %cst_19 {dimension_numbers = #tpu.dot_dimension_numbers<[1], [0], [0], [1], [0, 0, 1, 1], [], []>} : vector<8x64xbf16>, vector<64x256xbf16>, vector<8x256xf32> -> vector<8x256xf32>
    %20 = vector.extract_strided_slice %7 {offsets = [0, 0], sizes = [8, 128], strides = [1, 1]} : vector<24x256xf32> to vector<8x128xf32>
    %21 = vector.extract_strided_slice %19 {offsets = [0, 0], sizes = [8, 128], strides = [1, 1]} : vector<8x256xf32> to vector<8x128xf32>
    %22 = arith.addf %20, %21 : vector<8x128xf32>
    %23 = vector.extract_strided_slice %7 {offsets = [16, 128], sizes = [8, 128], strides = [1, 1]} : vector<24x256xf32> to vector<8x128xf32>
    %24 = vector.extract_strided_slice %19 {offsets = [0, 128], sizes = [8, 128], strides = [1, 1]} : vector<8x256xf32> to vector<8x128xf32>
    %25 = arith.addf %23, %24 : vector<8x128xf32>
    %26 = vector.extract_strided_slice %22 {offsets = [0, 0], sizes = [8, 32], strides = [1, 1]} : vector<8x128xf32> to vector<8x32xf32>
    %cst_20 = arith.constant 5.000000e-01 : f32
    %27 = vector.broadcast %cst_20 : f32 to vector<8x32xf32>
    %28 = arith.mulf %27, %26 : vector<8x32xf32>
    %29 = math.tanh %28 : vector<8x32xf32>
    %cst_21 = arith.constant 1.000000e+00 : f32
    %30 = vector.broadcast %cst_21 : f32 to vector<8x32xf32>
    %31 = arith.addf %29, %30 : vector<8x32xf32>
    %cst_22 = arith.constant 5.000000e-01 : f32
    %32 = vector.broadcast %cst_22 : f32 to vector<8x32xf32>
    %33 = arith.mulf %32, %31 : vector<8x32xf32>
    %34 = vector.extract_strided_slice %22 {offsets = [0, 32], sizes = [8, 32], strides = [1, 1]} : vector<8x128xf32> to vector<8x32xf32>
    %cst_23 = arith.constant 5.000000e-01 : f32
    %35 = vector.broadcast %cst_23 : f32 to vector<8x32xf32>
    %36 = arith.mulf %35, %34 : vector<8x32xf32>
    %37 = math.tanh %36 : vector<8x32xf32>
    %cst_24 = arith.constant 1.000000e+00 : f32
    %38 = vector.broadcast %cst_24 : f32 to vector<8x32xf32>
    %39 = arith.addf %37, %38 : vector<8x32xf32>
    %cst_25 = arith.constant 5.000000e-01 : f32
    %40 = vector.broadcast %cst_25 : f32 to vector<8x32xf32>
    %41 = arith.mulf %40, %39 : vector<8x32xf32>
    %42 = vector.extract_strided_slice %22 {offsets = [0, 64], sizes = [8, 32], strides = [1, 1]} : vector<8x128xf32> to vector<8x32xf32>
    %43 = math.tanh %42 : vector<8x32xf32>
    %44 = vector.extract_strided_slice %22 {offsets = [0, 96], sizes = [8, 32], strides = [1, 1]} : vector<8x128xf32> to vector<8x32xf32>
    %cst_26 = arith.constant 5.000000e-01 : f32
    %45 = vector.broadcast %cst_26 : f32 to vector<8x32xf32>
    %46 = arith.mulf %45, %44 : vector<8x32xf32>
    %47 = math.tanh %46 : vector<8x32xf32>
    %cst_27 = arith.constant 1.000000e+00 : f32
    %48 = vector.broadcast %cst_27 : f32 to vector<8x32xf32>
    %49 = arith.addf %47, %48 : vector<8x32xf32>
    %cst_28 = arith.constant 5.000000e-01 : f32
    %50 = vector.broadcast %cst_28 : f32 to vector<8x32xf32>
    %51 = arith.mulf %50, %49 : vector<8x32xf32>
    %52 = arith.mulf %41, %12 : vector<8x32xf32>
    %53 = arith.mulf %33, %43 : vector<8x32xf32>
    %54 = arith.addf %52, %53 : vector<8x32xf32>
    %55 = math.tanh %54 : vector<8x32xf32>
    %56 = arith.mulf %51, %55 : vector<8x32xf32>
    %57 = vector.extract_strided_slice %25 {offsets = [0, 0], sizes = [8, 32], strides = [1, 1]} : vector<8x128xf32> to vector<8x32xf32>
    %cst_29 = arith.constant 5.000000e-01 : f32
    %58 = vector.broadcast %cst_29 : f32 to vector<8x32xf32>
    %59 = arith.mulf %58, %57 : vector<8x32xf32>
    %60 = math.tanh %59 : vector<8x32xf32>
    %cst_30 = arith.constant 1.000000e+00 : f32
    %61 = vector.broadcast %cst_30 : f32 to vector<8x32xf32>
    %62 = arith.addf %60, %61 : vector<8x32xf32>
    %cst_31 = arith.constant 5.000000e-01 : f32
    %63 = vector.broadcast %cst_31 : f32 to vector<8x32xf32>
    %64 = arith.mulf %63, %62 : vector<8x32xf32>
    %65 = vector.extract_strided_slice %25 {offsets = [0, 32], sizes = [8, 32], strides = [1, 1]} : vector<8x128xf32> to vector<8x32xf32>
    %cst_32 = arith.constant 5.000000e-01 : f32
    %66 = vector.broadcast %cst_32 : f32 to vector<8x32xf32>
    %67 = arith.mulf %66, %65 : vector<8x32xf32>
    %68 = math.tanh %67 : vector<8x32xf32>
    %cst_33 = arith.constant 1.000000e+00 : f32
    %69 = vector.broadcast %cst_33 : f32 to vector<8x32xf32>
    %70 = arith.addf %68, %69 : vector<8x32xf32>
    %cst_34 = arith.constant 5.000000e-01 : f32
    %71 = vector.broadcast %cst_34 : f32 to vector<8x32xf32>
    %72 = arith.mulf %71, %70 : vector<8x32xf32>
    %73 = vector.extract_strided_slice %25 {offsets = [0, 64], sizes = [8, 32], strides = [1, 1]} : vector<8x128xf32> to vector<8x32xf32>
    %74 = math.tanh %73 : vector<8x32xf32>
    %75 = vector.extract_strided_slice %25 {offsets = [0, 96], sizes = [8, 32], strides = [1, 1]} : vector<8x128xf32> to vector<8x32xf32>
    %cst_35 = arith.constant 5.000000e-01 : f32
    %76 = vector.broadcast %cst_35 : f32 to vector<8x32xf32>
    %77 = arith.mulf %76, %75 : vector<8x32xf32>
    %78 = math.tanh %77 : vector<8x32xf32>
    %cst_36 = arith.constant 1.000000e+00 : f32
    %79 = vector.broadcast %cst_36 : f32 to vector<8x32xf32>
    %80 = arith.addf %78, %79 : vector<8x32xf32>
    %cst_37 = arith.constant 5.000000e-01 : f32
    %81 = vector.broadcast %cst_37 : f32 to vector<8x32xf32>
    %82 = arith.mulf %81, %80 : vector<8x32xf32>
    %83 = arith.mulf %72, %16 : vector<8x32xf32>
    %84 = arith.mulf %64, %74 : vector<8x32xf32>
    %85 = arith.addf %83, %84 : vector<8x32xf32>
    %86 = math.tanh %85 : vector<8x32xf32>
    %87 = arith.mulf %82, %86 : vector<8x32xf32>
    %88 = tpu.concatenate %56, %87 in 1 : vector<8x32xf32>, vector<8x32xf32> -> vector<8x64xf32>
    %89 = arith.truncf %88 : vector<8x64xf32> to vector<8x64xbf16>
    %cst_38 = arith.constant dense<0.000000e+00> : vector<8x256xf32>
    %90 = tpu.matmul %89, %8, %cst_38 {dimension_numbers = #tpu.dot_dimension_numbers<[1], [0], [0], [1], [0, 0, 1, 1], [], []>} : vector<8x64xbf16>, vector<64x256xbf16>, vector<8x256xf32> -> vector<8x256xf32>
    %91 = vector.extract_strided_slice %7 {offsets = [8, 0], sizes = [8, 128], strides = [1, 1]} : vector<24x256xf32> to vector<8x128xf32>
    %92 = vector.extract_strided_slice %90 {offsets = [0, 0], sizes = [8, 128], strides = [1, 1]} : vector<8x256xf32> to vector<8x128xf32>
    %93 = arith.addf %91, %92 : vector<8x128xf32>
    %94 = vector.extract_strided_slice %7 {offsets = [8, 128], sizes = [8, 128], strides = [1, 1]} : vector<24x256xf32> to vector<8x128xf32>
    %95 = vector.extract_strided_slice %90 {offsets = [0, 128], sizes = [8, 128], strides = [1, 1]} : vector<8x256xf32> to vector<8x128xf32>
    %96 = arith.addf %94, %95 : vector<8x128xf32>
    %97 = vector.extract_strided_slice %93 {offsets = [0, 0], sizes = [8, 32], strides = [1, 1]} : vector<8x128xf32> to vector<8x32xf32>
    %cst_39 = arith.constant 5.000000e-01 : f32
    %98 = vector.broadcast %cst_39 : f32 to vector<8x32xf32>
    %99 = arith.mulf %98, %97 : vector<8x32xf32>
    %100 = math.tanh %99 : vector<8x32xf32>
    %cst_40 = arith.constant 1.000000e+00 : f32
    %101 = vector.broadcast %cst_40 : f32 to vector<8x32xf32>
    %102 = arith.addf %100, %101 : vector<8x32xf32>
    %cst_41 = arith.constant 5.000000e-01 : f32
    %103 = vector.broadcast %cst_41 : f32 to vector<8x32xf32>
    %104 = arith.mulf %103, %102 : vector<8x32xf32>
    %105 = vector.extract_strided_slice %93 {offsets = [0, 32], sizes = [8, 32], strides = [1, 1]} : vector<8x128xf32> to vector<8x32xf32>
    %cst_42 = arith.constant 5.000000e-01 : f32
    %106 = vector.broadcast %cst_42 : f32 to vector<8x32xf32>
    %107 = arith.mulf %106, %105 : vector<8x32xf32>
    %108 = math.tanh %107 : vector<8x32xf32>
    %cst_43 = arith.constant 1.000000e+00 : f32
    %109 = vector.broadcast %cst_43 : f32 to vector<8x32xf32>
    %110 = arith.addf %108, %109 : vector<8x32xf32>
    %cst_44 = arith.constant 5.000000e-01 : f32
    %111 = vector.broadcast %cst_44 : f32 to vector<8x32xf32>
    %112 = arith.mulf %111, %110 : vector<8x32xf32>
    %113 = vector.extract_strided_slice %93 {offsets = [0, 64], sizes = [8, 32], strides = [1, 1]} : vector<8x128xf32> to vector<8x32xf32>
    %114 = math.tanh %113 : vector<8x32xf32>
    %115 = vector.extract_strided_slice %93 {offsets = [0, 96], sizes = [8, 32], strides = [1, 1]} : vector<8x128xf32> to vector<8x32xf32>
    %cst_45 = arith.constant 5.000000e-01 : f32
    %116 = vector.broadcast %cst_45 : f32 to vector<8x32xf32>
    %117 = arith.mulf %116, %115 : vector<8x32xf32>
    %118 = math.tanh %117 : vector<8x32xf32>
    %cst_46 = arith.constant 1.000000e+00 : f32
    %119 = vector.broadcast %cst_46 : f32 to vector<8x32xf32>
    %120 = arith.addf %118, %119 : vector<8x32xf32>
    %cst_47 = arith.constant 5.000000e-01 : f32
    %121 = vector.broadcast %cst_47 : f32 to vector<8x32xf32>
    %122 = arith.mulf %121, %120 : vector<8x32xf32>
    %123 = arith.mulf %112, %54 : vector<8x32xf32>
    %124 = arith.mulf %104, %114 : vector<8x32xf32>
    %125 = arith.addf %123, %124 : vector<8x32xf32>
    %126 = math.tanh %125 : vector<8x32xf32>
    %127 = arith.mulf %122, %126 : vector<8x32xf32>
    %128 = vector.extract_strided_slice %96 {offsets = [0, 0], sizes = [8, 32], strides = [1, 1]} : vector<8x128xf32> to vector<8x32xf32>
    %cst_48 = arith.constant 5.000000e-01 : f32
    %129 = vector.broadcast %cst_48 : f32 to vector<8x32xf32>
    %130 = arith.mulf %129, %128 : vector<8x32xf32>
    %131 = math.tanh %130 : vector<8x32xf32>
    %cst_49 = arith.constant 1.000000e+00 : f32
    %132 = vector.broadcast %cst_49 : f32 to vector<8x32xf32>
    %133 = arith.addf %131, %132 : vector<8x32xf32>
    %cst_50 = arith.constant 5.000000e-01 : f32
    %134 = vector.broadcast %cst_50 : f32 to vector<8x32xf32>
    %135 = arith.mulf %134, %133 : vector<8x32xf32>
    %136 = vector.extract_strided_slice %96 {offsets = [0, 32], sizes = [8, 32], strides = [1, 1]} : vector<8x128xf32> to vector<8x32xf32>
    %cst_51 = arith.constant 5.000000e-01 : f32
    %137 = vector.broadcast %cst_51 : f32 to vector<8x32xf32>
    %138 = arith.mulf %137, %136 : vector<8x32xf32>
    %139 = math.tanh %138 : vector<8x32xf32>
    %cst_52 = arith.constant 1.000000e+00 : f32
    %140 = vector.broadcast %cst_52 : f32 to vector<8x32xf32>
    %141 = arith.addf %139, %140 : vector<8x32xf32>
    %cst_53 = arith.constant 5.000000e-01 : f32
    %142 = vector.broadcast %cst_53 : f32 to vector<8x32xf32>
    %143 = arith.mulf %142, %141 : vector<8x32xf32>
    %144 = vector.extract_strided_slice %96 {offsets = [0, 64], sizes = [8, 32], strides = [1, 1]} : vector<8x128xf32> to vector<8x32xf32>
    %145 = math.tanh %144 : vector<8x32xf32>
    %146 = vector.extract_strided_slice %96 {offsets = [0, 96], sizes = [8, 32], strides = [1, 1]} : vector<8x128xf32> to vector<8x32xf32>
    %cst_54 = arith.constant 5.000000e-01 : f32
    %147 = vector.broadcast %cst_54 : f32 to vector<8x32xf32>
    %148 = arith.mulf %147, %146 : vector<8x32xf32>
    %149 = math.tanh %148 : vector<8x32xf32>
    %cst_55 = arith.constant 1.000000e+00 : f32
    %150 = vector.broadcast %cst_55 : f32 to vector<8x32xf32>
    %151 = arith.addf %149, %150 : vector<8x32xf32>
    %cst_56 = arith.constant 5.000000e-01 : f32
    %152 = vector.broadcast %cst_56 : f32 to vector<8x32xf32>
    %153 = arith.mulf %152, %151 : vector<8x32xf32>
    %154 = arith.mulf %143, %85 : vector<8x32xf32>
    %155 = arith.mulf %135, %145 : vector<8x32xf32>
    %156 = arith.addf %154, %155 : vector<8x32xf32>
    %157 = math.tanh %156 : vector<8x32xf32>
    %158 = arith.mulf %153, %157 : vector<8x32xf32>
    %159 = tpu.concatenate %127, %158 in 1 : vector<8x32xf32>, vector<8x32xf32> -> vector<8x64xf32>
    %160 = arith.truncf %159 : vector<8x64xf32> to vector<8x64xbf16>
    %cst_57 = arith.constant dense<0.000000e+00> : vector<8x256xf32>
    %161 = tpu.matmul %160, %8, %cst_57 {dimension_numbers = #tpu.dot_dimension_numbers<[1], [0], [0], [1], [0, 0, 1, 1], [], []>} : vector<8x64xbf16>, vector<64x256xbf16>, vector<8x256xf32> -> vector<8x256xf32>
    %162 = vector.extract_strided_slice %7 {offsets = [16, 0], sizes = [8, 128], strides = [1, 1]} : vector<24x256xf32> to vector<8x128xf32>
    %163 = vector.extract_strided_slice %161 {offsets = [0, 0], sizes = [8, 128], strides = [1, 1]} : vector<8x256xf32> to vector<8x128xf32>
    %164 = arith.addf %162, %163 : vector<8x128xf32>
    %165 = vector.extract_strided_slice %7 {offsets = [0, 128], sizes = [8, 128], strides = [1, 1]} : vector<24x256xf32> to vector<8x128xf32>
    %166 = vector.extract_strided_slice %161 {offsets = [0, 128], sizes = [8, 128], strides = [1, 1]} : vector<8x256xf32> to vector<8x128xf32>
    %167 = arith.addf %165, %166 : vector<8x128xf32>
    %168 = vector.extract_strided_slice %164 {offsets = [0, 0], sizes = [8, 32], strides = [1, 1]} : vector<8x128xf32> to vector<8x32xf32>
    %cst_58 = arith.constant 5.000000e-01 : f32
    %169 = vector.broadcast %cst_58 : f32 to vector<8x32xf32>
    %170 = arith.mulf %169, %168 : vector<8x32xf32>
    %171 = math.tanh %170 : vector<8x32xf32>
    %cst_59 = arith.constant 1.000000e+00 : f32
    %172 = vector.broadcast %cst_59 : f32 to vector<8x32xf32>
    %173 = arith.addf %171, %172 : vector<8x32xf32>
    %cst_60 = arith.constant 5.000000e-01 : f32
    %174 = vector.broadcast %cst_60 : f32 to vector<8x32xf32>
    %175 = arith.mulf %174, %173 : vector<8x32xf32>
    %176 = vector.extract_strided_slice %164 {offsets = [0, 32], sizes = [8, 32], strides = [1, 1]} : vector<8x128xf32> to vector<8x32xf32>
    %cst_61 = arith.constant 5.000000e-01 : f32
    %177 = vector.broadcast %cst_61 : f32 to vector<8x32xf32>
    %178 = arith.mulf %177, %176 : vector<8x32xf32>
    %179 = math.tanh %178 : vector<8x32xf32>
    %cst_62 = arith.constant 1.000000e+00 : f32
    %180 = vector.broadcast %cst_62 : f32 to vector<8x32xf32>
    %181 = arith.addf %179, %180 : vector<8x32xf32>
    %cst_63 = arith.constant 5.000000e-01 : f32
    %182 = vector.broadcast %cst_63 : f32 to vector<8x32xf32>
    %183 = arith.mulf %182, %181 : vector<8x32xf32>
    %184 = vector.extract_strided_slice %164 {offsets = [0, 64], sizes = [8, 32], strides = [1, 1]} : vector<8x128xf32> to vector<8x32xf32>
    %185 = math.tanh %184 : vector<8x32xf32>
    %186 = vector.extract_strided_slice %164 {offsets = [0, 96], sizes = [8, 32], strides = [1, 1]} : vector<8x128xf32> to vector<8x32xf32>
    %cst_64 = arith.constant 5.000000e-01 : f32
    %187 = vector.broadcast %cst_64 : f32 to vector<8x32xf32>
    %188 = arith.mulf %187, %186 : vector<8x32xf32>
    %189 = math.tanh %188 : vector<8x32xf32>
    %cst_65 = arith.constant 1.000000e+00 : f32
    %190 = vector.broadcast %cst_65 : f32 to vector<8x32xf32>
    %191 = arith.addf %189, %190 : vector<8x32xf32>
    %cst_66 = arith.constant 5.000000e-01 : f32
    %192 = vector.broadcast %cst_66 : f32 to vector<8x32xf32>
    %193 = arith.mulf %192, %191 : vector<8x32xf32>
    %194 = arith.mulf %183, %125 : vector<8x32xf32>
    %195 = arith.mulf %175, %185 : vector<8x32xf32>
    %196 = arith.addf %194, %195 : vector<8x32xf32>
    %197 = math.tanh %196 : vector<8x32xf32>
    %198 = arith.mulf %193, %197 : vector<8x32xf32>
    %199 = vector.extract_strided_slice %167 {offsets = [0, 0], sizes = [8, 32], strides = [1, 1]} : vector<8x128xf32> to vector<8x32xf32>
    %cst_67 = arith.constant 5.000000e-01 : f32
    %200 = vector.broadcast %cst_67 : f32 to vector<8x32xf32>
    %201 = arith.mulf %200, %199 : vector<8x32xf32>
    %202 = math.tanh %201 : vector<8x32xf32>
    %cst_68 = arith.constant 1.000000e+00 : f32
    %203 = vector.broadcast %cst_68 : f32 to vector<8x32xf32>
    %204 = arith.addf %202, %203 : vector<8x32xf32>
    %cst_69 = arith.constant 5.000000e-01 : f32
    %205 = vector.broadcast %cst_69 : f32 to vector<8x32xf32>
    %206 = arith.mulf %205, %204 : vector<8x32xf32>
    %207 = vector.extract_strided_slice %167 {offsets = [0, 32], sizes = [8, 32], strides = [1, 1]} : vector<8x128xf32> to vector<8x32xf32>
    %cst_70 = arith.constant 5.000000e-01 : f32
    %208 = vector.broadcast %cst_70 : f32 to vector<8x32xf32>
    %209 = arith.mulf %208, %207 : vector<8x32xf32>
    %210 = math.tanh %209 : vector<8x32xf32>
    %cst_71 = arith.constant 1.000000e+00 : f32
    %211 = vector.broadcast %cst_71 : f32 to vector<8x32xf32>
    %212 = arith.addf %210, %211 : vector<8x32xf32>
    %cst_72 = arith.constant 5.000000e-01 : f32
    %213 = vector.broadcast %cst_72 : f32 to vector<8x32xf32>
    %214 = arith.mulf %213, %212 : vector<8x32xf32>
    %215 = vector.extract_strided_slice %167 {offsets = [0, 64], sizes = [8, 32], strides = [1, 1]} : vector<8x128xf32> to vector<8x32xf32>
    %216 = math.tanh %215 : vector<8x32xf32>
    %217 = vector.extract_strided_slice %167 {offsets = [0, 96], sizes = [8, 32], strides = [1, 1]} : vector<8x128xf32> to vector<8x32xf32>
    %cst_73 = arith.constant 5.000000e-01 : f32
    %218 = vector.broadcast %cst_73 : f32 to vector<8x32xf32>
    %219 = arith.mulf %218, %217 : vector<8x32xf32>
    %220 = math.tanh %219 : vector<8x32xf32>
    %cst_74 = arith.constant 1.000000e+00 : f32
    %221 = vector.broadcast %cst_74 : f32 to vector<8x32xf32>
    %222 = arith.addf %220, %221 : vector<8x32xf32>
    %cst_75 = arith.constant 5.000000e-01 : f32
    %223 = vector.broadcast %cst_75 : f32 to vector<8x32xf32>
    %224 = arith.mulf %223, %222 : vector<8x32xf32>
    %225 = arith.mulf %214, %156 : vector<8x32xf32>
    %226 = arith.mulf %206, %216 : vector<8x32xf32>
    %227 = arith.addf %225, %226 : vector<8x32xf32>
    %228 = math.tanh %227 : vector<8x32xf32>
    %229 = arith.mulf %224, %228 : vector<8x32xf32>
    %230 = tpu.concatenate %56, %229 in 1 : vector<8x32xf32>, vector<8x32xf32> -> vector<8x64xf32>
    %231 = tpu.concatenate %127, %158 in 1 : vector<8x32xf32>, vector<8x32xf32> -> vector<8x64xf32>
    %232 = tpu.concatenate %198, %87 in 1 : vector<8x32xf32>, vector<8x32xf32> -> vector<8x64xf32>
    %233 = tpu.concatenate %230, %231, %232 in 0 : vector<8x64xf32>, vector<8x64xf32>, vector<8x64xf32> -> vector<24x64xf32>
    %234 = arith.truncf %233 : vector<24x64xf32> to vector<24x64xbf16>
    %c0_76 = arith.constant 0 : index
    %c0_77 = arith.constant 0 : index
    %235 = vector.load %arg8[%c0_76, %c0_77] : memref<64x256xbf16, #tpu.memory_space<vmem>>, vector<64x256xbf16>
    %cst_78 = arith.constant dense<0.000000e+00> : vector<24x256xf32>
    %236 = tpu.matmul %234, %235, %cst_78 {dimension_numbers = #tpu.dot_dimension_numbers<[1], [0], [0], [1], [0, 0, 1, 1], [], []>} : vector<24x64xbf16>, vector<64x256xbf16>, vector<24x256xf32> -> vector<24x256xf32>
    %c0_79 = arith.constant 0 : index
    %c0_80 = arith.constant 0 : index
    %237 = vector.load %arg10[%c0_79, %c0_80] : memref<1x256xf32, #tpu.memory_space<vmem>>, vector<1x256xf32>
    %238 = vector.broadcast %237 : vector<1x256xf32> to vector<24x256xf32>
    %239 = arith.addf %236, %238 : vector<24x256xf32>
    %c0_81 = arith.constant 0 : index
    %c0_82 = arith.constant 0 : index
    %240 = vector.load %arg9[%c0_81, %c0_82] : memref<64x256xbf16, #tpu.memory_space<vmem>>, vector<64x256xbf16>
    %c2 = arith.constant 2 : index
    %c0_83 = arith.constant 0 : index
    %c0_84 = arith.constant 0 : index
    %241 = vector.load %arg2[%c2, %c0_83, %c0_84] : memref<4x8x32xf32, #tpu.memory_space<vmem>>, vector<1x8x32xf32>
    %242 = vector.shape_cast %241 : vector<1x8x32xf32> to vector<8x32xf32>
    %c2_85 = arith.constant 2 : index
    %c0_86 = arith.constant 0 : index
    %c0_87 = arith.constant 0 : index
    %243 = vector.load %arg3[%c2_85, %c0_86, %c0_87] : memref<4x8x32xf32, #tpu.memory_space<vmem>>, vector<1x8x32xf32>
    %244 = vector.shape_cast %243 : vector<1x8x32xf32> to vector<8x32xf32>
    %c3 = arith.constant 3 : index
    %c0_88 = arith.constant 0 : index
    %c0_89 = arith.constant 0 : index
    %245 = vector.load %arg2[%c3, %c0_88, %c0_89] : memref<4x8x32xf32, #tpu.memory_space<vmem>>, vector<1x8x32xf32>
    %246 = vector.shape_cast %245 : vector<1x8x32xf32> to vector<8x32xf32>
    %c3_90 = arith.constant 3 : index
    %c0_91 = arith.constant 0 : index
    %c0_92 = arith.constant 0 : index
    %247 = vector.load %arg3[%c3_90, %c0_91, %c0_92] : memref<4x8x32xf32, #tpu.memory_space<vmem>>, vector<1x8x32xf32>
    %248 = vector.shape_cast %247 : vector<1x8x32xf32> to vector<8x32xf32>
    %249 = tpu.concatenate %242, %246 in 1 : vector<8x32xf32>, vector<8x32xf32> -> vector<8x64xf32>
    %250 = arith.truncf %249 : vector<8x64xf32> to vector<8x64xbf16>
    %cst_93 = arith.constant dense<0.000000e+00> : vector<8x256xf32>
    %251 = tpu.matmul %250, %240, %cst_93 {dimension_numbers = #tpu.dot_dimension_numbers<[1], [0], [0], [1], [0, 0, 1, 1], [], []>} : vector<8x64xbf16>, vector<64x256xbf16>, vector<8x256xf32> -> vector<8x256xf32>
    %252 = vector.extract_strided_slice %239 {offsets = [0, 0], sizes = [8, 128], strides = [1, 1]} : vector<24x256xf32> to vector<8x128xf32>
    %253 = vector.extract_strided_slice %251 {offsets = [0, 0], sizes = [8, 128], strides = [1, 1]} : vector<8x256xf32> to vector<8x128xf32>
    %254 = arith.addf %252, %253 : vector<8x128xf32>
    %255 = vector.extract_strided_slice %239 {offsets = [16, 128], sizes = [8, 128], strides = [1, 1]} : vector<24x256xf32> to vector<8x128xf32>
    %256 = vector.extract_strided_slice %251 {offsets = [0, 128], sizes = [8, 128], strides = [1, 1]} : vector<8x256xf32> to vector<8x128xf32>
    %257 = arith.addf %255, %256 : vector<8x128xf32>
    %258 = vector.extract_strided_slice %254 {offsets = [0, 0], sizes = [8, 32], strides = [1, 1]} : vector<8x128xf32> to vector<8x32xf32>
    %cst_94 = arith.constant 5.000000e-01 : f32
    %259 = vector.broadcast %cst_94 : f32 to vector<8x32xf32>
    %260 = arith.mulf %259, %258 : vector<8x32xf32>
    %261 = math.tanh %260 : vector<8x32xf32>
    %cst_95 = arith.constant 1.000000e+00 : f32
    %262 = vector.broadcast %cst_95 : f32 to vector<8x32xf32>
    %263 = arith.addf %261, %262 : vector<8x32xf32>
    %cst_96 = arith.constant 5.000000e-01 : f32
    %264 = vector.broadcast %cst_96 : f32 to vector<8x32xf32>
    %265 = arith.mulf %264, %263 : vector<8x32xf32>
    %266 = vector.extract_strided_slice %254 {offsets = [0, 32], sizes = [8, 32], strides = [1, 1]} : vector<8x128xf32> to vector<8x32xf32>
    %cst_97 = arith.constant 5.000000e-01 : f32
    %267 = vector.broadcast %cst_97 : f32 to vector<8x32xf32>
    %268 = arith.mulf %267, %266 : vector<8x32xf32>
    %269 = math.tanh %268 : vector<8x32xf32>
    %cst_98 = arith.constant 1.000000e+00 : f32
    %270 = vector.broadcast %cst_98 : f32 to vector<8x32xf32>
    %271 = arith.addf %269, %270 : vector<8x32xf32>
    %cst_99 = arith.constant 5.000000e-01 : f32
    %272 = vector.broadcast %cst_99 : f32 to vector<8x32xf32>
    %273 = arith.mulf %272, %271 : vector<8x32xf32>
    %274 = vector.extract_strided_slice %254 {offsets = [0, 64], sizes = [8, 32], strides = [1, 1]} : vector<8x128xf32> to vector<8x32xf32>
    %275 = math.tanh %274 : vector<8x32xf32>
    %276 = vector.extract_strided_slice %254 {offsets = [0, 96], sizes = [8, 32], strides = [1, 1]} : vector<8x128xf32> to vector<8x32xf32>
    %cst_100 = arith.constant 5.000000e-01 : f32
    %277 = vector.broadcast %cst_100 : f32 to vector<8x32xf32>
    %278 = arith.mulf %277, %276 : vector<8x32xf32>
    %279 = math.tanh %278 : vector<8x32xf32>
    %cst_101 = arith.constant 1.000000e+00 : f32
    %280 = vector.broadcast %cst_101 : f32 to vector<8x32xf32>
    %281 = arith.addf %279, %280 : vector<8x32xf32>
    %cst_102 = arith.constant 5.000000e-01 : f32
    %282 = vector.broadcast %cst_102 : f32 to vector<8x32xf32>
    %283 = arith.mulf %282, %281 : vector<8x32xf32>
    %284 = arith.mulf %273, %244 : vector<8x32xf32>
    %285 = arith.mulf %265, %275 : vector<8x32xf32>
    %286 = arith.addf %284, %285 : vector<8x32xf32>
    %287 = math.tanh %286 : vector<8x32xf32>
    %288 = arith.mulf %283, %287 : vector<8x32xf32>
    %289 = vector.extract_strided_slice %257 {offsets = [0, 0], sizes = [8, 32], strides = [1, 1]} : vector<8x128xf32> to vector<8x32xf32>
    %cst_103 = arith.constant 5.000000e-01 : f32
    %290 = vector.broadcast %cst_103 : f32 to vector<8x32xf32>
    %291 = arith.mulf %290, %289 : vector<8x32xf32>
    %292 = math.tanh %291 : vector<8x32xf32>
    %cst_104 = arith.constant 1.000000e+00 : f32
    %293 = vector.broadcast %cst_104 : f32 to vector<8x32xf32>
    %294 = arith.addf %292, %293 : vector<8x32xf32>
    %cst_105 = arith.constant 5.000000e-01 : f32
    %295 = vector.broadcast %cst_105 : f32 to vector<8x32xf32>
    %296 = arith.mulf %295, %294 : vector<8x32xf32>
    %297 = vector.extract_strided_slice %257 {offsets = [0, 32], sizes = [8, 32], strides = [1, 1]} : vector<8x128xf32> to vector<8x32xf32>
    %cst_106 = arith.constant 5.000000e-01 : f32
    %298 = vector.broadcast %cst_106 : f32 to vector<8x32xf32>
    %299 = arith.mulf %298, %297 : vector<8x32xf32>
    %300 = math.tanh %299 : vector<8x32xf32>
    %cst_107 = arith.constant 1.000000e+00 : f32
    %301 = vector.broadcast %cst_107 : f32 to vector<8x32xf32>
    %302 = arith.addf %300, %301 : vector<8x32xf32>
    %cst_108 = arith.constant 5.000000e-01 : f32
    %303 = vector.broadcast %cst_108 : f32 to vector<8x32xf32>
    %304 = arith.mulf %303, %302 : vector<8x32xf32>
    %305 = vector.extract_strided_slice %257 {offsets = [0, 64], sizes = [8, 32], strides = [1, 1]} : vector<8x128xf32> to vector<8x32xf32>
    %306 = math.tanh %305 : vector<8x32xf32>
    %307 = vector.extract_strided_slice %257 {offsets = [0, 96], sizes = [8, 32], strides = [1, 1]} : vector<8x128xf32> to vector<8x32xf32>
    %cst_109 = arith.constant 5.000000e-01 : f32
    %308 = vector.broadcast %cst_109 : f32 to vector<8x32xf32>
    %309 = arith.mulf %308, %307 : vector<8x32xf32>
    %310 = math.tanh %309 : vector<8x32xf32>
    %cst_110 = arith.constant 1.000000e+00 : f32
    %311 = vector.broadcast %cst_110 : f32 to vector<8x32xf32>
    %312 = arith.addf %310, %311 : vector<8x32xf32>
    %cst_111 = arith.constant 5.000000e-01 : f32
    %313 = vector.broadcast %cst_111 : f32 to vector<8x32xf32>
    %314 = arith.mulf %313, %312 : vector<8x32xf32>
    %315 = arith.mulf %304, %248 : vector<8x32xf32>
    %316 = arith.mulf %296, %306 : vector<8x32xf32>
    %317 = arith.addf %315, %316 : vector<8x32xf32>
    %318 = math.tanh %317 : vector<8x32xf32>
    %319 = arith.mulf %314, %318 : vector<8x32xf32>
    %320 = tpu.concatenate %288, %319 in 1 : vector<8x32xf32>, vector<8x32xf32> -> vector<8x64xf32>
    %321 = arith.truncf %320 : vector<8x64xf32> to vector<8x64xbf16>
    %cst_112 = arith.constant dense<0.000000e+00> : vector<8x256xf32>
    %322 = tpu.matmul %321, %240, %cst_112 {dimension_numbers = #tpu.dot_dimension_numbers<[1], [0], [0], [1], [0, 0, 1, 1], [], []>} : vector<8x64xbf16>, vector<64x256xbf16>, vector<8x256xf32> -> vector<8x256xf32>
    %323 = vector.extract_strided_slice %239 {offsets = [8, 0], sizes = [8, 128], strides = [1, 1]} : vector<24x256xf32> to vector<8x128xf32>
    %324 = vector.extract_strided_slice %322 {offsets = [0, 0], sizes = [8, 128], strides = [1, 1]} : vector<8x256xf32> to vector<8x128xf32>
    %325 = arith.addf %323, %324 : vector<8x128xf32>
    %326 = vector.extract_strided_slice %239 {offsets = [8, 128], sizes = [8, 128], strides = [1, 1]} : vector<24x256xf32> to vector<8x128xf32>
    %327 = vector.extract_strided_slice %322 {offsets = [0, 128], sizes = [8, 128], strides = [1, 1]} : vector<8x256xf32> to vector<8x128xf32>
    %328 = arith.addf %326, %327 : vector<8x128xf32>
    %329 = vector.extract_strided_slice %325 {offsets = [0, 0], sizes = [8, 32], strides = [1, 1]} : vector<8x128xf32> to vector<8x32xf32>
    %cst_113 = arith.constant 5.000000e-01 : f32
    %330 = vector.broadcast %cst_113 : f32 to vector<8x32xf32>
    %331 = arith.mulf %330, %329 : vector<8x32xf32>
    %332 = math.tanh %331 : vector<8x32xf32>
    %cst_114 = arith.constant 1.000000e+00 : f32
    %333 = vector.broadcast %cst_114 : f32 to vector<8x32xf32>
    %334 = arith.addf %332, %333 : vector<8x32xf32>
    %cst_115 = arith.constant 5.000000e-01 : f32
    %335 = vector.broadcast %cst_115 : f32 to vector<8x32xf32>
    %336 = arith.mulf %335, %334 : vector<8x32xf32>
    %337 = vector.extract_strided_slice %325 {offsets = [0, 32], sizes = [8, 32], strides = [1, 1]} : vector<8x128xf32> to vector<8x32xf32>
    %cst_116 = arith.constant 5.000000e-01 : f32
    %338 = vector.broadcast %cst_116 : f32 to vector<8x32xf32>
    %339 = arith.mulf %338, %337 : vector<8x32xf32>
    %340 = math.tanh %339 : vector<8x32xf32>
    %cst_117 = arith.constant 1.000000e+00 : f32
    %341 = vector.broadcast %cst_117 : f32 to vector<8x32xf32>
    %342 = arith.addf %340, %341 : vector<8x32xf32>
    %cst_118 = arith.constant 5.000000e-01 : f32
    %343 = vector.broadcast %cst_118 : f32 to vector<8x32xf32>
    %344 = arith.mulf %343, %342 : vector<8x32xf32>
    %345 = vector.extract_strided_slice %325 {offsets = [0, 64], sizes = [8, 32], strides = [1, 1]} : vector<8x128xf32> to vector<8x32xf32>
    %346 = math.tanh %345 : vector<8x32xf32>
    %347 = vector.extract_strided_slice %325 {offsets = [0, 96], sizes = [8, 32], strides = [1, 1]} : vector<8x128xf32> to vector<8x32xf32>
    %cst_119 = arith.constant 5.000000e-01 : f32
    %348 = vector.broadcast %cst_119 : f32 to vector<8x32xf32>
    %349 = arith.mulf %348, %347 : vector<8x32xf32>
    %350 = math.tanh %349 : vector<8x32xf32>
    %cst_120 = arith.constant 1.000000e+00 : f32
    %351 = vector.broadcast %cst_120 : f32 to vector<8x32xf32>
    %352 = arith.addf %350, %351 : vector<8x32xf32>
    %cst_121 = arith.constant 5.000000e-01 : f32
    %353 = vector.broadcast %cst_121 : f32 to vector<8x32xf32>
    %354 = arith.mulf %353, %352 : vector<8x32xf32>
    %355 = arith.mulf %344, %286 : vector<8x32xf32>
    %356 = arith.mulf %336, %346 : vector<8x32xf32>
    %357 = arith.addf %355, %356 : vector<8x32xf32>
    %358 = math.tanh %357 : vector<8x32xf32>
    %359 = arith.mulf %354, %358 : vector<8x32xf32>
    %360 = vector.extract_strided_slice %328 {offsets = [0, 0], sizes = [8, 32], strides = [1, 1]} : vector<8x128xf32> to vector<8x32xf32>
    %cst_122 = arith.constant 5.000000e-01 : f32
    %361 = vector.broadcast %cst_122 : f32 to vector<8x32xf32>
    %362 = arith.mulf %361, %360 : vector<8x32xf32>
    %363 = math.tanh %362 : vector<8x32xf32>
    %cst_123 = arith.constant 1.000000e+00 : f32
    %364 = vector.broadcast %cst_123 : f32 to vector<8x32xf32>
    %365 = arith.addf %363, %364 : vector<8x32xf32>
    %cst_124 = arith.constant 5.000000e-01 : f32
    %366 = vector.broadcast %cst_124 : f32 to vector<8x32xf32>
    %367 = arith.mulf %366, %365 : vector<8x32xf32>
    %368 = vector.extract_strided_slice %328 {offsets = [0, 32], sizes = [8, 32], strides = [1, 1]} : vector<8x128xf32> to vector<8x32xf32>
    %cst_125 = arith.constant 5.000000e-01 : f32
    %369 = vector.broadcast %cst_125 : f32 to vector<8x32xf32>
    %370 = arith.mulf %369, %368 : vector<8x32xf32>
    %371 = math.tanh %370 : vector<8x32xf32>
    %cst_126 = arith.constant 1.000000e+00 : f32
    %372 = vector.broadcast %cst_126 : f32 to vector<8x32xf32>
    %373 = arith.addf %371, %372 : vector<8x32xf32>
    %cst_127 = arith.constant 5.000000e-01 : f32
    %374 = vector.broadcast %cst_127 : f32 to vector<8x32xf32>
    %375 = arith.mulf %374, %373 : vector<8x32xf32>
    %376 = vector.extract_strided_slice %328 {offsets = [0, 64], sizes = [8, 32], strides = [1, 1]} : vector<8x128xf32> to vector<8x32xf32>
    %377 = math.tanh %376 : vector<8x32xf32>
    %378 = vector.extract_strided_slice %328 {offsets = [0, 96], sizes = [8, 32], strides = [1, 1]} : vector<8x128xf32> to vector<8x32xf32>
    %cst_128 = arith.constant 5.000000e-01 : f32
    %379 = vector.broadcast %cst_128 : f32 to vector<8x32xf32>
    %380 = arith.mulf %379, %378 : vector<8x32xf32>
    %381 = math.tanh %380 : vector<8x32xf32>
    %cst_129 = arith.constant 1.000000e+00 : f32
    %382 = vector.broadcast %cst_129 : f32 to vector<8x32xf32>
    %383 = arith.addf %381, %382 : vector<8x32xf32>
    %cst_130 = arith.constant 5.000000e-01 : f32
    %384 = vector.broadcast %cst_130 : f32 to vector<8x32xf32>
    %385 = arith.mulf %384, %383 : vector<8x32xf32>
    %386 = arith.mulf %375, %317 : vector<8x32xf32>
    %387 = arith.mulf %367, %377 : vector<8x32xf32>
    %388 = arith.addf %386, %387 : vector<8x32xf32>
    %389 = math.tanh %388 : vector<8x32xf32>
    %390 = arith.mulf %385, %389 : vector<8x32xf32>
    %391 = tpu.concatenate %359, %390 in 1 : vector<8x32xf32>, vector<8x32xf32> -> vector<8x64xf32>
    %392 = arith.truncf %391 : vector<8x64xf32> to vector<8x64xbf16>
    %cst_131 = arith.constant dense<0.000000e+00> : vector<8x256xf32>
    %393 = tpu.matmul %392, %240, %cst_131 {dimension_numbers = #tpu.dot_dimension_numbers<[1], [0], [0], [1], [0, 0, 1, 1], [], []>} : vector<8x64xbf16>, vector<64x256xbf16>, vector<8x256xf32> -> vector<8x256xf32>
    %394 = vector.extract_strided_slice %239 {offsets = [16, 0], sizes = [8, 128], strides = [1, 1]} : vector<24x256xf32> to vector<8x128xf32>
    %395 = vector.extract_strided_slice %393 {offsets = [0, 0], sizes = [8, 128], strides = [1, 1]} : vector<8x256xf32> to vector<8x128xf32>
    %396 = arith.addf %394, %395 : vector<8x128xf32>
    %397 = vector.extract_strided_slice %239 {offsets = [0, 128], sizes = [8, 128], strides = [1, 1]} : vector<24x256xf32> to vector<8x128xf32>
    %398 = vector.extract_strided_slice %393 {offsets = [0, 128], sizes = [8, 128], strides = [1, 1]} : vector<8x256xf32> to vector<8x128xf32>
    %399 = arith.addf %397, %398 : vector<8x128xf32>
    %400 = vector.extract_strided_slice %396 {offsets = [0, 0], sizes = [8, 32], strides = [1, 1]} : vector<8x128xf32> to vector<8x32xf32>
    %cst_132 = arith.constant 5.000000e-01 : f32
    %401 = vector.broadcast %cst_132 : f32 to vector<8x32xf32>
    %402 = arith.mulf %401, %400 : vector<8x32xf32>
    %403 = math.tanh %402 : vector<8x32xf32>
    %cst_133 = arith.constant 1.000000e+00 : f32
    %404 = vector.broadcast %cst_133 : f32 to vector<8x32xf32>
    %405 = arith.addf %403, %404 : vector<8x32xf32>
    %cst_134 = arith.constant 5.000000e-01 : f32
    %406 = vector.broadcast %cst_134 : f32 to vector<8x32xf32>
    %407 = arith.mulf %406, %405 : vector<8x32xf32>
    %408 = vector.extract_strided_slice %396 {offsets = [0, 32], sizes = [8, 32], strides = [1, 1]} : vector<8x128xf32> to vector<8x32xf32>
    %cst_135 = arith.constant 5.000000e-01 : f32
    %409 = vector.broadcast %cst_135 : f32 to vector<8x32xf32>
    %410 = arith.mulf %409, %408 : vector<8x32xf32>
    %411 = math.tanh %410 : vector<8x32xf32>
    %cst_136 = arith.constant 1.000000e+00 : f32
    %412 = vector.broadcast %cst_136 : f32 to vector<8x32xf32>
    %413 = arith.addf %411, %412 : vector<8x32xf32>
    %cst_137 = arith.constant 5.000000e-01 : f32
    %414 = vector.broadcast %cst_137 : f32 to vector<8x32xf32>
    %415 = arith.mulf %414, %413 : vector<8x32xf32>
    %416 = vector.extract_strided_slice %396 {offsets = [0, 64], sizes = [8, 32], strides = [1, 1]} : vector<8x128xf32> to vector<8x32xf32>
    %417 = math.tanh %416 : vector<8x32xf32>
    %418 = vector.extract_strided_slice %396 {offsets = [0, 96], sizes = [8, 32], strides = [1, 1]} : vector<8x128xf32> to vector<8x32xf32>
    %cst_138 = arith.constant 5.000000e-01 : f32
    %419 = vector.broadcast %cst_138 : f32 to vector<8x32xf32>
    %420 = arith.mulf %419, %418 : vector<8x32xf32>
    %421 = math.tanh %420 : vector<8x32xf32>
    %cst_139 = arith.constant 1.000000e+00 : f32
    %422 = vector.broadcast %cst_139 : f32 to vector<8x32xf32>
    %423 = arith.addf %421, %422 : vector<8x32xf32>
    %cst_140 = arith.constant 5.000000e-01 : f32
    %424 = vector.broadcast %cst_140 : f32 to vector<8x32xf32>
    %425 = arith.mulf %424, %423 : vector<8x32xf32>
    %426 = arith.mulf %415, %357 : vector<8x32xf32>
    %427 = arith.mulf %407, %417 : vector<8x32xf32>
    %428 = arith.addf %426, %427 : vector<8x32xf32>
    %429 = math.tanh %428 : vector<8x32xf32>
    %430 = arith.mulf %425, %429 : vector<8x32xf32>
    %431 = vector.extract_strided_slice %399 {offsets = [0, 0], sizes = [8, 32], strides = [1, 1]} : vector<8x128xf32> to vector<8x32xf32>
    %cst_141 = arith.constant 5.000000e-01 : f32
    %432 = vector.broadcast %cst_141 : f32 to vector<8x32xf32>
    %433 = arith.mulf %432, %431 : vector<8x32xf32>
    %434 = math.tanh %433 : vector<8x32xf32>
    %cst_142 = arith.constant 1.000000e+00 : f32
    %435 = vector.broadcast %cst_142 : f32 to vector<8x32xf32>
    %436 = arith.addf %434, %435 : vector<8x32xf32>
    %cst_143 = arith.constant 5.000000e-01 : f32
    %437 = vector.broadcast %cst_143 : f32 to vector<8x32xf32>
    %438 = arith.mulf %437, %436 : vector<8x32xf32>
    %439 = vector.extract_strided_slice %399 {offsets = [0, 32], sizes = [8, 32], strides = [1, 1]} : vector<8x128xf32> to vector<8x32xf32>
    %cst_144 = arith.constant 5.000000e-01 : f32
    %440 = vector.broadcast %cst_144 : f32 to vector<8x32xf32>
    %441 = arith.mulf %440, %439 : vector<8x32xf32>
    %442 = math.tanh %441 : vector<8x32xf32>
    %cst_145 = arith.constant 1.000000e+00 : f32
    %443 = vector.broadcast %cst_145 : f32 to vector<8x32xf32>
    %444 = arith.addf %442, %443 : vector<8x32xf32>
    %cst_146 = arith.constant 5.000000e-01 : f32
    %445 = vector.broadcast %cst_146 : f32 to vector<8x32xf32>
    %446 = arith.mulf %445, %444 : vector<8x32xf32>
    %447 = vector.extract_strided_slice %399 {offsets = [0, 64], sizes = [8, 32], strides = [1, 1]} : vector<8x128xf32> to vector<8x32xf32>
    %448 = math.tanh %447 : vector<8x32xf32>
    %449 = vector.extract_strided_slice %399 {offsets = [0, 96], sizes = [8, 32], strides = [1, 1]} : vector<8x128xf32> to vector<8x32xf32>
    %cst_147 = arith.constant 5.000000e-01 : f32
    %450 = vector.broadcast %cst_147 : f32 to vector<8x32xf32>
    %451 = arith.mulf %450, %449 : vector<8x32xf32>
    %452 = math.tanh %451 : vector<8x32xf32>
    %cst_148 = arith.constant 1.000000e+00 : f32
    %453 = vector.broadcast %cst_148 : f32 to vector<8x32xf32>
    %454 = arith.addf %452, %453 : vector<8x32xf32>
    %cst_149 = arith.constant 5.000000e-01 : f32
    %455 = vector.broadcast %cst_149 : f32 to vector<8x32xf32>
    %456 = arith.mulf %455, %454 : vector<8x32xf32>
    %457 = arith.mulf %446, %388 : vector<8x32xf32>
    %458 = arith.mulf %438, %448 : vector<8x32xf32>
    %459 = arith.addf %457, %458 : vector<8x32xf32>
    %460 = math.tanh %459 : vector<8x32xf32>
    %461 = arith.mulf %456, %460 : vector<8x32xf32>
    %c0_150 = arith.constant 0 : index
    %c0_151 = arith.constant 0 : index
    %c0_152 = arith.constant 0 : index
    %462 = vector.load %arg4[%c0_150, %c0_151, %c0_152] : memref<8x8x64xf32, #tpu.memory_space<vmem>>, vector<8x8x64xf32>
    %463 = arith.truncf %430 : vector<8x32xf32> to vector<8x32xbf16>
    %c0_153 = arith.constant 0 : index
    %c0_154 = arith.constant 0 : index
    %464 = vector.load %arg11[%c0_153, %c0_154] : memref<32x64xbf16, #tpu.memory_space<vmem>>, vector<32x64xbf16>
    %cst_155 = arith.constant dense<0.000000e+00> : vector<8x64xf32>
    %465 = tpu.matmul %463, %464, %cst_155 {dimension_numbers = #tpu.dot_dimension_numbers<[1], [0], [0], [1], [0, 0, 1, 1], [], []>} : vector<8x32xbf16>, vector<32x64xbf16>, vector<8x64xf32> -> vector<8x64xf32>
    %466 = arith.truncf %461 : vector<8x32xf32> to vector<8x32xbf16>
    %c0_156 = arith.constant 0 : index
    %c0_157 = arith.constant 0 : index
    %467 = vector.load %arg12[%c0_156, %c0_157] : memref<32x64xbf16, #tpu.memory_space<vmem>>, vector<32x64xbf16>
    %cst_158 = arith.constant dense<0.000000e+00> : vector<8x64xf32>
    %468 = tpu.matmul %466, %467, %cst_158 {dimension_numbers = #tpu.dot_dimension_numbers<[1], [0], [0], [1], [0, 0, 1, 1], [], []>} : vector<8x32xbf16>, vector<32x64xbf16>, vector<8x64xf32> -> vector<8x64xf32>
    %469 = arith.addf %465, %468 : vector<8x64xf32>
    %470 = vector.shape_cast %469 : vector<8x64xf32> to vector<8x1x64xf32>
    %471 = vector.broadcast %470 : vector<8x1x64xf32> to vector<8x8x64xf32>
    %472 = arith.mulf %462, %471 : vector<8x8x64xf32>
    %cst_159 = arith.constant dense<0.000000e+00> : vector<8x8xf32>
    %473 = vector.multi_reduction <add>, %472, %cst_159 [2] : vector<8x8x64xf32> to vector<8x8xf32>
    %cst_160 = arith.constant dense<0xFF800000> : vector<8xf32>
    %474 = vector.multi_reduction <maximumf>, %473, %cst_160 [1] : vector<8x8xf32> to vector<8xf32>
    %475 = vector.shape_cast %474 : vector<8xf32> to vector<8x1xf32>
    %476 = vector.broadcast %475 : vector<8x1xf32> to vector<8x8xf32>
    %477 = arith.subf %473, %476 : vector<8x8xf32>
    %478 = math.exp %477 : vector<8x8xf32>
    %cst_161 = arith.constant dense<0.000000e+00> : vector<8xf32>
    %479 = vector.multi_reduction <add>, %478, %cst_161 [1] : vector<8x8xf32> to vector<8xf32>
    %480 = vector.shape_cast %479 : vector<8xf32> to vector<8x1xf32>
    %481 = tpu.reciprocal %480 {approx = true} : vector<8x1xf32> -> vector<8x1xf32>
    %482 = vector.broadcast %481 : vector<8x1xf32> to vector<8x8xf32>
    %483 = arith.mulf %478, %482 : vector<8x8xf32>
    %484 = vector.shape_cast %483 : vector<8x8xf32> to vector<8x8x1xf32>
    %485 = vector.broadcast %484 : vector<8x8x1xf32> to vector<8x8x64xf32>
    %486 = arith.mulf %462, %485 : vector<8x8x64xf32>
    %cst_162 = arith.constant dense<0.000000e+00> : vector<8x64xf32>
    %487 = vector.multi_reduction <add>, %486, %cst_162 [1] : vector<8x8x64xf32> to vector<8x64xf32>
    %488 = arith.truncf %487 : vector<8x64xf32> to vector<8x64xbf16>
    %c0_163 = arith.constant 0 : index
    %c0_164 = arith.constant 0 : index
    %489 = vector.load %arg13[%c0_163, %c0_164] : memref<64x32xbf16, #tpu.memory_space<vmem>>, vector<64x32xbf16>
    %cst_165 = arith.constant dense<0.000000e+00> : vector<8x32xf32>
    %490 = tpu.matmul %488, %489, %cst_165 {dimension_numbers = #tpu.dot_dimension_numbers<[1], [0], [0], [1], [0, 0, 1, 1], [], []>} : vector<8x64xbf16>, vector<64x32xbf16>, vector<8x32xf32> -> vector<8x32xf32>
    %491 = arith.truncf %430 : vector<8x32xf32> to vector<8x32xbf16>
    %c0_166 = arith.constant 0 : index
    %c0_167 = arith.constant 0 : index
    %492 = vector.load %arg14[%c0_166, %c0_167] : memref<32x32xbf16, #tpu.memory_space<vmem>>, vector<32x32xbf16>
    %cst_168 = arith.constant dense<0.000000e+00> : vector<8x32xf32>
    %493 = tpu.matmul %491, %492, %cst_168 {dimension_numbers = #tpu.dot_dimension_numbers<[1], [0], [0], [1], [0, 0, 1, 1], [], []>} : vector<8x32xbf16>, vector<32x32xbf16>, vector<8x32xf32> -> vector<8x32xf32>
    %494 = arith.addf %490, %493 : vector<8x32xf32>
    %495 = arith.truncf %461 : vector<8x32xf32> to vector<8x32xbf16>
    %c0_169 = arith.constant 0 : index
    %c0_170 = arith.constant 0 : index
    %496 = vector.load %arg15[%c0_169, %c0_170] : memref<32x32xbf16, #tpu.memory_space<vmem>>, vector<32x32xbf16>
    %cst_171 = arith.constant dense<0.000000e+00> : vector<8x32xf32>
    %497 = tpu.matmul %495, %496, %cst_171 {dimension_numbers = #tpu.dot_dimension_numbers<[1], [0], [0], [1], [0, 0, 1, 1], [], []>} : vector<8x32xbf16>, vector<32x32xbf16>, vector<8x32xf32> -> vector<8x32xf32>
    %498 = arith.addf %494, %497 : vector<8x32xf32>
    %c0_172 = arith.constant 0 : index
    %c0_173 = arith.constant 0 : index
    %499 = vector.load %arg16[%c0_172, %c0_173] : memref<1x32xf32, #tpu.memory_space<vmem>>, vector<1x32xf32>
    %500 = vector.broadcast %499 : vector<1x32xf32> to vector<8x32xf32>
    %501 = arith.addf %498, %500 : vector<8x32xf32>
    %502 = math.tanh %501 : vector<8x32xf32>
    %503 = arith.truncf %502 : vector<8x32xf32> to vector<8x32xbf16>
    %c0_174 = arith.constant 0 : index
    %c0_175 = arith.constant 0 : index
    %504 = vector.load %arg17[%c0_174, %c0_175] : memref<32x128xbf16, #tpu.memory_space<vmem>>, vector<32x128xbf16>
    %cst_176 = arith.constant dense<0.000000e+00> : vector<8x128xf32>
    %505 = tpu.matmul %503, %504, %cst_176 {dimension_numbers = #tpu.dot_dimension_numbers<[1], [0], [0], [1], [0, 0, 1, 1], [], []>} : vector<8x32xbf16>, vector<32x128xbf16>, vector<8x128xf32> -> vector<8x128xf32>
    %c0_177 = arith.constant 0 : index
    %c0_178 = arith.constant 0 : index
    %506 = vector.load %arg18[%c0_177, %c0_178] : memref<1x128xf32, #tpu.memory_space<vmem>>, vector<1x128xf32>
    %507 = vector.broadcast %506 : vector<1x128xf32> to vector<8x128xf32>
    %508 = arith.addf %505, %507 : vector<8x128xf32>
    %cst_179 = arith.constant dense<0xFF800000> : vector<8xf32>
    %509 = vector.multi_reduction <maximumf>, %508, %cst_179 [1] : vector<8x128xf32> to vector<8xf32>
    %510 = vector.shape_cast %509 : vector<8xf32> to vector<8x1xf32>
    %511 = vector.broadcast %510 : vector<8x1xf32> to vector<8x128xf32>
    %512 = arith.subf %508, %511 : vector<8x128xf32>
    %513 = math.exp %512 : vector<8x128xf32>
    %cst_180 = arith.constant dense<0.000000e+00> : vector<8xf32>
    %514 = vector.multi_reduction <add>, %513, %cst_180 [1] : vector<8x128xf32> to vector<8xf32>
    %515 = vector.shape_cast %514 : vector<8xf32> to vector<8x1xf32>
    %516 = math.log %515 : vector<8x1xf32>
    %517 = vector.broadcast %516 : vector<8x1xf32> to vector<8x128xf32>
    %518 = arith.subf %512, %517 : vector<8x128xf32>
    %c0_181 = arith.constant 0 : index
    %c0_182 = arith.constant 0 : index
    %519 = vector.load %arg19[%c0_181, %c0_182] : memref<8x128xf32, #tpu.memory_space<vmem>>, vector<8x128xf32>
    tpu.vector_store %arg19[%c0_181, %c0_182], %518 {strides = array<i32>} : memref<8x128xf32, #tpu.memory_space<vmem>>, vector<8x128xf32>,
    %520 = tpu.concatenate %198, %229, %430, %461, %196, %227, %428, %459 in 1 : vector<8x32xf32>, vector<8x32xf32>, vector<8x32xf32>, vector<8x32xf32>, vector<8x32xf32>, vector<8x32xf32>, vector<8x32xf32>, vector<8x32xf32> -> vector<8x256xf32>
    %c0_183 = arith.constant 0 : index
    %c0_184 = arith.constant 0 : index
    %521 = vector.load %arg20[%c0_183, %c0_184] : memref<8x256xf32, #tpu.memory_space<vmem>>, vector<8x256xf32>
    tpu.vector_store %arg20[%c0_183, %c0_184], %520 {strides = array<i32>} : memref<8x256xf32, #tpu.memory_space<vmem>>, vector<8x256xf32>,
    return
  }
  func.func @transform_0(%arg0: i32) -> (i32, i32, i32) {
    %c0_i32 = arith.constant 0 : i32
    %c0_i32_0 = arith.constant 0 : i32
    %c0_i32_1 = arith.constant 0 : i32
    return %c0_i32, %arg0, %c0_i32_0 : i32, i32, i32
  }
  func.func @transform_1(%arg0: i32) -> (i32, i32, i32) {
    %c0_i32 = arith.constant 0 : i32
    %c0_i32_0 = arith.constant 0 : i32
    %c0_i32_1 = arith.constant 0 : i32
    return %c0_i32, %arg0, %c0_i32_0 : i32, i32, i32
  }
  func.func @transform_2(%arg0: i32) -> (i32, i32, i32) {
    %c0_i32 = arith.constant 0 : i32
    %c0_i32_0 = arith.constant 0 : i32
    %c0_i32_1 = arith.constant 0 : i32
    return %c0_i32, %arg0, %c0_i32_0 : i32, i32, i32
  }
  func.func @transform_3(%arg0: i32) -> (i32, i32, i32) {
    %c0_i32 = arith.constant 0 : i32
    %c0_i32_0 = arith.constant 0 : i32
    %c0_i32_1 = arith.constant 0 : i32
    return %arg0, %c0_i32, %c0_i32_0 : i32, i32, i32
  }
  func.func @transform_4(%arg0: i32) -> (i32, i32) {
    %c0_i32 = arith.constant 0 : i32
    %c0_i32_0 = arith.constant 0 : i32
    %c0_i32_1 = arith.constant 0 : i32
    return %c0_i32, %c0_i32_0 : i32, i32
  }
  func.func @transform_5(%arg0: i32) -> (i32, i32) {
    %c0_i32 = arith.constant 0 : i32
    %c0_i32_0 = arith.constant 0 : i32
    %c0_i32_1 = arith.constant 0 : i32
    return %c0_i32, %c0_i32_0 : i32, i32
  }
  func.func @transform_6(%arg0: i32) -> (i32, i32) {
    %c0_i32 = arith.constant 0 : i32
    %c0_i32_0 = arith.constant 0 : i32
    %c0_i32_1 = arith.constant 0 : i32
    return %c0_i32, %c0_i32_0 : i32, i32
  }
  func.func @transform_7(%arg0: i32) -> (i32, i32) {
    %c0_i32 = arith.constant 0 : i32
    %c0_i32_0 = arith.constant 0 : i32
    %c0_i32_1 = arith.constant 0 : i32
    return %c0_i32, %c0_i32_0 : i32, i32
  }
  func.func @transform_8(%arg0: i32) -> (i32, i32) {
    %c0_i32 = arith.constant 0 : i32
    %c0_i32_0 = arith.constant 0 : i32
    %c0_i32_1 = arith.constant 0 : i32
    return %c0_i32, %c0_i32_0 : i32, i32
  }
  func.func @transform_9(%arg0: i32) -> (i32, i32) {
    %c0_i32 = arith.constant 0 : i32
    %c0_i32_0 = arith.constant 0 : i32
    %c0_i32_1 = arith.constant 0 : i32
    return %c0_i32, %c0_i32_0 : i32, i32
  }
  func.func @transform_10(%arg0: i32) -> (i32, i32) {
    %c0_i32 = arith.constant 0 : i32
    %c0_i32_0 = arith.constant 0 : i32
    %c0_i32_1 = arith.constant 0 : i32
    return %c0_i32, %c0_i32_0 : i32, i32
  }
  func.func @transform_11(%arg0: i32) -> (i32, i32) {
    %c0_i32 = arith.constant 0 : i32
    %c0_i32_0 = arith.constant 0 : i32
    %c0_i32_1 = arith.constant 0 : i32
    return %c0_i32, %c0_i32_0 : i32, i32
  }
  func.func @transform_12(%arg0: i32) -> (i32, i32) {
    %c0_i32 = arith.constant 0 : i32
    %c0_i32_0 = arith.constant 0 : i32
    %c0_i32_1 = arith.constant 0 : i32
    return %c0_i32, %c0_i32_0 : i32, i32
  }
  func.func @transform_13(%arg0: i32) -> (i32, i32) {
    %c0_i32 = arith.constant 0 : i32
    %c0_i32_0 = arith.constant 0 : i32
    %c0_i32_1 = arith.constant 0 : i32
    return %c0_i32, %c0_i32_0 : i32, i32
  }
  func.func @transform_14(%arg0: i32) -> (i32, i32) {
    %c0_i32 = arith.constant 0 : i32
    %c0_i32_0 = arith.constant 0 : i32
    %c0_i32_1 = arith.constant 0 : i32
    return %c0_i32, %c0_i32_0 : i32, i32
  }
  func.func @transform_15(%arg0: i32) -> (i32, i32) {
    %c0_i32 = arith.constant 0 : i32
    %c0_i32_0 = arith.constant 0 : i32
    %c0_i32_1 = arith.constant 0 : i32
    return %c0_i32, %c0_i32_0 : i32, i32
  }
  func.func @transform_16(%arg0: i32) -> (i32, i32) {
    %c0_i32 = arith.constant 0 : i32
    %c0_i32_0 = arith.constant 0 : i32
    %c0_i32_1 = arith.constant 0 : i32
    return %c0_i32, %c0_i32_0 : i32, i32
  }
  func.func @transform_17(%arg0: i32) -> (i32, i32) {
    %c0_i32 = arith.constant 0 : i32
    %c0_i32_0 = arith.constant 0 : i32
    %c0_i32_1 = arith.constant 0 : i32
    return %c0_i32, %c0_i32_0 : i32, i32
  }
  func.func @transform_18(%arg0: i32) -> (i32, i32) {
    %c0_i32 = arith.constant 0 : i32
    %c0_i32_0 = arith.constant 0 : i32
    return %arg0, %c0_i32 : i32, i32
  }
  func.func @transform_19(%arg0: i32) -> (i32, i32) {
    %c0_i32 = arith.constant 0 : i32
    %c0_i32_0 = arith.constant 0 : i32
    return %arg0, %c0_i32 : i32, i32
  }
}

</mosaic_0001>

<llo_original>
// kernel: decoder_attn_forward.1
$region0: #{decoder_attn_forward.1}
  #allocation0 [shape = 'u32[]', space=smem, size = 0x4, offset = 0x4, fixed_abs, tag = 'smem constant byte address 0x4 - core index']
  #allocation1 [shape = 'u32[72,128]{1,0:T(1,128)}', space=vmem, size = 0x9000, scoped, tag = 'internal scratch']
  %s0 = inlined_call_operand.vmem [shape: f32[3,16,32], index: 0, kind: input, shape index: {}]
  %s1 = inlined_call_operand.vmem [shape: f32[4,16,32], index: 1, kind: input, shape index: {}]
  %s2 = inlined_call_operand.vmem [shape: f32[4,16,32], index: 2, kind: input, shape index: {}]
  %s3 = inlined_call_operand.vmem [shape: f32[16,8,64], index: 3, kind: input, shape index: {}]
  %s4 = inlined_call_operand.vmem [shape: bf16[32,256], index: 4, kind: input, shape index: {}]
  %s5 = inlined_call_operand.vmem [shape: bf16[64,256], index: 5, kind: input, shape index: {}]
  %s6 = inlined_call_operand.vmem [shape: f32[1,256], index: 6, kind: input, shape index: {}]
  %s7 = inlined_call_operand.vmem [shape: bf16[64,256], index: 7, kind: input, shape index: {}]
  %s8 = inlined_call_operand.vmem [shape: bf16[64,256], index: 8, kind: input, shape index: {}]
  %s9 = inlined_call_operand.vmem [shape: f32[1,256], index: 9, kind: input, shape index: {}]
  %s10 = inlined_call_operand.vmem [shape: bf16[32,64], index: 10, kind: input, shape index: {}]
  %s11 = inlined_call_operand.vmem [shape: bf16[32,64], index: 11, kind: input, shape index: {}]
  %s12 = inlined_call_operand.vmem [shape: bf16[64,32], index: 12, kind: input, shape index: {}]
  %s13 = inlined_call_operand.vmem [shape: bf16[32,32], index: 13, kind: input, shape index: {}]
  %s14 = inlined_call_operand.vmem [shape: bf16[32,32], index: 14, kind: input, shape index: {}]
  %s15 = inlined_call_operand.vmem [shape: f32[1,32], index: 15, kind: input, shape index: {}]
  %s16 = inlined_call_operand.vmem [shape: bf16[32,128], index: 16, kind: input, shape index: {}]
  %s17 = inlined_call_operand.vmem [shape: f32[1,128], index: 17, kind: input, shape index: {}]
  %s18 = inlined_call_operand.hbm [shape: f32[16,128], index: 18, kind: output, shape index: {0}]
  %s19 = inlined_call_operand.vmem [shape: f32[16,256], index: 19, kind: output, shape index: {1}]
  %20 = xla_tuple %s18, %s19
  %s21 = sld [smem:[#allocation0]]
  $region227: #{decoder_attn_forward.1} parent=0
    _
  %s23 = ssub.s32 1, %s21
  %s24 = scalar_select 0, %s23, %s21
  $region1: #{decoder_attn_forward.1} parent=0
    #allocation2 [shape = 'u8[24576]{0}', space=vmem, size = 0x6000, scoped, tag = 'input window, operand 0']
    #allocation3 [shape = 'u8[32768]{0}', space=vmem, size = 0x8000, scoped, tag = 'input window, operand 1']
    #allocation4 [shape = 'u8[32768]{0}', space=vmem, size = 0x8000, scoped, tag = 'input window, operand 2']
    #allocation5 [shape = 'u8[8192]{0}', space=vmem, size = 0x2000, scoped, tag = 'output window, operand 0']
    #allocation6 [shape = 's32[2]{0}', space=sflag, size = 0x8, scoped, tag = 'scoped memory for decoder_attn_forward.1']
    %25 = vsyncpa [#allocation6], 0
    %s26 = scalar_lea.sflag [#allocation6], 1
    %27 = vsyncpa %s26, 0
    loop: start=0, step=1, limit=4
    $region2: #{decoder_attn_forward.1} parent=1 // loop_pre_header
      _
    $region3: #{decoder_attn_forward.1} parent=1 // loop_header
      %s29 = sphi 0, %s33
      %p30 = scmp.ge.s32.totalorder %s29, 4
      %s39 = sphi 0, %s41
      %s42 = sphi 0, %s39
      %s43 = sphi 0, %s42
      %s59 = sphi 0, %s43
      %s65 = sphi 0, %s67
      %s68 = sphi 0, %s65
      %s69 = sphi 0, %s68
      %s85 = sphi 0, %s69
      %s91 = sphi 0, %s93
      %s94 = sphi 0, %s91
      %s95 = sphi 0, %s94
      %s111 = sphi 0, %s95
      %s117 = sphi 0, %s119
      %s120 = sphi 0, %s117
      %s121 = sphi 0, %s120
      %s137 = sphi 0, %s121
      %s141 = sphi 0, %s141
      %s143 = sphi 0, %s141
      %s144 = sphi 0, %s143
      %s158 = sphi 0, %s144
      %s162 = sphi 0, %s162
      %s164 = sphi 0, %s162
      %s165 = sphi 0, %s164
      %s179 = sphi 0, %s165
      %s183 = sphi 0, %s183
      %s185 = sphi 0, %s183
      %s186 = sphi 0, %s185
      %s200 = sphi 0, %s186
      %s204 = sphi 0, %s204
      %s206 = sphi 0, %s204
      %s207 = sphi 0, %s206
      %s221 = sphi 0, %s207
      %s225 = sphi 0, %s225
      %s227 = sphi 0, %s225
      %s228 = sphi 0, %s227
      %s242 = sphi 0, %s228
      %s246 = sphi 0, %s246
      %s248 = sphi 0, %s246
      %s249 = sphi 0, %s248
      %s263 = sphi 0, %s249
      %s267 = sphi 0, %s267
      %s269 = sphi 0, %s267
      %s270 = sphi 0, %s269
      %s284 = sphi 0, %s270
      %s288 = sphi 0, %s288
      %s290 = sphi 0, %s288
      %s291 = sphi 0, %s290
      %s305 = sphi 0, %s291
      %s309 = sphi 0, %s309
      %s311 = sphi 0, %s309
      %s312 = sphi 0, %s311
      %s326 = sphi 0, %s312
      %s330 = sphi 0, %s330
      %s332 = sphi 0, %s330
      %s333 = sphi 0, %s332
      %s347 = sphi 0, %s333
      %s351 = sphi 0, %s351
      %s353 = sphi 0, %s351
      %s354 = sphi 0, %s353
      %s368 = sphi 0, %s354
      %s372 = sphi 0, %s372
      %s374 = sphi 0, %s372
      %s375 = sphi 0, %s374
      %s389 = sphi 0, %s375
      %s393 = sphi 0, %s393
      %s395 = sphi 0, %s393
      %s396 = sphi 0, %s395
      %s410 = sphi 0, %s396
      %s414 = sphi 0, %s414
      %s416 = sphi 0, %s414
      %s417 = sphi 0, %s416
      %s431 = sphi 0, %s417
      %s437 = sphi 0, %s439
      %s440 = sphi 0, %s437
      %s441 = sphi 0, %s440
      %s457 = sphi 0, %s441
      %s463 = sphi 0, %s465
      %s466 = sphi 0, %s463
      %s467 = sphi 0, %s466
      %s483 = sphi 0, %s467
    $region4: #{decoder_attn_forward.1} parent=1 // loop_header_branch
      %32 = sbr.rel (%p30) target = $region8
    $region5: #{decoder_attn_forward.1} parent=1 // loop_body
      %s34 = ssub.s32 %s29, 1
      %s35 = ssub.s32 %s29, 2
      %s36 = sadd.s32 %s29, 1
      %s37 = ssub.s32 %s29, %s36
      %p38 = scmp.eq.s32.totalorder %s37, 0
      %s40 = sadd.s32 %s39, 1
      %s41 = scalar_select %p38, %s39, %s40
      %p44 = pneg %p38
      %p45 = scmp.eq.s32.totalorder %s29, 1
      %p46 = por %p44, %p45
      %p47 = scmp.ne.s32.totalorder %s39, %s42
      %p48 = scmp.eq.s32.totalorder %s29, 0
      %p49 = por %p47, %p48
      %p50 = scmp.ne.s32.totalorder %s39, %s42
      %p51 = scmp.eq.s32.totalorder %s34, 1
      %p52 = por %p50, %p51
      %p53 = scmp.ne.s32.totalorder %s42, %s43
      %p54 = scmp.eq.s32.totalorder %s34, 0
      %p55 = por %p53, %p54
      %p56 = scmp.ne.s32.totalorder %s42, %s43
      %p57 = scmp.eq.s32.totalorder %s35, 1
      %p58 = por %p56, %p57
      %p60 = scmp.ne.s32.totalorder %s43, %s59
      %p61 = scmp.eq.s32.totalorder %s35, 0
      %p62 = por %p60, %p61
      %s63 = ssub.s32 %s29, %s36
      %p64 = scmp.eq.s32.totalorder %s63, 0
      %s66 = sadd.s32 %s65, 1
      %s67 = scalar_select %p64, %s65, %s66
      %p70 = pneg %p64
      %p71 = scmp.eq.s32.totalorder %s29, 1
      %p72 = por %p70, %p71
      %p73 = scmp.ne.s32.totalorder %s65, %s68
      %p74 = scmp.eq.s32.totalorder %s29, 0
      %p75 = por %p73, %p74
      %p76 = scmp.ne.s32.totalorder %s65, %s68
      %p77 = scmp.eq.s32.totalorder %s34, 1
      %p78 = por %p76, %p77
      %p79 = scmp.ne.s32.totalorder %s68, %s69
      %p80 = scmp.eq.s32.totalorder %s34, 0
      %p81 = por %p79, %p80
      %p82 = scmp.ne.s32.totalorder %s68, %s69
      %p83 = scmp.eq.s32.totalorder %s35, 1
      %p84 = por %p82, %p83
      %p86 = scmp.ne.s32.totalorder %s69, %s85
      %p87 = scmp.eq.s32.totalorder %s35, 0
      %p88 = por %p86, %p87
      %s89 = ssub.s32 %s29, %s36
      %p90 = scmp.eq.s32.totalorder %s89, 0
      %s92 = sadd.s32 %s91, 1
      %s93 = scalar_select %p90, %s91, %s92
      %p96 = pneg %p90
      %p97 = scmp.eq.s32.totalorder %s29, 1
      %p98 = por %p96, %p97
      %p99 = scmp.ne.s32.totalorder %s91, %s94
      %p100 = scmp.eq.s32.totalorder %s29, 0
      %p101 = por %p99, %p100
      %p102 = scmp.ne.s32.totalorder %s91, %s94
      %p103 = scmp.eq.s32.totalorder %s34, 1
      %p104 = por %p102, %p103
      %p105 = scmp.ne.s32.totalorder %s94, %s95
      %p106 = scmp.eq.s32.totalorder %s34, 0
      %p107 = por %p105, %p106
      %p108 = scmp.ne.s32.totalorder %s94, %s95
      %p109 = scmp.eq.s32.totalorder %s35, 1
      %p110 = por %p108, %p109
      %p112 = scmp.ne.s32.totalorder %s95, %s111
      %p113 = scmp.eq.s32.totalorder %s35, 0
      %p114 = por %p112, %p113
      %s115 = ssub.s32 %s29, %s36
      %p116 = scmp.eq.s32.totalorder %s115, 0
      %s118 = sadd.s32 %s117, 1
      %s119 = scalar_select %p116, %s117, %s118
      %p122 = pneg %p116
      %p123 = scmp.eq.s32.totalorder %s29, 1
      %p124 = por %p122, %p123
      %p125 = scmp.ne.s32.totalorder %s117, %s120
      %p126 = scmp.eq.s32.totalorder %s29, 0
      %p127 = por %p125, %p126
      %p128 = scmp.ne.s32.totalorder %s117, %s120
      %p129 = scmp.eq.s32.totalorder %s34, 1
      %p130 = por %p128, %p129
      %p131 = scmp.ne.s32.totalorder %s120, %s121
      %p132 = scmp.eq.s32.totalorder %s34, 0
      %p133 = por %p131, %p132
      %p134 = scmp.ne.s32.totalorder %s120, %s121
      %p135 = scmp.eq.s32.totalorder %s35, 1
      %p136 = por %p134, %p135
      %p138 = scmp.ne.s32.totalorder %s121, %s137
      %p139 = scmp.eq.s32.totalorder %s35, 0
      %p140 = por %p138, %p139
      %s142 = sadd.s32 %s141, 1
      %p145 = scmp.eq.s32.totalorder %s29, 1
      %p146 = scmp.ne.s32.totalorder %s141, %s143
      %p147 = scmp.eq.s32.totalorder %s29, 0
      %p148 = por %p146, %p147
      %p149 = scmp.ne.s32.totalorder %s141, %s143
      %p150 = scmp.eq.s32.totalorder %s34, 1
      %p151 = por %p149, %p150
      %p152 = scmp.ne.s32.totalorder %s143, %s144
      %p153 = scmp.eq.s32.totalorder %s34, 0
      %p154 = por %p152, %p153
      %p155 = scmp.ne.s32.totalorder %s143, %s144
      %p156 = scmp.eq.s32.totalorder %s35, 1
      %p157 = por %p155, %p156
      %p159 = scmp.ne.s32.totalorder %s144, %s158
      %p160 = scmp.eq.s32.totalorder %s35, 0
      %p161 = por %p159, %p160
      %s163 = sadd.s32 %s162, 1
      %p166 = scmp.eq.s32.totalorder %s29, 1
      %p167 = scmp.ne.s32.totalorder %s162, %s164
      %p168 = scmp.eq.s32.totalorder %s29, 0
      %p169 = por %p167, %p168
      %p170 = scmp.ne.s32.totalorder %s162, %s164
      %p171 = scmp.eq.s32.totalorder %s34, 1
      %p172 = por %p170, %p171
      %p173 = scmp.ne.s32.totalorder %s164, %s165
      %p174 = scmp.eq.s32.totalorder %s34, 0
      %p175 = por %p173, %p174
      %p176 = scmp.ne.s32.totalorder %s164, %s165
      %p177 = scmp.eq.s32.totalorder %s35, 1
      %p178 = por %p176, %p177
      %p180 = scmp.ne.s32.totalorder %s165, %s179
      %p181 = scmp.eq.s32.totalorder %s35, 0
      %p182 = por %p180, %p181
      %s184 = sadd.s32 %s183, 1
      %p187 = scmp.eq.s32.totalorder %s29, 1
      %p188 = scmp.ne.s32.totalorder %s183, %s185
      %p189 = scmp.eq.s32.totalorder %s29, 0
      %p190 = por %p188, %p189
      %p191 = scmp.ne.s32.totalorder %s183, %s185
      %p192 = scmp.eq.s32.totalorder %s34, 1
      %p193 = por %p191, %p192
      %p194 = scmp.ne.s32.totalorder %s185, %s186
      %p195 = scmp.eq.s32.totalorder %s34, 0
      %p196 = por %p194, %p195
      %p197 = scmp.ne.s32.totalorder %s185, %s186
      %p198 = scmp.eq.s32.totalorder %s35, 1
      %p199 = por %p197, %p198
      %p201 = scmp.ne.s32.totalorder %s186, %s200
      %p202 = scmp.eq.s32.totalorder %s35, 0
      %p203 = por %p201, %p202
      %s205 = sadd.s32 %s204, 1
      %p208 = scmp.eq.s32.totalorder %s29, 1
      %p209 = scmp.ne.s32.totalorder %s204, %s206
      %p210 = scmp.eq.s32.totalorder %s29, 0
      %p211 = por %p209, %p210
      %p212 = scmp.ne.s32.totalorder %s204, %s206
      %p213 = scmp.eq.s32.totalorder %s34, 1
      %p214 = por %p212, %p213
      %p215 = scmp.ne.s32.totalorder %s206, %s207
      %p216 = scmp.eq.s32.totalorder %s34, 0
      %p217 = por %p215, %p216
      %p218 = scmp.ne.s32.totalorder %s206, %s207
      %p219 = scmp.eq.s32.totalorder %s35, 1
      %p220 = por %p218, %p219
      %p222 = scmp.ne.s32.totalorder %s207, %s221
      %p223 = scmp.eq.s32.totalorder %s35, 0
      %p224 = por %p222, %p223
      %s226 = sadd.s32 %s225, 1
      %p229 = scmp.eq.s32.totalorder %s29, 1
      %p230 = scmp.ne.s32.totalorder %s225, %s227
      %p231 = scmp.eq.s32.totalorder %s29, 0
      %p232 = por %p230, %p231
      %p233 = scmp.ne.s32.totalorder %s225, %s227
      %p234 = scmp.eq.s32.totalorder %s34, 1
      %p235 = por %p233, %p234
      %p236 = scmp.ne.s32.totalorder %s227, %s228
      %p237 = scmp.eq.s32.totalorder %s34, 0
      %p238 = por %p236, %p237
      %p239 = scmp.ne.s32.totalorder %s227, %s228
      %p240 = scmp.eq.s32.totalorder %s35, 1
      %p241 = por %p239, %p240
      %p243 = scmp.ne.s32.totalorder %s228, %s242
      %p244 = scmp.eq.s32.totalorder %s35, 0
      %p245 = por %p243, %p244
      %s247 = sadd.s32 %s246, 1
      %p250 = scmp.eq.s32.totalorder %s29, 1
      %p251 = scmp.ne.s32.totalorder %s246, %s248
      %p252 = scmp.eq.s32.totalorder %s29, 0
      %p253 = por %p251, %p252
      %p254 = scmp.ne.s32.totalorder %s246, %s248
      %p255 = scmp.eq.s32.totalorder %s34, 1
      %p256 = por %p254, %p255
      %p257 = scmp.ne.s32.totalorder %s248, %s249
      %p258 = scmp.eq.s32.totalorder %s34, 0
      %p259 = por %p257, %p258
      %p260 = scmp.ne.s32.totalorder %s248, %s249
      %p261 = scmp.eq.s32.totalorder %s35, 1
      %p262 = por %p260, %p261
      %p264 = scmp.ne.s32.totalorder %s249, %s263
      %p265 = scmp.eq.s32.totalorder %s35, 0
      %p266 = por %p264, %p265
      %s268 = sadd.s32 %s267, 1
      %p271 = scmp.eq.s32.totalorder %s29, 1
      %p272 = scmp.ne.s32.totalorder %s267, %s269
      %p273 = scmp.eq.s32.totalorder %s29, 0
      %p274 = por %p272, %p273
      %p275 = scmp.ne.s32.totalorder %s267, %s269
      %p276 = scmp.eq.s32.totalorder %s34, 1
      %p277 = por %p275, %p276
      %p278 = scmp.ne.s32.totalorder %s269, %s270
      %p279 = scmp.eq.s32.totalorder %s34, 0
      %p280 = por %p278, %p279
      %p281 = scmp.ne.s32.totalorder %s269, %s270
      %p282 = scmp.eq.s32.totalorder %s35, 1
      %p283 = por %p281, %p282
      %p285 = scmp.ne.s32.totalorder %s270, %s284
      %p286 = scmp.eq.s32.totalorder %s35, 0
      %p287 = por %p285, %p286
      %s289 = sadd.s32 %s288, 1
      %p292 = scmp.eq.s32.totalorder %s29, 1
      %p293 = scmp.ne.s32.totalorder %s288, %s290
      %p294 = scmp.eq.s32.totalorder %s29, 0
      %p295 = por %p293, %p294
      %p296 = scmp.ne.s32.totalorder %s288, %s290
      %p297 = scmp.eq.s32.totalorder %s34, 1
      %p298 = por %p296, %p297
      %p299 = scmp.ne.s32.totalorder %s290, %s291
      %p300 = scmp.eq.s32.totalorder %s34, 0
      %p301 = por %p299, %p300
      %p302 = scmp.ne.s32.totalorder %s290, %s291
      %p303 = scmp.eq.s32.totalorder %s35, 1
      %p304 = por %p302, %p303
      %p306 = scmp.ne.s32.totalorder %s291, %s305
      %p307 = scmp.eq.s32.totalorder %s35, 0
      %p308 = por %p306, %p307
      %s310 = sadd.s32 %s309, 1
      %p313 = scmp.eq.s32.totalorder %s29, 1
      %p314 = scmp.ne.s32.totalorder %s309, %s311
      %p315 = scmp.eq.s32.totalorder %s29, 0
      %p316 = por %p314, %p315
      %p317 = scmp.ne.s32.totalorder %s309, %s311
      %p318 = scmp.eq.s32.totalorder %s34, 1
      %p319 = por %p317, %p318
      %p320 = scmp.ne.s32.totalorder %s311, %s312
      %p321 = scmp.eq.s32.totalorder %s34, 0
      %p322 = por %p320, %p321
      %p323 = scmp.ne.s32.totalorder %s311, %s312
      %p324 = scmp.eq.s32.totalorder %s35, 1
      %p325 = por %p323, %p324
      %p327 = scmp.ne.s32.totalorder %s312, %s326
      %p328 = scmp.eq.s32.totalorder %s35, 0
      %p329 = por %p327, %p328
      %s331 = sadd.s32 %s330, 1
      %p334 = scmp.eq.s32.totalorder %s29, 1
      %p335 = scmp.ne.s32.totalorder %s330, %s332
      %p336 = scmp.eq.s32.totalorder %s29, 0
      %p337 = por %p335, %p336
      %p338 = scmp.ne.s32.totalorder %s330, %s332
      %p339 = scmp.eq.s32.totalorder %s34, 1
      %p340 = por %p338, %p339
      %p341 = scmp.ne.s32.totalorder %s332, %s333
      %p342 = scmp.eq.s32.totalorder %s34, 0
      %p343 = por %p341, %p342
      %p344 = scmp.ne.s32.totalorder %s332, %s333
      %p345 = scmp.eq.s32.totalorder %s35, 1
      %p346 = por %p344, %p345
      %p348 = scmp.ne.s32.totalorder %s333, %s347
      %p349 = scmp.eq.s32.totalorder %s35, 0
      %p350 = por %p348, %p349
      %s352 = sadd.s32 %s351, 1
      %p355 = scmp.eq.s32.totalorder %s29, 1
      %p356 = scmp.ne.s32.totalorder %s351, %s353
      %p357 = scmp.eq.s32.totalorder %s29, 0
      %p358 = por %p356, %p357
      %p359 = scmp.ne.s32.totalorder %s351, %s353
      %p360 = scmp.eq.s32.totalorder %s34, 1
      %p361 = por %p359, %p360
      %p362 = scmp.ne.s32.totalorder %s353, %s354
      %p363 = scmp.eq.s32.totalorder %s34, 0
      %p364 = por %p362, %p363
      %p365 = scmp.ne.s32.totalorder %s353, %s354
      %p366 = scmp.eq.s32.totalorder %s35, 1
      %p367 = por %p365, %p366
      %p369 = scmp.ne.s32.totalorder %s354, %s368
      %p370 = scmp.eq.s32.totalorder %s35, 0
      %p371 = por %p369, %p370
      %s373 = sadd.s32 %s372, 1
      %p376 = scmp.eq.s32.totalorder %s29, 1
      %p377 = scmp.ne.s32.totalorder %s372, %s374
      %p378 = scmp.eq.s32.totalorder %s29, 0
      %p379 = por %p377, %p378
      %p380 = scmp.ne.s32.totalorder %s372, %s374
      %p381 = scmp.eq.s32.totalorder %s34, 1
      %p382 = por %p380, %p381
      %p383 = scmp.ne.s32.totalorder %s374, %s375
      %p384 = scmp.eq.s32.totalorder %s34, 0
      %p385 = por %p383, %p384
      %p386 = scmp.ne.s32.totalorder %s374, %s375
      %p387 = scmp.eq.s32.totalorder %s35, 1
      %p388 = por %p386, %p387
      %p390 = scmp.ne.s32.totalorder %s375, %s389
      %p391 = scmp.eq.s32.totalorder %s35, 0
      %p392 = por %p390, %p391
      %s394 = sadd.s32 %s393, 1
      %p397 = scmp.eq.s32.totalorder %s29, 1
      %p398 = scmp.ne.s32.totalorder %s393, %s395
      %p399 = scmp.eq.s32.totalorder %s29, 0
      %p400 = por %p398, %p399
      %p401 = scmp.ne.s32.totalorder %s393, %s395
      %p402 = scmp.eq.s32.totalorder %s34, 1
      %p403 = por %p401, %p402
      %p404 = scmp.ne.s32.totalorder %s395, %s396
      %p405 = scmp.eq.s32.totalorder %s34, 0
      %p406 = por %p404, %p405
      %p407 = scmp.ne.s32.totalorder %s395, %s396
      %p408 = scmp.eq.s32.totalorder %s35, 1
      %p409 = por %p407, %p408
      %p411 = scmp.ne.s32.totalorder %s396, %s410
      %p412 = scmp.eq.s32.totalorder %s35, 0
      %p413 = por %p411, %p412
      %s415 = sadd.s32 %s414, 1
      %p418 = scmp.eq.s32.totalorder %s29, 1
      %p419 = scmp.ne.s32.totalorder %s414, %s416
      %p420 = scmp.eq.s32.totalorder %s29, 0
      %p421 = por %p419, %p420
      %p422 = scmp.ne.s32.totalorder %s414, %s416
      %p423 = scmp.eq.s32.totalorder %s34, 1
      %p424 = por %p422, %p423
      %p425 = scmp.ne.s32.totalorder %s416, %s417
      %p426 = scmp.eq.s32.totalorder %s34, 0
      %p427 = por %p425, %p426
      %p428 = scmp.ne.s32.totalorder %s416, %s417
      %p429 = scmp.eq.s32.totalorder %s35, 1
      %p430 = por %p428, %p429
      %p432 = scmp.ne.s32.totalorder %s417, %s431
      %p433 = scmp.eq.s32.totalorder %s35, 0
      %p434 = por %p432, %p433
      %s435 = ssub.s32 %s29, %s36
      %p436 = scmp.eq.s32.totalorder %s435, 0
      %s438 = sadd.s32 %s437, 1
      %s439 = scalar_select %p436, %s437, %s438
      %p442 = pneg %p436
      %p443 = scmp.eq.s32.totalorder %s29, 1
      %p444 = por %p442, %p443
      %p445 = scmp.ne.s32.totalorder %s437, %s440
      %p446 = scmp.eq.s32.totalorder %s29, 0
      %p447 = por %p445, %p446
      %p448 = scmp.ne.s32.totalorder %s437, %s440
      %p449 = scmp.eq.s32.totalorder %s34, 1
      %p450 = por %p448, %p449
      %p451 = scmp.ne.s32.totalorder %s440, %s441
      %p452 = scmp.eq.s32.totalorder %s34, 0
      %p453 = por %p451, %p452
      %p454 = scmp.ne.s32.totalorder %s440, %s441
      %p455 = scmp.eq.s32.totalorder %s35, 1
      %p456 = por %p454, %p455
      %p458 = scmp.ne.s32.totalorder %s441, %s457
      %p459 = scmp.eq.s32.totalorder %s35, 0
      %p460 = por %p458, %p459
      %s461 = ssub.s32 %s29, %s36
      %p462 = scmp.eq.s32.totalorder %s461, 0
      %s464 = sadd.s32 %s463, 1
      %s465 = scalar_select %p462, %s463, %s464
      %p468 = pneg %p462
      %p469 = scmp.eq.s32.totalorder %s29, 1
      %p470 = por %p468, %p469
      %p471 = scmp.ne.s32.totalorder %s463, %s466
      %p472 = scmp.eq.s32.totalorder %s29, 0
      %p473 = por %p471, %p472
      %p474 = scmp.ne.s32.totalorder %s463, %s466
      %p475 = scmp.eq.s32.totalorder %s34, 1
      %p476 = por %p474, %p475
      %p477 = scmp.ne.s32.totalorder %s466, %s467
      %p478 = scmp.eq.s32.totalorder %s34, 0
      %p479 = por %p477, %p478
      %p480 = scmp.ne.s32.totalorder %s466, %s467
      %p481 = scmp.eq.s32.totalorder %s35, 1
      %p482 = por %p480, %p481
      %p484 = scmp.ne.s32.totalorder %s467, %s483
      %p485 = scmp.eq.s32.totalorder %s35, 0
      %p486 = por %p484, %p485
      %p487 = scmp.le.s32.totalorder 1, %s29
      %p488 = scmp.lt.s32.totalorder %s29, 3
      %p489 = pnand %p487, %p488
      %p490 = pneg %p489
      // Predicated region
      $region9: #{decoder_attn_forward.1} parent=5 // pred_check
        _
      $region10: #{decoder_attn_forward.1} parent=5 // pred_check_branch
        %492 = sbr.rel (%p489) target = $region12
      $region11: #{decoder_attn_forward.1} parent=5 // pred_region
        %s493 = ssub.s32 %s29, 1
        // Predicated region
        $region13: #{decoder_attn_forward.1} parent=11 // pred_check
          %p494 = pneg %p154
        $region14: #{decoder_attn_forward.1} parent=11 // pred_check_branch
          %496 = sbr.rel (%p494) target = $region16
        $region15: #{decoder_attn_forward.1} parent=11 // pred_region
          _
        $region16: #{decoder_attn_forward.1} parent=11 // pred_fallthru
          _
        // Predicated region
        $region17: #{decoder_attn_forward.1} parent=11 // pred_check
          %p497 = pneg %p175
        $region18: #{decoder_attn_forward.1} parent=11 // pred_check_branch
          %499 = sbr.rel (%p497) target = $region20
        $region19: #{decoder_attn_forward.1} parent=11 // pred_region
          _
        $region20: #{decoder_attn_forward.1} parent=11 // pred_fallthru
          _
        // Predicated region
        $region21: #{decoder_attn_forward.1} parent=11 // pred_check
          %p500 = pneg %p196
        $region22: #{decoder_attn_forward.1} parent=11 // pred_check_branch
          %502 = sbr.rel (%p500) target = $region24
        $region23: #{decoder_attn_forward.1} parent=11 // pred_region
          _
        $region24: #{decoder_attn_forward.1} parent=11 // pred_fallthru
          _
        // Predicated region
        $region25: #{decoder_attn_forward.1} parent=11 // pred_check
          %p503 = pneg %p217
        $region26: #{decoder_attn_forward.1} parent=11 // pred_check_branch
          %505 = sbr.rel (%p503) target = $region28
        $region27: #{decoder_attn_forward.1} parent=11 // pred_region
          _
        $region28: #{decoder_attn_forward.1} parent=11 // pred_fallthru
          _
        // Predicated region
        $region29: #{decoder_attn_forward.1} parent=11 // pred_check
          %p506 = pneg %p238
        $region30: #{decoder_attn_forward.1} parent=11 // pred_check_branch
          %508 = sbr.rel (%p506) target = $region32
        $region31: #{decoder_attn_forward.1} parent=11 // pred_region
          _
        $region32: #{decoder_attn_forward.1} parent=11 // pred_fallthru
          _
        // Predicated region
        $region33: #{decoder_attn_forward.1} parent=11 // pred_check
          %p509 = pneg %p259
        $region34: #{decoder_attn_forward.1} parent=11 // pred_check_branch
          %511 = sbr.rel (%p509) target = $region36
        $region35: #{decoder_attn_forward.1} parent=11 // pred_region
          _
        $region36: #{decoder_attn_forward.1} parent=11 // pred_fallthru
          _
        // Predicated region
        $region37: #{decoder_attn_forward.1} parent=11 // pred_check
          %p512 = pneg %p280
        $region38: #{decoder_attn_forward.1} parent=11 // pred_check_branch
          %514 = sbr.rel (%p512) target = $region40
        $region39: #{decoder_attn_forward.1} parent=11 // pred_region
          _
        $region40: #{decoder_attn_forward.1} parent=11 // pred_fallthru
          _
        // Predicated region
        $region41: #{decoder_attn_forward.1} parent=11 // pred_check
          %p515 = pneg %p301
        $region42: #{decoder_attn_forward.1} parent=11 // pred_check_branch
          %517 = sbr.rel (%p515) target = $region44
        $region43: #{decoder_attn_forward.1} parent=11 // pred_region
          _
        $region44: #{decoder_attn_forward.1} parent=11 // pred_fallthru
          _
        // Predicated region
        $region45: #{decoder_attn_forward.1} parent=11 // pred_check
          %p518 = pneg %p322
        $region46: #{decoder_attn_forward.1} parent=11 // pred_check_branch
          %520 = sbr.rel (%p518) target = $region48
        $region47: #{decoder_attn_forward.1} parent=11 // pred_region
          _
        $region48: #{decoder_attn_forward.1} parent=11 // pred_fallthru
          _
        // Predicated region
        $region49: #{decoder_attn_forward.1} parent=11 // pred_check
          %p521 = pneg %p343
        $region50: #{decoder_attn_forward.1} parent=11 // pred_check_branch
          %523 = sbr.rel (%p521) target = $region52
        $region51: #{decoder_attn_forward.1} parent=11 // pred_region
          _
        $region52: #{decoder_attn_forward.1} parent=11 // pred_fallthru
          _
        // Predicated region
        $region53: #{decoder_attn_forward.1} parent=11 // pred_check
          %p524 = pneg %p364
        $region54: #{decoder_attn_forward.1} parent=11 // pred_check_branch
          %526 = sbr.rel (%p524) target = $region56
        $region55: #{decoder_attn_forward.1} parent=11 // pred_region
          _
        $region56: #{decoder_attn_forward.1} parent=11 // pred_fallthru
          _
        // Predicated region
        $region57: #{decoder_attn_forward.1} parent=11 // pred_check
          %p527 = pneg %p385
        $region58: #{decoder_attn_forward.1} parent=11 // pred_check_branch
          %529 = sbr.rel (%p527) target = $region60
        $region59: #{decoder_attn_forward.1} parent=11 // pred_region
          _
        $region60: #{decoder_attn_forward.1} parent=11 // pred_fallthru
          _
        // Predicated region
        $region61: #{decoder_attn_forward.1} parent=11 // pred_check
          %p530 = pneg %p406
        $region62: #{decoder_attn_forward.1} parent=11 // pred_check_branch
          %532 = sbr.rel (%p530) target = $region64
        $region63: #{decoder_attn_forward.1} parent=11 // pred_region
          _
        $region64: #{decoder_attn_forward.1} parent=11 // pred_fallthru
          _
        // Predicated region
        $region65: #{decoder_attn_forward.1} parent=11 // pred_check
          %p533 = pneg %p427
        $region66: #{decoder_attn_forward.1} parent=11 // pred_check_branch
          %535 = sbr.rel (%p533) target = $region68
        $region67: #{decoder_attn_forward.1} parent=11 // pred_region
          _
        $region68: #{decoder_attn_forward.1} parent=11 // pred_fallthru
          _
      $region12: #{decoder_attn_forward.1} parent=5 // pred_fallthru
        _
      %p536 = scmp.lt.s32.totalorder %s29, 2
      // Predicated region
      $region69: #{decoder_attn_forward.1} parent=5 // pred_check
        %p537 = pneg %p536
      $region70: #{decoder_attn_forward.1} parent=5 // pred_check_branch
        %539 = sbr.rel (%p537) target = $region72
      $region71: #{decoder_attn_forward.1} parent=5 // pred_region
        // Predicated region
        $region73: #{decoder_attn_forward.1} parent=71 // pred_check
          %p540 = pneg %p49
        $region74: #{decoder_attn_forward.1} parent=71 // pred_check_branch
          %542 = sbr.rel (%p540) target = $region76
        $region75: #{decoder_attn_forward.1} parent=71 // pred_region
          %s543 = sand.u32 %s39, 1
          %s544 = sand.u32 %s39, 1
          %s545 = smul.addr %s544, 24
          %s546 = scalar_lea.vmem [#allocation2], %s545
          %s547 = smul.addr %s29, 8
          %s548 = scalar_lea.vmem %s0, %s547
          // Predicated region
          $region77: #{decoder_attn_forward.1} parent=75 // pred_check
            _
          $region78: #{decoder_attn_forward.1} parent=75 // pred_check_branch
            %550 = sbr.rel (0) target = $region80
          $region79: #{decoder_attn_forward.1} parent=75 // pred_region
            // Predicated region
            $region81: #{decoder_attn_forward.1} parent=79 // pred_check
              _
            $region82: #{decoder_attn_forward.1} parent=79 // pred_check_branch
              %552 = sbr.rel (0) target = $region84
            $region83: #{decoder_attn_forward.1} parent=79 // pred_region
              // Predicated region
              $region96: #{decoder_attn_forward.1} parent=83 // pred_check
                _
              $region97: #{decoder_attn_forward.1} parent=83 // pred_check_branch
                %572 = sbr.rel (0) target = $region99
              $region98: #{decoder_attn_forward.1} parent=83 // pred_region
                loop: start=0, step=1, limit=1
                $region100: #{decoder_attn_forward.1} parent=98 // loop_pre_header
                  _
                $region101: #{decoder_attn_forward.1} parent=98 // loop_header
                  %s574 = sphi 0, %s578
                  %p575 = scmp.ge.s32.totalorder %s574, 1
                  %s579 = sphi %s548, %s548
                  %s580 = sphi %s546, %s546
                $region102: #{decoder_attn_forward.1} parent=98 // loop_header_branch
                  %577 = sbr.rel (%p575) target = $region106
                $region103: #{decoder_attn_forward.1} parent=98 // loop_body
                  %v581 = vld [vmem:[%s579] sm:$0xff]
                  %582 = vst [vmem:[%s580] sm:$0xff] %v581
                  %v583 = vld [vmem:[%s579 + $0x10] sm:$0xff]
                  %584 = vst [vmem:[%s580 + $0x8] sm:$0xff] %v583
                  %v585 = vld [vmem:[%s579 + $0x20] sm:$0xff]
                  %586 = vst [vmem:[%s580 + $0x10] sm:$0xff] %v585
                $region104: #{decoder_attn_forward.1} parent=98 // loop_footer
                  %s578 = sadd.s32 1, %s574
                $region105: #{decoder_attn_forward.1} parent=98 // loop_footer_branch
                  %573 = sbr.rel target = $region101
                $region106: #{decoder_attn_forward.1} parent=98 // loop_exit
                  _
              $region99: #{decoder_attn_forward.1} parent=83 // pred_fallthru
                _
              // Predicated region
              $region107: #{decoder_attn_forward.1} parent=83 // pred_check
                _
              $region108: #{decoder_attn_forward.1} parent=83 // pred_check_branch
                %588 = sbr.rel target = $region110
              $region109: #{decoder_attn_forward.1} parent=83 // pred_region
                _
              $region110: #{decoder_attn_forward.1} parent=83 // pred_fallthru
                _
            $region84: #{decoder_attn_forward.1} parent=79 // pred_fallthru
              _
            // Predicated region
            $region85: #{decoder_attn_forward.1} parent=79 // pred_check
              _
            $region86: #{decoder_attn_forward.1} parent=79 // pred_check_branch
              %554 = sbr.rel target = $region88
            $region87: #{decoder_attn_forward.1} parent=79 // pred_region
              %s556 = ssub.s32 256, 1
              loop: start=0, step=1, limit=1
              $region89: #{decoder_attn_forward.1} parent=87 // loop_pre_header
                _
              $region90: #{decoder_attn_forward.1} parent=87 // loop_header
                %s558 = sphi 0, %s562
                %p559 = scmp.ge.s32.totalorder %s558, 1
                %s563 = sphi %s548, %s548
                %s564 = sphi %s546, %s546
              $region91: #{decoder_attn_forward.1} parent=87 // loop_header_branch
                %561 = sbr.rel (%p559) target = $region95
              $region92: #{decoder_attn_forward.1} parent=87 // loop_body
                %v565 = vld [vmem:[%s563] sm:%s556]
                %566 = vst [vmem:[%s564] sm:%s556] %v565
                %v567 = vld [vmem:[%s563 + $0x10] sm:%s556]
                %568 = vst [vmem:[%s564 + $0x8] sm:%s556] %v567
                %v569 = vld [vmem:[%s563 + $0x20] sm:%s556]
                %570 = vst [vmem:[%s564 + $0x10] sm:%s556] %v569
              $region93: #{decoder_attn_forward.1} parent=87 // loop_footer
                %s562 = sadd.s32 1, %s558
              $region94: #{decoder_attn_forward.1} parent=87 // loop_footer_branch
                %557 = sbr.rel target = $region90
              $region95: #{decoder_attn_forward.1} parent=87 // loop_exit
                _
            $region88: #{decoder_attn_forward.1} parent=79 // pred_fallthru
              _
          $region80: #{decoder_attn_forward.1} parent=75 // pred_fallthru
            _
          %589 = vnop
        $region76: #{decoder_attn_forward.1} parent=71 // pred_fallthru
          _
        // Predicated region
        $region111: #{decoder_attn_forward.1} parent=71 // pred_check
          %p590 = pneg %p75
        $region112: #{decoder_attn_forward.1} parent=71 // pred_check_branch
          %592 = sbr.rel (%p590) target = $region114
        $region113: #{decoder_attn_forward.1} parent=71 // pred_region
          %s593 = sand.u32 %s65, 1
          %s594 = sand.u32 %s65, 1
          %s595 = smul.addr %s594, 32
          %s596 = scalar_lea.vmem [#allocation3], %s595
          %s597 = smul.addr %s29, 8
          %s598 = scalar_lea.vmem %s1, %s597
          // Predicated region
          $region115: #{decoder_attn_forward.1} parent=113 // pred_check
            _
          $region116: #{decoder_attn_forward.1} parent=113 // pred_check_branch
            %600 = sbr.rel (0) target = $region118
          $region117: #{decoder_attn_forward.1} parent=113 // pred_region
            // Predicated region
            $region119: #{decoder_attn_forward.1} parent=117 // pred_check
              _
            $region120: #{decoder_attn_forward.1} parent=117 // pred_check_branch
              %602 = sbr.rel (0) target = $region122
            $region121: #{decoder_attn_forward.1} parent=117 // pred_region
              // Predicated region
              $region134: #{decoder_attn_forward.1} parent=121 // pred_check
                _
              $region135: #{decoder_attn_forward.1} parent=121 // pred_check_branch
                %624 = sbr.rel (0) target = $region137
              $region136: #{decoder_attn_forward.1} parent=121 // pred_region
                loop: start=0, step=1, limit=1
                $region138: #{decoder_attn_forward.1} parent=136 // loop_pre_header
                  _
                $region139: #{decoder_attn_forward.1} parent=136 // loop_header
                  %s626 = sphi 0, %s630
                  %p627 = scmp.ge.s32.totalorder %s626, 1
                  %s631 = sphi %s598, %s598
                  %s632 = sphi %s596, %s596
                $region140: #{decoder_attn_forward.1} parent=136 // loop_header_branch
                  %629 = sbr.rel (%p627) target = $region144
                $region141: #{decoder_attn_forward.1} parent=136 // loop_body
                  %v633 = vld [vmem:[%s631] sm:$0xff]
                  %634 = vst [vmem:[%s632] sm:$0xff] %v633
                  %v635 = vld [vmem:[%s631 + $0x10] sm:$0xff]
                  %636 = vst [vmem:[%s632 + $0x8] sm:$0xff] %v635
                  %v637 = vld [vmem:[%s631 + $0x20] sm:$0xff]
                  %638 = vst [vmem:[%s632 + $0x10] sm:$0xff] %v637
                  %v639 = vld [vmem:[%s631 + $0x30] sm:$0xff]
                  %640 = vst [vmem:[%s632 + $0x18] sm:$0xff] %v639
                $region142: #{decoder_attn_forward.1} parent=136 // loop_footer
                  %s630 = sadd.s32 1, %s626
                $region143: #{decoder_attn_forward.1} parent=136 // loop_footer_branch
                  %625 = sbr.rel target = $region139
                $region144: #{decoder_attn_forward.1} parent=136 // loop_exit
                  _
              $region137: #{decoder_attn_forward.1} parent=121 // pred_fallthru
                _
              // Predicated region
              $region145: #{decoder_attn_forward.1} parent=121 // pred_check
                _
              $region146: #{decoder_attn_forward.1} parent=121 // pred_check_branch
                %642 = sbr.rel target = $region148
              $region147: #{decoder_attn_forward.1} parent=121 // pred_region
                _
              $region148: #{decoder_attn_forward.1} parent=121 // pred_fallthru
                _
            $region122: #{decoder_attn_forward.1} parent=117 // pred_fallthru
              _
            // Predicated region
            $region123: #{decoder_attn_forward.1} parent=117 // pred_check
              _
            $region124: #{decoder_attn_forward.1} parent=117 // pred_check_branch
              %604 = sbr.rel target = $region126
            $region125: #{decoder_attn_forward.1} parent=117 // pred_region
              %s606 = ssub.s32 256, 1
              loop: start=0, step=1, limit=1
              $region127: #{decoder_attn_forward.1} parent=125 // loop_pre_header
                _
              $region128: #{decoder_attn_forward.1} parent=125 // loop_header
                %s608 = sphi 0, %s612
                %p609 = scmp.ge.s32.totalorder %s608, 1
                %s613 = sphi %s598, %s598
                %s614 = sphi %s596, %s596
              $region129: #{decoder_attn_forward.1} parent=125 // loop_header_branch
                %611 = sbr.rel (%p609) target = $region133
              $region130: #{decoder_attn_forward.1} parent=125 // loop_body
                %v615 = vld [vmem:[%s613] sm:%s606]
                %616 = vst [vmem:[%s614] sm:%s606] %v615
                %v617 = vld [vmem:[%s613 + $0x10] sm:%s606]
                %618 = vst [vmem:[%s614 + $0x8] sm:%s606] %v617
                %v619 = vld [vmem:[%s613 + $0x20] sm:%s606]
                %620 = vst [vmem:[%s614 + $0x10] sm:%s606] %v619
                %v621 = vld [vmem:[%s613 + $0x30] sm:%s606]
                %622 = vst [vmem:[%s614 + $0x18] sm:%s606] %v621
              $region131: #{decoder_attn_forward.1} parent=125 // loop_footer
                %s612 = sadd.s32 1, %s608
              $region132: #{decoder_attn_forward.1} parent=125 // loop_footer_branch
                %607 = sbr.rel target = $region128
              $region133: #{decoder_attn_forward.1} parent=125 // loop_exit
                _
            $region126: #{decoder_attn_forward.1} parent=117 // pred_fallthru
              _
          $region118: #{decoder_attn_forward.1} parent=113 // pred_fallthru
            _
          %643 = vnop
        $region114: #{decoder_attn_forward.1} parent=71 // pred_fallthru
          _
        // Predicated region
        $region149: #{decoder_attn_forward.1} parent=71 // pred_check
          %p644 = pneg %p101
        $region150: #{decoder_attn_forward.1} parent=71 // pred_check_branch
          %646 = sbr.rel (%p644) target = $region152
        $region151: #{decoder_attn_forward.1} parent=71 // pred_region
          %s647 = sand.u32 %s91, 1
          %s648 = sand.u32 %s91, 1
          %s649 = smul.addr %s648, 32
          %s650 = scalar_lea.vmem [#allocation4], %s649
          %s651 = smul.addr %s29, 8
          %s652 = scalar_lea.vmem %s2, %s651
          // Predicated region
          $region153: #{decoder_attn_forward.1} parent=151 // pred_check
            _
          $region154: #{decoder_attn_forward.1} parent=151 // pred_check_branch
            %654 = sbr.rel (0) target = $region156
          $region155: #{decoder_attn_forward.1} parent=151 // pred_region
            // Predicated region
            $region157: #{decoder_attn_forward.1} parent=155 // pred_check
              _
            $region158: #{decoder_attn_forward.1} parent=155 // pred_check_branch
              %656 = sbr.rel (0) target = $region160
            $region159: #{decoder_attn_forward.1} parent=155 // pred_region
              // Predicated region
              $region172: #{decoder_attn_forward.1} parent=159 // pred_check
                _
              $region173: #{decoder_attn_forward.1} parent=159 // pred_check_branch
                %678 = sbr.rel (0) target = $region175
              $region174: #{decoder_attn_forward.1} parent=159 // pred_region
                loop: start=0, step=1, limit=1
                $region176: #{decoder_attn_forward.1} parent=174 // loop_pre_header
                  _
                $region177: #{decoder_attn_forward.1} parent=174 // loop_header
                  %s680 = sphi 0, %s684
                  %p681 = scmp.ge.s32.totalorder %s680, 1
                  %s685 = sphi %s652, %s652
                  %s686 = sphi %s650, %s650
                $region178: #{decoder_attn_forward.1} parent=174 // loop_header_branch
                  %683 = sbr.rel (%p681) target = $region182
                $region179: #{decoder_attn_forward.1} parent=174 // loop_body
                  %v687 = vld [vmem:[%s685] sm:$0xff]
                  %688 = vst [vmem:[%s686] sm:$0xff] %v687
                  %v689 = vld [vmem:[%s685 + $0x10] sm:$0xff]
                  %690 = vst [vmem:[%s686 + $0x8] sm:$0xff] %v689
                  %v691 = vld [vmem:[%s685 + $0x20] sm:$0xff]
                  %692 = vst [vmem:[%s686 + $0x10] sm:$0xff] %v691
                  %v693 = vld [vmem:[%s685 + $0x30] sm:$0xff]
                  %694 = vst [vmem:[%s686 + $0x18] sm:$0xff] %v693
                $region180: #{decoder_attn_forward.1} parent=174 // loop_footer
                  %s684 = sadd.s32 1, %s680
                $region181: #{decoder_attn_forward.1} parent=174 // loop_footer_branch
                  %679 = sbr.rel target = $region177
                $region182: #{decoder_attn_forward.1} parent=174 // loop_exit
                  _
              $region175: #{decoder_attn_forward.1} parent=159 // pred_fallthru
                _
              // Predicated region
              $region183: #{decoder_attn_forward.1} parent=159 // pred_check
                _
              $region184: #{decoder_attn_forward.1} parent=159 // pred_check_branch
                %696 = sbr.rel target = $region186
              $region185: #{decoder_attn_forward.1} parent=159 // pred_region
                _
              $region186: #{decoder_attn_forward.1} parent=159 // pred_fallthru
                _
            $region160: #{decoder_attn_forward.1} parent=155 // pred_fallthru
              _
            // Predicated region
            $region161: #{decoder_attn_forward.1} parent=155 // pred_check
              _
            $region162: #{decoder_attn_forward.1} parent=155 // pred_check_branch
              %658 = sbr.rel target = $region164
            $region163: #{decoder_attn_forward.1} parent=155 // pred_region
              %s660 = ssub.s32 256, 1
              loop: start=0, step=1, limit=1
              $region165: #{decoder_attn_forward.1} parent=163 // loop_pre_header
                _
              $region166: #{decoder_attn_forward.1} parent=163 // loop_header
                %s662 = sphi 0, %s666
                %p663 = scmp.ge.s32.totalorder %s662, 1
                %s667 = sphi %s652, %s652
                %s668 = sphi %s650, %s650
              $region167: #{decoder_attn_forward.1} parent=163 // loop_header_branch
                %665 = sbr.rel (%p663) target = $region171
              $region168: #{decoder_attn_forward.1} parent=163 // loop_body
                %v669 = vld [vmem:[%s667] sm:%s660]
                %670 = vst [vmem:[%s668] sm:%s660] %v669
                %v671 = vld [vmem:[%s667 + $0x10] sm:%s660]
                %672 = vst [vmem:[%s668 + $0x8] sm:%s660] %v671
                %v673 = vld [vmem:[%s667 + $0x20] sm:%s660]
                %674 = vst [vmem:[%s668 + $0x10] sm:%s660] %v673
                %v675 = vld [vmem:[%s667 + $0x30] sm:%s660]
                %676 = vst [vmem:[%s668 + $0x18] sm:%s660] %v675
              $region169: #{decoder_attn_forward.1} parent=163 // loop_footer
                %s666 = sadd.s32 1, %s662
              $region170: #{decoder_attn_forward.1} parent=163 // loop_footer_branch
                %661 = sbr.rel target = $region166
              $region171: #{decoder_attn_forward.1} parent=163 // loop_exit
                _
            $region164: #{decoder_attn_forward.1} parent=155 // pred_fallthru
              _
          $region156: #{decoder_attn_forward.1} parent=151 // pred_fallthru
            _
          %697 = vnop
        $region152: #{decoder_attn_forward.1} parent=71 // pred_fallthru
          _
        // Predicated region
        $region187: #{decoder_attn_forward.1} parent=71 // pred_check
          %p698 = pneg %p127
        $region188: #{decoder_attn_forward.1} parent=71 // pred_check_branch
          %700 = sbr.rel (%p698) target = $region190
        $region189: #{decoder_attn_forward.1} parent=71 // pred_region
          %s701 = smul.u32 8, %s29
          %p702 = scmp.lt.s32.totalorder %s701, 15
          %s703 = scalar_select %p702, %s701, 15
          %s704 = smul.addr %s703, 8
          %s705 = scalar_lea.vmem %s3, %s704
          %s706 = smul.u32 8, %s29
        $region190: #{decoder_attn_forward.1} parent=71 // pred_fallthru
          _
      $region72: #{decoder_attn_forward.1} parent=5 // pred_fallthru
        _
      %p707 = scmp.le.s32.totalorder 1, %s29
      %p708 = scmp.lt.s32.totalorder %s29, 3
      %p709 = pnand %p707, %p708
      %p710 = pneg %p709
      // Predicated region
      $region191: #{decoder_attn_forward.1} parent=5 // pred_check
        _
      $region192: #{decoder_attn_forward.1} parent=5 // pred_check_branch
        %712 = sbr.rel (%p709) target = $region194
      $region193: #{decoder_attn_forward.1} parent=5 // pred_region
        %s713 = ssub.s32 %s29, 1
        %s714 = sand.u32 %s42, 1
        %s715 = sand.u32 %s42, 1
        %s716 = smul.addr %s715, 24
        %s717 = scalar_lea.vmem [#allocation2], %s716
        // Predicated region
        $region195: #{decoder_attn_forward.1} parent=193 // pred_check
          %p718 = pneg %p55
        $region196: #{decoder_attn_forward.1} parent=193 // pred_check_branch
          %720 = sbr.rel (%p718) target = $region198
        $region197: #{decoder_attn_forward.1} parent=193 // pred_region
          _
        $region198: #{decoder_attn_forward.1} parent=193 // pred_fallthru
          _
        %s721 = sand.u32 %s68, 1
        %s722 = sand.u32 %s68, 1
        %s723 = smul.addr %s722, 32
        %s724 = scalar_lea.vmem [#allocation3], %s723
        // Predicated region
        $region199: #{decoder_attn_forward.1} parent=193 // pred_check
          %p725 = pneg %p81
        $region200: #{decoder_attn_forward.1} parent=193 // pred_check_branch
          %727 = sbr.rel (%p725) target = $region202
        $region201: #{decoder_attn_forward.1} parent=193 // pred_region
          _
        $region202: #{decoder_attn_forward.1} parent=193 // pred_fallthru
          _
        %s728 = sand.u32 %s94, 1
        %s729 = sand.u32 %s94, 1
        %s730 = smul.addr %s729, 32
        %s731 = scalar_lea.vmem [#allocation4], %s730
        // Predicated region
        $region203: #{decoder_attn_forward.1} parent=193 // pred_check
          %p732 = pneg %p107
        $region204: #{decoder_attn_forward.1} parent=193 // pred_check_branch
          %734 = sbr.rel (%p732) target = $region206
        $region205: #{decoder_attn_forward.1} parent=193 // pred_region
          _
        $region206: #{decoder_attn_forward.1} parent=193 // pred_fallthru
          _
        %s735 = sand.u32 %s42, 1
        %s736 = sand.u32 %s42, 1
        %s737 = smul.addr %s736, 24
        %s738 = scalar_lea.vmem [#allocation2], %s737
        %p739 = pneg %p55
        %p740 = pneg %p52
        %s741 = sand.u32 %s68, 1
        %s742 = sand.u32 %s68, 1
        %s743 = smul.addr %s742, 32
        %s744 = scalar_lea.vmem [#allocation3], %s743
        %p745 = pneg %p81
        %p746 = pneg %p78
        %s747 = sand.u32 %s94, 1
        %s748 = sand.u32 %s94, 1
        %s749 = smul.addr %s748, 32
        %s750 = scalar_lea.vmem [#allocation4], %s749
        %p751 = pneg %p107
        %p752 = pneg %p104
        %s753 = smul.u32 8, %s34
        %p754 = scmp.lt.s32.totalorder %s753, 15
        %s755 = scalar_select %p754, %s753, 15
        %s756 = smul.addr %s755, 8
        %s757 = scalar_lea.vmem %s3, %s756
        %p758 = pneg %p133
        %p759 = pneg %p130
        %p760 = pneg %p154
        %p761 = pneg %p151
        %p762 = pneg %p175
        %p763 = pneg %p172
        %p764 = pneg %p196
        %p765 = pneg %p193
        %p766 = pneg %p217
        %p767 = pneg %p214
        %p768 = pneg %p238
        %p769 = pneg %p235
        %p770 = pneg %p259
        %p771 = pneg %p256
        %p772 = pneg %p280
        %p773 = pneg %p277
        %p774 = pneg %p301
        %p775 = pneg %p298
        %p776 = pneg %p322
        %p777 = pneg %p319
        %p778 = pneg %p343
        %p779 = pneg %p340
        %p780 = pneg %p364
        %p781 = pneg %p361
        %p782 = pneg %p385
        %p783 = pneg %p382
        %p784 = pneg %p406
        %p785 = pneg %p403
        %p786 = pneg %p427
        %p787 = pneg %p424
        %p788 = pneg %p453
        %p789 = pneg %p450
        %s790 = sand.u32 %s440, 1
        %s791 = scalar_lea.sflag [#allocation6], %s790
        %s792 = sand.u32 %s440, 1
        %s793 = smul.addr %s792, 8
        %s794 = scalar_lea.vmem [#allocation5], %s793
        %p795 = pneg %p479
        %p796 = pneg %p476
        %p797 = scmp.lt.s32.totalorder %s34, 1
        %s798 = scalar_select %p797, %s34, 1
        %s799 = smul.addr %s798, 2
        %s800 = smul.addr %s799, 8
        %s801 = scalar_lea.vmem %s19, %s800
        %s802 = smul.u32 8, %s34
        %p803 = scmp.lt.s32.totalorder %s802, 15
        %s804 = scalar_select %p803, %s802, 15
        %s805 = smul.addr %s804, 8
        %s806 = scalar_lea.vmem %s3, %s805
        %s807 = smul.u32 8, %s34
        %p808 = scmp.lt.s32.totalorder %s34, 1
        %s809 = scalar_select %p808, %s34, 1
        %s810 = smul.addr %s809, 2
        %s811 = smul.addr %s810, 8
        %s812 = scalar_lea.vmem %s19, %s811
        %v814 = vld [vmem:[%s717] sm:$0xff]
        %v815 = vld [vmem:[%s717 + $0x8] sm:$0xff]
        %v816 = vld [vmem:[%s717 + $0x10] sm:$0xff]
        %v817 = vpack.c.bf16 %v815, %v814
        %v818 = vpack.c.bf16 %v816, %v816
        %v819 = vld [vmem:[%s4] sm:$0xff]
        %v820 = vld [vmem:[%s4 + $0x8] sm:$0xff]
        %v821 = vld [vmem:[%s4 + $0x10] sm:$0xff]
        %v822 = vld [vmem:[%s4 + $0x18] sm:$0xff]
        %v823 = vld [vmem:[%s6] sm:$0x3]
        %v825 = vperm.slane %v823, 0
        %v826 = vperm.slane %v823, 1
        %v833 = vunpack.c.l.b16 %v819
        %v834 = vunpack.c.h.b16 %v819
        %v835 = vunpack.c.l.b16 %v820
        %v836 = vunpack.c.h.b16 %v820
        %v837 = vunpack.c.l.b16 %v821
        %v838 = vunpack.c.h.b16 %v821
        %v839 = vunpack.c.l.b16 %v822
        %v840 = vunpack.c.h.b16 %v822
        %v841 = vpack.c.b16 %v835, %v833
        %v842 = vpack.c.b16 %v836, %v834
        %v843 = vpack.c.b16 %v839, %v837
        %v844 = vpack.c.b16 %v840, %v838
        %vm849 = vcmask 261120
        %v851 = vsel %vm849, %v817, 0
        %v854 = vsel %vm849, %v818, 0
        %856 = vmatpush.bf16.msra.mxu0 0
        %857 = vmatpush.bf16.msra.mxu0 0
        %858 = vmatpush.bf16.msra.mxu0 0
        %859 = vmatpush.bf16.msra.mxu0 0
        %860 = vmatpush.bf16.msra.mxu0 0
        %861 = vmatpush.bf16.msra.mxu0 0
        %862 = vmatpush.bf16.msra.mxu0 %v843
        %863 = vmatpush.bf16.msra.mxu0 %v841
        %864 = vmatmul.bf16.gmra.mxu0 %v851
        %v865 = vpop.f32.mrf.mxu0
        %v866 = vadd.f32 %v825, %v865
        %v867 = vpop.f32.mrf.mxu0
        %v868 = vadd.f32 %v825, %v867
        %869 = vmatmul.bf16.gmra.mxu0 %v854
        %v870 = vpop.f32.mrf.mxu0
        %v871 = vadd.f32 %v825, %v870
        %v872 = vpop.f32.mrf.mxu0
        %873 = vdwg.mxu0
        %874 = vmatpush.bf16.msra.mxu0 0
        %875 = vmatpush.bf16.msra.mxu0 0
        %876 = vmatpush.bf16.msra.mxu0 0
        %877 = vmatpush.bf16.msra.mxu0 0
        %878 = vmatpush.bf16.msra.mxu0 0
        %879 = vmatpush.bf16.msra.mxu0 0
        %880 = vmatpush.bf16.msra.mxu0 %v844
        %881 = vmatpush.bf16.msra.mxu0 %v842
        %882 = vmatmul.bf16.gmra.mxu0 %v851
        %v883 = vpop.f32.mrf.mxu0
        %v884 = vadd.f32 %v826, %v883
        %v885 = vpop.f32.mrf.mxu0
        %v886 = vadd.f32 %v826, %v885
        %887 = vmatmul.bf16.gmra.mxu0 %v854
        %v888 = vpop.f32.mrf.mxu0
        %v889 = vadd.f32 %v826, %v888
        %v890 = vpop.f32.mrf.mxu0
        %891 = vdwg.mxu0
        %v892 = vld [vmem:[%s5] sm:$0xff]
        %v893 = vld [vmem:[%s5 + $0x8] sm:$0xff]
        %v894 = vld [vmem:[%s5 + $0x10] sm:$0xff]
        %v895 = vld [vmem:[%s5 + $0x18] sm:$0xff]
        %v896 = vld [vmem:[%s5 + $0x20] sm:$0xff]
        %v897 = vld [vmem:[%s5 + $0x28] sm:$0xff]
        %v898 = vld [vmem:[%s5 + $0x30] sm:$0xff]
        %v899 = vld [vmem:[%s5 + $0x38] sm:$0xff]
        %v900 = vld [vmem:[%s724] sm:$0xff]
        %v901 = vld [vmem:[%s731] sm:$0xff]
        %s902 = scalar_lea.vmem %s724, 8 [#allocation3]
        %v903 = vld [vmem:[%s902] sm:$0xff]
        %s904 = scalar_lea.vmem %s731, 8 [#allocation4]
        %v905 = vld [vmem:[%s904] sm:$0xff]
        %907 = vrot.lane.b32.xlu0 %v903, 32
        %v908 = vpop.permute.xlu0 %907
        %v910 = vsel %vm849, %v900, %v908
        %v911 = vpack.c.bf16 %v910, %v910
        %v920 = vunpack.c.l.b16 %v892
        %v921 = vunpack.c.h.b16 %v892
        %v922 = vunpack.c.l.b16 %v893
        %v923 = vunpack.c.h.b16 %v893
        %v924 = vunpack.c.l.b16 %v894
        %v925 = vunpack.c.h.b16 %v894
        %v926 = vunpack.c.l.b16 %v895
        %v927 = vunpack.c.h.b16 %v895
        %v928 = vunpack.c.l.b16 %v896
        %v929 = vunpack.c.h.b16 %v896
        %v930 = vunpack.c.l.b16 %v897
        %v931 = vunpack.c.h.b16 %v897
        %v932 = vunpack.c.l.b16 %v898
        %v933 = vunpack.c.h.b16 %v898
        %v934 = vunpack.c.l.b16 %v899
        %v935 = vunpack.c.h.b16 %v899
        %v936 = vpack.c.b16 %v922, %v920
        %v937 = vpack.c.b16 %v923, %v921
        %v938 = vpack.c.b16 %v926, %v924
        %v939 = vpack.c.b16 %v927, %v925
        %v940 = vpack.c.b16 %v930, %v928
        %v941 = vpack.c.b16 %v931, %v929
        %v942 = vpack.c.b16 %v934, %v932
        %v943 = vpack.c.b16 %v935, %v933
        %vm952 = vcmask 523264
        %v954 = vsel %vm952, %v911, 0
        %956 = vmatpush.bf16.msra.mxu0 0
        %957 = vmatpush.bf16.msra.mxu0 0
        %958 = vmatpush.bf16.msra.mxu0 0
        %959 = vmatpush.bf16.msra.mxu0 0
        %960 = vmatpush.bf16.msra.mxu0 %v942
        %961 = vmatpush.bf16.msra.mxu0 %v940
        %962 = vmatpush.bf16.msra.mxu0 %v938
        %963 = vmatpush.bf16.msra.mxu0 %v936
        %964 = vmatmul.bf16.gmra.mxu0 %v954
        %v965 = vpop.f32.mrf.mxu0
        %v966 = vadd.f32 0.0, %v965
        %v967 = vpop.f32.mrf.mxu0
        %968 = vdwg.mxu0
        %969 = vmatpush.bf16.msra.mxu0 0
        %970 = vmatpush.bf16.msra.mxu0 0
        %971 = vmatpush.bf16.msra.mxu0 0
        %972 = vmatpush.bf16.msra.mxu0 0
        %973 = vmatpush.bf16.msra.mxu0 %v943
        %974 = vmatpush.bf16.msra.mxu0 %v941
        %975 = vmatpush.bf16.msra.mxu0 %v939
        %976 = vmatpush.bf16.msra.mxu0 %v937
        %977 = vmatmul.bf16.gmra.mxu0 %v954
        %v978 = vpop.f32.mrf.mxu0
        %v979 = vadd.f32 0.0, %v978
        %v980 = vpop.f32.mrf.mxu0
        %981 = vdwg.mxu0
        %v982 = vadd.f32 %v866, %v966
        %v983 = vadd.f32 %v889, %v979
        %v984 = vmul.f32 %v982, 0.5
        %v985 = vtanh.pop %v984
        %v986 = vadd.f32 %v985, 1.0
        %v987 = vmul.f32 %v986, 0.5
        %v988 = vtanh.pop %v982
        %990 = vrot.lane.b32.xlu0 %v901, 32
        %v991 = vpop.permute.xlu0 %990
        %v993 = vmul.f32 %v987, %v991
        %995 = vrot.lane.b32.xlu0 %v988, 64
        %v996 = vpop.permute.xlu0 %995
        %v998 = vmul.f32 %v987, %v996
        %1000 = vrot.lane.b32.xlu0 %v998, 32
        %v1001 = vpop.permute.xlu0 %1000
        %v1003 = vadd.f32 %v993, %v1001
        %v1004 = vtanh.pop %v1003
        %1006 = vrot.lane.b32.xlu0 %v1004, 64
        %v1007 = vpop.permute.xlu0 %1006
        %v1009 = vmul.f32 %v987, %v1007
        %v1010 = vmul.f32 %v983, 0.5
        %v1011 = vtanh.pop %v1010
        %v1012 = vadd.f32 %v1011, 1.0
        %v1013 = vmul.f32 %v1012, 0.5
        %v1014 = vtanh.pop %v983
        %1016 = vrot.lane.b32.xlu0 %v905, 32
        %v1017 = vpop.permute.xlu0 %1016
        %v1019 = vmul.f32 %v1013, %v1017
        %1021 = vrot.lane.b32.xlu0 %v1014, 64
        %v1022 = vpop.permute.xlu0 %1021
        %v1024 = vmul.f32 %v1013, %v1022
        %1026 = vrot.lane.b32.xlu0 %v1024, 32
        %v1027 = vpop.permute.xlu0 %1026
        %v1029 = vadd.f32 %v1019, %v1027
        %v1030 = vtanh.pop %v1029
        %1032 = vrot.lane.b32.xlu0 %v1030, 64
        %v1033 = vpop.permute.xlu0 %1032
        %v1035 = vmul.f32 %v1013, %v1033
        %1037 = vrot.lane.b32.xlu0 %v1009, 32
        %v1038 = vpop.permute.xlu0 %1037
        %1041 = vrot.lane.b32.xlu0 %v1035, 64
        %v1042 = vpop.permute.xlu0 %1041
        %v1044 = vsel %vm849, %v1038, %v1042
        %v1045 = vpack.c.bf16 %v1044, %v1044
        %v1047 = vsel %vm952, %v1045, 0
        %1049 = vmatpush.bf16.msra.mxu0 0
        %1050 = vmatpush.bf16.msra.mxu0 0
        %1051 = vmatpush.bf16.msra.mxu0 0
        %1052 = vmatpush.bf16.msra.mxu0 0
        %1053 = vmatpush.bf16.msra.mxu0 %v942
        %1054 = vmatpush.bf16.msra.mxu0 %v940
        %1055 = vmatpush.bf16.msra.mxu0 %v938
        %1056 = vmatpush.bf16.msra.mxu0 %v936
        %1057 = vmatmul.bf16.gmra.mxu0 %v1047
        %v1058 = vpop.f32.mrf.mxu0
        %v1059 = vadd.f32 0.0, %v1058
        %v1060 = vpop.f32.mrf.mxu0
        %1061 = vdwg.mxu0
        %1062 = vmatpush.bf16.msra.mxu0 0
        %1063 = vmatpush.bf16.msra.mxu0 0
        %1064 = vmatpush.bf16.msra.mxu0 0
        %1065 = vmatpush.bf16.msra.mxu0 0
        %1066 = vmatpush.bf16.msra.mxu0 %v943
        %1067 = vmatpush.bf16.msra.mxu0 %v941
        %1068 = vmatpush.bf16.msra.mxu0 %v939
        %1069 = vmatpush.bf16.msra.mxu0 %v937
        %1070 = vmatmul.bf16.gmra.mxu0 %v1047
        %v1071 = vpop.f32.mrf.mxu0
        %v1072 = vadd.f32 0.0, %v1071
        %v1073 = vpop.f32.mrf.mxu0
        %1074 = vdwg.mxu0
        %v1075 = vadd.f32 %v868, %v1059
        %v1076 = vadd.f32 %v886, %v1072
        %v1077 = vmul.f32 %v1075, 0.5
        %v1078 = vtanh.pop %v1077
        %v1079 = vadd.f32 %v1078, 1.0
        %v1080 = vmul.f32 %v1079, 0.5
        %v1081 = vtanh.pop %v1075
        %v1082 = vmul.f32 %v1080, %v1003
        %1084 = vrot.lane.b32.xlu0 %v1081, 64
        %v1085 = vpop.permute.xlu0 %1084
        %v1087 = vmul.f32 %v1080, %v1085
        %1089 = vrot.lane.b32.xlu0 %v1087, 32
        %v1090 = vpop.permute.xlu0 %1089
        %v1092 = vadd.f32 %v1082, %v1090
        %v1093 = vtanh.pop %v1092
        %1095 = vrot.lane.b32.xlu0 %v1093, 64
        %v1096 = vpop.permute.xlu0 %1095
        %v1098 = vmul.f32 %v1080, %v1096
        %v1099 = vmul.f32 %v1076, 0.5
        %v1100 = vtanh.pop %v1099
        %v1101 = vadd.f32 %v1100, 1.0
        %v1102 = vmul.f32 %v1101, 0.5
        %v1103 = vtanh.pop %v1076
        %v1104 = vmul.f32 %v1102, %v1029
        %1106 = vrot.lane.b32.xlu0 %v1103, 64
        %v1107 = vpop.permute.xlu0 %1106
        %v1109 = vmul.f32 %v1102, %v1107
        %1111 = vrot.lane.b32.xlu0 %v1109, 32
        %v1112 = vpop.permute.xlu0 %1111
        %v1114 = vadd.f32 %v1104, %v1112
        %v1115 = vtanh.pop %v1114
        %1117 = vrot.lane.b32.xlu0 %v1115, 64
        %v1118 = vpop.permute.xlu0 %1117
        %v1120 = vmul.f32 %v1102, %v1118
        %1122 = vrot.lane.b32.xlu0 %v1098, 32
        %v1123 = vpop.permute.xlu0 %1122
        %1126 = vrot.lane.b32.xlu0 %v1120, 64
        %v1127 = vpop.permute.xlu0 %1126
        %v1129 = vsel %vm849, %v1123, %v1127
        %v1130 = vpack.c.bf16 %v1129, %v1129
        %v1132 = vsel %vm952, %v1130, 0
        %1134 = vmatpush.bf16.msra.mxu0 0
        %1135 = vmatpush.bf16.msra.mxu0 0
        %1136 = vmatpush.bf16.msra.mxu0 0
        %1137 = vmatpush.bf16.msra.mxu0 0
        %1138 = vmatpush.bf16.msra.mxu0 %v942
        %1139 = vmatpush.bf16.msra.mxu0 %v940
        %1140 = vmatpush.bf16.msra.mxu0 %v938
        %1141 = vmatpush.bf16.msra.mxu0 %v936
        %1142 = vmatmul.bf16.gmra.mxu0 %v1132
        %v1143 = vpop.f32.mrf.mxu0
        %v1144 = vadd.f32 0.0, %v1143
        %v1145 = vpop.f32.mrf.mxu0
        %1146 = vdwg.mxu0
        %1147 = vmatpush.bf16.msra.mxu0 0
        %1148 = vmatpush.bf16.msra.mxu0 0
        %1149 = vmatpush.bf16.msra.mxu0 0
        %1150 = vmatpush.bf16.msra.mxu0 0
        %1151 = vmatpush.bf16.msra.mxu0 %v943
        %1152 = vmatpush.bf16.msra.mxu0 %v941
        %1153 = vmatpush.bf16.msra.mxu0 %v939
        %1154 = vmatpush.bf16.msra.mxu0 %v937
        %1155 = vmatmul.bf16.gmra.mxu0 %v1132
        %v1156 = vpop.f32.mrf.mxu0
        %v1157 = vadd.f32 0.0, %v1156
        %v1158 = vpop.f32.mrf.mxu0
        %1159 = vdwg.mxu0
        %v1160 = vadd.f32 %v871, %v1144
        %v1161 = vadd.f32 %v884, %v1157
        %v1162 = vmul.f32 %v1160, 0.5
        %v1163 = vtanh.pop %v1162
        %v1164 = vadd.f32 %v1163, 1.0
        %v1165 = vmul.f32 %v1164, 0.5
        %v1166 = vtanh.pop %v1160
        %v1167 = vmul.f32 %v1165, %v1092
        %1169 = vrot.lane.b32.xlu0 %v1166, 64
        %v1170 = vpop.permute.xlu0 %1169
        %v1172 = vmul.f32 %v1165, %v1170
        %1174 = vrot.lane.b32.xlu0 %v1172, 32
        %v1175 = vpop.permute.xlu0 %1174
        %v1177 = vadd.f32 %v1167, %v1175
        %v1178 = vtanh.pop %v1177
        %1180 = vrot.lane.b32.xlu0 %v1178, 64
        %v1181 = vpop.permute.xlu0 %1180
        %v1183 = vmul.f32 %v1165, %v1181
        %v1184 = vmul.f32 %v1161, 0.5
        %v1185 = vtanh.pop %v1184
        %v1186 = vadd.f32 %v1185, 1.0
        %v1187 = vmul.f32 %v1186, 0.5
        %v1188 = vtanh.pop %v1161
        %v1189 = vmul.f32 %v1187, %v1114
        %1191 = vrot.lane.b32.xlu0 %v1188, 64
        %v1192 = vpop.permute.xlu0 %1191
        %v1194 = vmul.f32 %v1187, %v1192
        %1196 = vrot.lane.b32.xlu0 %v1194, 32
        %v1197 = vpop.permute.xlu0 %1196
        %v1199 = vadd.f32 %v1189, %v1197
        %v1200 = vtanh.pop %v1199
        %1202 = vrot.lane.b32.xlu0 %v1200, 64
        %v1203 = vpop.permute.xlu0 %1202
        %v1205 = vmul.f32 %v1187, %v1203
        %1207 = vrot.lane.b32.xlu0 %v1205, 64
        %v1208 = vpop.permute.xlu0 %1207
        %v1210 = vsel %vm849, %v1038, %v1208
        %1212 = vrot.lane.b32.xlu0 %v1183, 32
        %v1213 = vpop.permute.xlu0 %1212
        %v1215 = vsel %vm849, %v1213, %v1042
        %v1216 = vpack.c.bf16 %v1129, %v1210
        %v1217 = vpack.c.bf16 %v1215, %v1215
        %v1218 = vld [vmem:[%s7] sm:$0xff]
        %v1219 = vld [vmem:[%s7 + $0x8] sm:$0xff]
        %v1220 = vld [vmem:[%s7 + $0x10] sm:$0xff]
        %v1221 = vld [vmem:[%s7 + $0x18] sm:$0xff]
        %v1222 = vld [vmem:[%s7 + $0x20] sm:$0xff]
        %v1223 = vld [vmem:[%s7 + $0x28] sm:$0xff]
        %v1224 = vld [vmem:[%s7 + $0x30] sm:$0xff]
        %v1225 = vld [vmem:[%s7 + $0x38] sm:$0xff]
        %v1226 = vld [vmem:[%s9] sm:$0x3]
        %v1228 = vperm.slane %v1226, 0
        %v1229 = vperm.slane %v1226, 1
        %v1240 = vunpack.c.l.b16 %v1218
        %v1241 = vunpack.c.h.b16 %v1218
        %v1242 = vunpack.c.l.b16 %v1219
        %v1243 = vunpack.c.h.b16 %v1219
        %v1244 = vunpack.c.l.b16 %v1220
        %v1245 = vunpack.c.h.b16 %v1220
        %v1246 = vunpack.c.l.b16 %v1221
        %v1247 = vunpack.c.h.b16 %v1221
        %v1248 = vunpack.c.l.b16 %v1222
        %v1249 = vunpack.c.h.b16 %v1222
        %v1250 = vunpack.c.l.b16 %v1223
        %v1251 = vunpack.c.h.b16 %v1223
        %v1252 = vunpack.c.l.b16 %v1224
        %v1253 = vunpack.c.h.b16 %v1224
        %v1254 = vunpack.c.l.b16 %v1225
        %v1255 = vunpack.c.h.b16 %v1225
        %v1256 = vpack.c.b16 %v1242, %v1240
        %v1257 = vpack.c.b16 %v1243, %v1241
        %v1258 = vpack.c.b16 %v1246, %v1244
        %v1259 = vpack.c.b16 %v1247, %v1245
        %v1260 = vpack.c.b16 %v1250, %v1248
        %v1261 = vpack.c.b16 %v1251, %v1249
        %v1262 = vpack.c.b16 %v1254, %v1252
        %v1263 = vpack.c.b16 %v1255, %v1253
        %v1273 = vsel %vm952, %v1216, 0
        %v1276 = vsel %vm952, %v1217, 0
        %1278 = vmatpush.bf16.msra.mxu0 0
        %1279 = vmatpush.bf16.msra.mxu0 0
        %1280 = vmatpush.bf16.msra.mxu0 0
        %1281 = vmatpush.bf16.msra.mxu0 0
        %1282 = vmatpush.bf16.msra.mxu0 %v1262
        %1283 = vmatpush.bf16.msra.mxu0 %v1260
        %1284 = vmatpush.bf16.msra.mxu0 %v1258
        %1285 = vmatpush.bf16.msra.mxu0 %v1256
        %1286 = vmatmul.bf16.gmra.mxu0 %v1273
        %v1287 = vpop.f32.mrf.mxu0
        %v1288 = vadd.f32 %v1228, %v1287
        %v1289 = vpop.f32.mrf.mxu0
        %v1290 = vadd.f32 %v1228, %v1289
        %1291 = vmatmul.bf16.gmra.mxu0 %v1276
        %v1292 = vpop.f32.mrf.mxu0
        %v1293 = vadd.f32 %v1228, %v1292
        %v1294 = vpop.f32.mrf.mxu0
        %1295 = vdwg.mxu0
        %1296 = vmatpush.bf16.msra.mxu0 0
        %1297 = vmatpush.bf16.msra.mxu0 0
        %1298 = vmatpush.bf16.msra.mxu0 0
        %1299 = vmatpush.bf16.msra.mxu0 0
        %1300 = vmatpush.bf16.msra.mxu0 %v1263
        %1301 = vmatpush.bf16.msra.mxu0 %v1261
        %1302 = vmatpush.bf16.msra.mxu0 %v1259
        %1303 = vmatpush.bf16.msra.mxu0 %v1257
        %1304 = vmatmul.bf16.gmra.mxu0 %v1273
        %v1305 = vpop.f32.mrf.mxu0
        %v1306 = vadd.f32 %v1229, %v1305
        %v1307 = vpop.f32.mrf.mxu0
        %v1308 = vadd.f32 %v1229, %v1307
        %1309 = vmatmul.bf16.gmra.mxu0 %v1276
        %v1310 = vpop.f32.mrf.mxu0
        %v1311 = vadd.f32 %v1229, %v1310
        %v1312 = vpop.f32.mrf.mxu0
        %1313 = vdwg.mxu0
        %v1314 = vld [vmem:[%s8] sm:$0xff]
        %v1315 = vld [vmem:[%s8 + $0x8] sm:$0xff]
        %v1316 = vld [vmem:[%s8 + $0x10] sm:$0xff]
        %v1317 = vld [vmem:[%s8 + $0x18] sm:$0xff]
        %v1318 = vld [vmem:[%s8 + $0x20] sm:$0xff]
        %v1319 = vld [vmem:[%s8 + $0x28] sm:$0xff]
        %v1320 = vld [vmem:[%s8 + $0x30] sm:$0xff]
        %v1321 = vld [vmem:[%s8 + $0x38] sm:$0xff]
        %s1322 = scalar_lea.vmem %s724, 16 [#allocation3]
        %v1323 = vld [vmem:[%s1322] sm:$0xff]
        %s1324 = scalar_lea.vmem %s731, 16 [#allocation4]
        %v1325 = vld [vmem:[%s1324] sm:$0xff]
        %s1326 = scalar_lea.vmem %s724, 24 [#allocation3]
        %v1327 = vld [vmem:[%s1326] sm:$0xff]
        %s1328 = scalar_lea.vmem %s731, 24 [#allocation4]
        %v1329 = vld [vmem:[%s1328] sm:$0xff]
        %1331 = vrot.lane.b32.xlu0 %v1327, 32
        %v1332 = vpop.permute.xlu0 %1331
        %v1334 = vsel %vm849, %v1323, %v1332
        %v1335 = vpack.c.bf16 %v1334, %v1334
        %v1344 = vunpack.c.l.b16 %v1314
        %v1345 = vunpack.c.h.b16 %v1314
        %v1346 = vunpack.c.l.b16 %v1315
        %v1347 = vunpack.c.h.b16 %v1315
        %v1348 = vunpack.c.l.b16 %v1316
        %v1349 = vunpack.c.h.b16 %v1316
        %v1350 = vunpack.c.l.b16 %v1317
        %v1351 = vunpack.c.h.b16 %v1317
        %v1352 = vunpack.c.l.b16 %v1318
        %v1353 = vunpack.c.h.b16 %v1318
        %v1354 = vunpack.c.l.b16 %v1319
        %v1355 = vunpack.c.h.b16 %v1319
        %v1356 = vunpack.c.l.b16 %v1320
        %v1357 = vunpack.c.h.b16 %v1320
        %v1358 = vunpack.c.l.b16 %v1321
        %v1359 = vunpack.c.h.b16 %v1321
        %v1360 = vpack.c.b16 %v1346, %v1344
        %v1361 = vpack.c.b16 %v1347, %v1345
        %v1362 = vpack.c.b16 %v1350, %v1348
        %v1363 = vpack.c.b16 %v1351, %v1349
        %v1364 = vpack.c.b16 %v1354, %v1352
        %v1365 = vpack.c.b16 %v1355, %v1353
        %v1366 = vpack.c.b16 %v1358, %v1356
        %v1367 = vpack.c.b16 %v1359, %v1357
        %v1377 = vsel %vm952, %v1335, 0
        %1379 = vmatpush.bf16.msra.mxu0 0
        %1380 = vmatpush.bf16.msra.mxu0 0
        %1381 = vmatpush.bf16.msra.mxu0 0
        %1382 = vmatpush.bf16.msra.mxu0 0
        %1383 = vmatpush.bf16.msra.mxu0 %v1366
        %1384 = vmatpush.bf16.msra.mxu0 %v1364
        %1385 = vmatpush.bf16.msra.mxu0 %v1362
        %1386 = vmatpush.bf16.msra.mxu0 %v1360
        %1387 = vmatmul.bf16.gmra.mxu0 %v1377
        %v1388 = vpop.f32.mrf.mxu0
        %v1389 = vadd.f32 0.0, %v1388
        %v1390 = vpop.f32.mrf.mxu0
        %1391 = vdwg.mxu0
        %1392 = vmatpush.bf16.msra.mxu0 0
        %1393 = vmatpush.bf16.msra.mxu0 0
        %1394 = vmatpush.bf16.msra.mxu0 0
        %1395 = vmatpush.bf16.msra.mxu0 0
        %1396 = vmatpush.bf16.msra.mxu0 %v1367
        %1397 = vmatpush.bf16.msra.mxu0 %v1365
        %1398 = vmatpush.bf16.msra.mxu0 %v1363
        %1399 = vmatpush.bf16.msra.mxu0 %v1361
        %1400 = vmatmul.bf16.gmra.mxu0 %v1377
        %v1401 = vpop.f32.mrf.mxu0
        %v1402 = vadd.f32 0.0, %v1401
        %v1403 = vpop.f32.mrf.mxu0
        %1404 = vdwg.mxu0
        %v1405 = vadd.f32 %v1288, %v1389
        %v1406 = vadd.f32 %v1311, %v1402
        %v1407 = vmul.f32 %v1405, 0.5
        %v1408 = vtanh.pop %v1407
        %v1409 = vadd.f32 %v1408, 1.0
        %v1410 = vmul.f32 %v1409, 0.5
        %v1411 = vtanh.pop %v1405
        %1413 = vrot.lane.b32.xlu0 %v1325, 32
        %v1414 = vpop.permute.xlu0 %1413
        %v1416 = vmul.f32 %v1410, %v1414
        %1418 = vrot.lane.b32.xlu0 %v1411, 64
        %v1419 = vpop.permute.xlu0 %1418
        %v1421 = vmul.f32 %v1410, %v1419
        %1423 = vrot.lane.b32.xlu0 %v1421, 32
        %v1424 = vpop.permute.xlu0 %1423
        %v1426 = vadd.f32 %v1416, %v1424
        %v1427 = vtanh.pop %v1426
        %1429 = vrot.lane.b32.xlu0 %v1427, 64
        %v1430 = vpop.permute.xlu0 %1429
        %v1432 = vmul.f32 %v1410, %v1430
        %v1433 = vmul.f32 %v1406, 0.5
        %v1434 = vtanh.pop %v1433
        %v1435 = vadd.f32 %v1434, 1.0
        %v1436 = vmul.f32 %v1435, 0.5
        %v1437 = vtanh.pop %v1406
        %1439 = vrot.lane.b32.xlu0 %v1329, 32
        %v1440 = vpop.permute.xlu0 %1439
        %v1442 = vmul.f32 %v1436, %v1440
        %1444 = vrot.lane.b32.xlu0 %v1437, 64
        %v1445 = vpop.permute.xlu0 %1444
        %v1447 = vmul.f32 %v1436, %v1445
        %1449 = vrot.lane.b32.xlu0 %v1447, 32
        %v1450 = vpop.permute.xlu0 %1449
        %v1452 = vadd.f32 %v1442, %v1450
        %v1453 = vtanh.pop %v1452
        %1455 = vrot.lane.b32.xlu0 %v1453, 64
        %v1456 = vpop.permute.xlu0 %1455
        %v1458 = vmul.f32 %v1436, %v1456
        %1460 = vrot.lane.b32.xlu0 %v1432, 32
        %v1461 = vpop.permute.xlu0 %1460
        %1464 = vrot.lane.b32.xlu0 %v1458, 64
        %v1465 = vpop.permute.xlu0 %1464
        %v1467 = vsel %vm849, %v1461, %v1465
        %v1468 = vpack.c.bf16 %v1467, %v1467
        %v1470 = vsel %vm952, %v1468, 0
        %1472 = vmatpush.bf16.msra.mxu0 0
        %1473 = vmatpush.bf16.msra.mxu0 0
        %1474 = vmatpush.bf16.msra.mxu0 0
        %1475 = vmatpush.bf16.msra.mxu0 0
        %1476 = vmatpush.bf16.msra.mxu0 %v1366
        %1477 = vmatpush.bf16.msra.mxu0 %v1364
        %1478 = vmatpush.bf16.msra.mxu0 %v1362
        %1479 = vmatpush.bf16.msra.mxu0 %v1360
        %1480 = vmatmul.bf16.gmra.mxu0 %v1470
        %v1481 = vpop.f32.mrf.mxu0
        %v1482 = vadd.f32 0.0, %v1481
        %v1483 = vpop.f32.mrf.mxu0
        %1484 = vdwg.mxu0
        %1485 = vmatpush.bf16.msra.mxu0 0
        %1486 = vmatpush.bf16.msra.mxu0 0
        %1487 = vmatpush.bf16.msra.mxu0 0
        %1488 = vmatpush.bf16.msra.mxu0 0
        %1489 = vmatpush.bf16.msra.mxu0 %v1367
        %1490 = vmatpush.bf16.msra.mxu0 %v1365
        %1491 = vmatpush.bf16.msra.mxu0 %v1363
        %1492 = vmatpush.bf16.msra.mxu0 %v1361
        %1493 = vmatmul.bf16.gmra.mxu0 %v1470
        %v1494 = vpop.f32.mrf.mxu0
        %v1495 = vadd.f32 0.0, %v1494
        %v1496 = vpop.f32.mrf.mxu0
        %1497 = vdwg.mxu0
        %v1498 = vadd.f32 %v1290, %v1482
        %v1499 = vadd.f32 %v1308, %v1495
        %v1500 = vmul.f32 %v1498, 0.5
        %v1501 = vtanh.pop %v1500
        %v1502 = vadd.f32 %v1501, 1.0
        %v1503 = vmul.f32 %v1502, 0.5
        %v1504 = vtanh.pop %v1498
        %v1505 = vmul.f32 %v1503, %v1426
        %1507 = vrot.lane.b32.xlu0 %v1504, 64
        %v1508 = vpop.permute.xlu0 %1507
        %v1510 = vmul.f32 %v1503, %v1508
        %1512 = vrot.lane.b32.xlu0 %v1510, 32
        %v1513 = vpop.permute.xlu0 %1512
        %v1515 = vadd.f32 %v1505, %v1513
        %v1516 = vtanh.pop %v1515
        %1518 = vrot.lane.b32.xlu0 %v1516, 64
        %v1519 = vpop.permute.xlu0 %1518
        %v1521 = vmul.f32 %v1503, %v1519
        %v1522 = vmul.f32 %v1499, 0.5
        %v1523 = vtanh.pop %v1522
        %v1524 = vadd.f32 %v1523, 1.0
        %v1525 = vmul.f32 %v1524, 0.5
        %v1526 = vtanh.pop %v1499
        %v1527 = vmul.f32 %v1525, %v1452
        %1529 = vrot.lane.b32.xlu0 %v1526, 64
        %v1530 = vpop.permute.xlu0 %1529
        %v1532 = vmul.f32 %v1525, %v1530
        %1534 = vrot.lane.b32.xlu0 %v1532, 32
        %v1535 = vpop.permute.xlu0 %1534
        %v1537 = vadd.f32 %v1527, %v1535
        %v1538 = vtanh.pop %v1537
        %1540 = vrot.lane.b32.xlu0 %v1538, 64
        %v1541 = vpop.permute.xlu0 %1540
        %v1543 = vmul.f32 %v1525, %v1541
        %1545 = vrot.lane.b32.xlu0 %v1521, 32
        %v1546 = vpop.permute.xlu0 %1545
        %1549 = vrot.lane.b32.xlu0 %v1543, 64
        %v1550 = vpop.permute.xlu0 %1549
        %v1552 = vsel %vm849, %v1546, %v1550
        %v1553 = vpack.c.bf16 %v1552, %v1552
        %v1555 = vsel %vm952, %v1553, 0
        %1557 = vmatpush.bf16.msra.mxu0 0
        %1558 = vmatpush.bf16.msra.mxu0 0
        %1559 = vmatpush.bf16.msra.mxu0 0
        %1560 = vmatpush.bf16.msra.mxu0 0
        %1561 = vmatpush.bf16.msra.mxu0 %v1366
        %1562 = vmatpush.bf16.msra.mxu0 %v1364
        %1563 = vmatpush.bf16.msra.mxu0 %v1362
        %1564 = vmatpush.bf16.msra.mxu0 %v1360
        %1565 = vmatmul.bf16.gmra.mxu0 %v1555
        %v1566 = vpop.f32.mrf.mxu0
        %v1567 = vadd.f32 0.0, %v1566
        %v1568 = vpop.f32.mrf.mxu0
        %1569 = vdwg.mxu0
        %1570 = vmatpush.bf16.msra.mxu0 0
        %1571 = vmatpush.bf16.msra.mxu0 0
        %1572 = vmatpush.bf16.msra.mxu0 0
        %1573 = vmatpush.bf16.msra.mxu0 0
        %1574 = vmatpush.bf16.msra.mxu0 %v1367
        %1575 = vmatpush.bf16.msra.mxu0 %v1365
        %1576 = vmatpush.bf16.msra.mxu0 %v1363
        %1577 = vmatpush.bf16.msra.mxu0 %v1361
        %1578 = vmatmul.bf16.gmra.mxu0 %v1555
        %v1579 = vpop.f32.mrf.mxu0
        %v1580 = vadd.f32 0.0, %v1579
        %v1581 = vpop.f32.mrf.mxu0
        %1582 = vdwg.mxu0
        %v1583 = vadd.f32 %v1293, %v1567
        %v1584 = vadd.f32 %v1306, %v1580
        %v1585 = vmul.f32 %v1583, 0.5
        %v1586 = vtanh.pop %v1585
        %v1587 = vadd.f32 %v1586, 1.0
        %v1588 = vmul.f32 %v1587, 0.5
        %v1589 = vtanh.pop %v1583
        %v1590 = vmul.f32 %v1588, %v1515
        %1592 = vrot.lane.b32.xlu0 %v1589, 64
        %v1593 = vpop.permute.xlu0 %1592
        %v1595 = vmul.f32 %v1588, %v1593
        %1597 = vrot.lane.b32.xlu0 %v1595, 32
        %v1598 = vpop.permute.xlu0 %1597
        %v1600 = vadd.f32 %v1590, %v1598
        %v1601 = vtanh.pop %v1600
        %1603 = vrot.lane.b32.xlu0 %v1601, 64
        %v1604 = vpop.permute.xlu0 %1603
        %v1606 = vmul.f32 %v1588, %v1604
        %v1607 = vmul.f32 %v1584, 0.5
        %v1608 = vtanh.pop %v1607
        %v1609 = vadd.f32 %v1608, 1.0
        %v1610 = vmul.f32 %v1609, 0.5
        %v1611 = vtanh.pop %v1584
        %v1612 = vmul.f32 %v1610, %v1537
        %1614 = vrot.lane.b32.xlu0 %v1611, 64
        %v1615 = vpop.permute.xlu0 %1614
        %v1617 = vmul.f32 %v1610, %v1615
        %1619 = vrot.lane.b32.xlu0 %v1617, 32
        %v1620 = vpop.permute.xlu0 %1619
        %v1622 = vadd.f32 %v1612, %v1620
        %v1623 = vtanh.pop %v1622
        %1625 = vrot.lane.b32.xlu0 %v1623, 64
        %v1626 = vpop.permute.xlu0 %1625
        %v1628 = vmul.f32 %v1610, %v1626
        %v1629 = vld [vmem:[%s806] sm:$0xff]
        %v1630 = vld [vmem:[%s806 + $0x8] sm:$0xff]
        %v1631 = vld [vmem:[%s806 + $0x10] sm:$0xff]
        %v1632 = vld [vmem:[%s806 + $0x18] sm:$0xff]
        %v1633 = vld [vmem:[%s806 + $0x20] sm:$0xff]
        %v1634 = vld [vmem:[%s806 + $0x28] sm:$0xff]
        %v1635 = vld [vmem:[%s806 + $0x30] sm:$0xff]
        %v1636 = vld [vmem:[%s806 + $0x38] sm:$0xff]
        %v1637 = vpack.c.bf16 %v1606, %v1606
        %v1638 = vld [vmem:[%s10] sm:$0xf]
        %v1639 = vld [vmem:[%s10 + $0x4] sm:$0xf]
        %v1640 = vld [vmem:[%s10 + $0x8] sm:$0xf]
        %v1641 = vld [vmem:[%s10 + $0xc] sm:$0xf]
        %v1642 = vpack.c.bf16 %v1628, %v1628
        %v1643 = vld [vmem:[%s11] sm:$0xf]
        %v1644 = vld [vmem:[%s11 + $0x4] sm:$0xf]
        %v1645 = vld [vmem:[%s11 + $0x8] sm:$0xf]
        %v1646 = vld [vmem:[%s11 + $0xc] sm:$0xf]
        %1648 = vrot.lane.b32.xlu0 %v1642, 32
        %v1649 = vpop.permute.xlu0 %1648
        %v1654 = vunpack.c.l.b16 %v1643
        %v1655 = vunpack.c.l.b16 %v1644
        %v1656 = vunpack.c.l.b16 %v1645
        %v1657 = vunpack.c.l.b16 %v1646
        %v1658 = vpack.c.b16 %v1655, %v1654
        %v1659 = vpack.c.b16 %v1657, %v1656
        %v1663 = vsel %vm849, %v1649, 0
        %1665 = vmatpush.bf16.msra.mxu0 0
        %1666 = vmatpush.bf16.msra.mxu0 0
        %1667 = vmatpush.bf16.msra.mxu0 0
        %1668 = vmatpush.bf16.msra.mxu0 0
        %1669 = vmatpush.bf16.msra.mxu0 0
        %1670 = vmatpush.bf16.msra.mxu0 0
        %1671 = vmatpush.bf16.msra.mxu0 %v1659
        %1672 = vmatpush.bf16.msra.mxu0 %v1658
        %1673 = vmatmul.bf16.gmra.mxu0 %v1663
        %v1674 = vpop.f32.mrf.mxu0
        %v1675 = vadd.f32 0.0, %v1674
        %v1676 = vpop.f32.mrf.mxu0
        %1677 = vdwg.mxu0
        %1679 = vrot.lane.b32.xlu0 %v1637, 32
        %v1680 = vpop.permute.xlu0 %1679
        %v1685 = vunpack.c.l.b16 %v1638
        %v1686 = vunpack.c.l.b16 %v1639
        %v1687 = vunpack.c.l.b16 %v1640
        %v1688 = vunpack.c.l.b16 %v1641
        %v1689 = vpack.c.b16 %v1686, %v1685
        %v1690 = vpack.c.b16 %v1688, %v1687
        %v1694 = vsel %vm849, %v1680, 0
        %1696 = vmatpush.bf16.msra.mxu0 0
        %1697 = vmatpush.bf16.msra.mxu0 0
        %1698 = vmatpush.bf16.msra.mxu0 0
        %1699 = vmatpush.bf16.msra.mxu0 0
        %1700 = vmatpush.bf16.msra.mxu0 0
        %1701 = vmatpush.bf16.msra.mxu0 0
        %1702 = vmatpush.bf16.msra.mxu0 %v1690
        %1703 = vmatpush.bf16.msra.mxu0 %v1689
        %1704 = vmatmul.bf16.gmra.mxu0 %v1694
        %v1705 = vpop.f32.mrf.mxu0
        %v1706 = vadd.f32 %v1675, %v1705
        %v1707 = vpop.f32.mrf.mxu0
        %1708 = vdwg.mxu0
        %v1710 = vrot.slane %v1706, 1
        %v1711 = vrot.slane %v1706, 2
        %v1712 = vrot.slane %v1706, 3
        %v1713 = vrot.slane %v1706, 4
        %v1714 = vrot.slane %v1706, 5
        %v1715 = vrot.slane %v1706, 6
        %v1716 = vrot.slane %v1706, 7
        %v1717 = vperm.slane %v1706, 0
        %v1718 = vperm.slane %v1710, 0
        %v1719 = vperm.slane %v1711, 0
        %v1720 = vperm.slane %v1712, 0
        %v1721 = vperm.slane %v1713, 0
        %v1722 = vperm.slane %v1714, 0
        %v1723 = vperm.slane %v1715, 0
        %v1724 = vperm.slane %v1716, 0
        %v1733 = vmul.f32 %v1629, %v1717
        %v1734 = vmul.f32 %v1630, %v1718
        %v1735 = vmul.f32 %v1631, %v1719
        %v1736 = vmul.f32 %v1632, %v1720
        %v1737 = vmul.f32 %v1633, %v1721
        %v1738 = vmul.f32 %v1634, %v1722
        %v1739 = vmul.f32 %v1635, %v1723
        %v1740 = vmul.f32 %v1636, %v1724
        %v1741 = vsel %vm952, %v1733, 0.0
        %1742 = vadd.xlane.f32.xlu0 %v1741
        %v1743 = vpop.xlane.xlu0 %1742
        %v1744 = vsel %vm952, %v1734, 0.0
        %1745 = vadd.xlane.f32.xlu0 %v1744
        %v1746 = vpop.xlane.xlu0 %1745
        %v1747 = vsel %vm952, %v1735, 0.0
        %1748 = vadd.xlane.f32.xlu0 %v1747
        %v1749 = vpop.xlane.xlu0 %1748
        %v1750 = vsel %vm952, %v1736, 0.0
        %1751 = vadd.xlane.f32.xlu0 %v1750
        %v1752 = vpop.xlane.xlu0 %1751
        %v1753 = vsel %vm952, %v1737, 0.0
        %1754 = vadd.xlane.f32.xlu0 %v1753
        %v1755 = vpop.xlane.xlu0 %1754
        %v1756 = vsel %vm952, %v1738, 0.0
        %1757 = vadd.xlane.f32.xlu0 %v1756
        %v1758 = vpop.xlane.xlu0 %1757
        %v1759 = vsel %vm952, %v1739, 0.0
        %1760 = vadd.xlane.f32.xlu0 %v1759
        %v1761 = vpop.xlane.xlu0 %1760
        %v1762 = vsel %vm952, %v1740, 0.0
        %1763 = vadd.xlane.f32.xlu0 %v1762
        %v1764 = vpop.xlane.xlu0 %1763
        %v1773 = vlaneseq
        %v1774 = vand.u32 %v1773, 127
        %v1775 = vperm.slane %v1743, %v1774
        %v1776 = vperm.slane %v1746, %v1774
        %v1777 = vperm.slane %v1749, %v1774
        %v1778 = vperm.slane %v1752, %v1774
        %v1779 = vperm.slane %v1755, %v1774
        %v1780 = vperm.slane %v1758, %v1774
        %v1781 = vperm.slane %v1761, %v1774
        %v1782 = vperm.slane %v1764, %v1774
        %vm1783 = vcmask 1041409
        %v1784 = vsel %vm1783, %v1776, %v1775
        %vm1785 = vcmask 1042434
        %v1786 = vsel %vm1785, %v1777, %v1784
        %vm1787 = vcmask 1043459
        %v1788 = vsel %vm1787, %v1778, %v1786
        %vm1789 = vcmask 1044484
        %v1790 = vsel %vm1789, %v1779, %v1788
        %vm1791 = vcmask 1045509
        %v1792 = vsel %vm1791, %v1780, %v1790
        %vm1793 = vcmask 1046534
        %v1794 = vsel %vm1793, %v1781, %v1792
        %vm1795 = vcmask 1047559
        %v1796 = vsel %vm1795, %v1782, %v1794
        %vm1798 = vcmask 64512
        %v1799 = vsel %vm1798, %v1796, -inf
        %1800 = vmax.xlane.f32.xlu0 %v1799
        %v1801 = vpop.xlane.xlu0 %1800
        %v1803 = vperm.slane %v1801, 0
        %v1804 = vperm.slane %v1801, 1
        %v1805 = vperm.slane %v1801, 2
        %v1806 = vperm.slane %v1801, 3
        %v1807 = vperm.slane %v1801, 4
        %v1808 = vperm.slane %v1801, 5
        %v1809 = vperm.slane %v1801, 6
        %v1810 = vperm.slane %v1801, 7
        %v1819 = vsub.f32 %v1743, %v1803
        %v1820 = vsub.f32 %v1746, %v1804
        %v1821 = vsub.f32 %v1749, %v1805
        %v1822 = vsub.f32 %v1752, %v1806
        %v1823 = vsub.f32 %v1755, %v1807
        %v1824 = vsub.f32 %v1758, %v1808
        %v1825 = vsub.f32 %v1761, %v1809
        %v1826 = vsub.f32 %v1764, %v1810
        %v1827 = vmul.f32 %v1819, 1.442695
        %v1828 = vpow.pop %v1827
        %v1829 = vmul.f32 %v1820, 1.442695
        %v1830 = vpow.pop %v1829
        %v1831 = vmul.f32 %v1821, 1.442695
        %v1832 = vpow.pop %v1831
        %v1833 = vmul.f32 %v1822, 1.442695
        %v1834 = vpow.pop %v1833
        %v1835 = vmul.f32 %v1823, 1.442695
        %v1836 = vpow.pop %v1835
        %v1837 = vmul.f32 %v1824, 1.442695
        %v1838 = vpow.pop %v1837
        %v1839 = vmul.f32 %v1825, 1.442695
        %v1840 = vpow.pop %v1839
        %v1841 = vmul.f32 %v1826, 1.442695
        %v1842 = vpow.pop %v1841
        %1851 = vset.pattern.permute.xlu0 0
        %1852 = vperm.xlu0 %1851, %v1828
        %v1853 = vpop.permute.xlu0 %1852
        %1854 = vset.pattern.permute.xlu0 0
        %1855 = vperm.xlu0 %1854, %v1830
        %v1856 = vpop.permute.xlu0 %1855
        %1857 = vset.pattern.permute.xlu0 0
        %1858 = vperm.xlu0 %1857, %v1832
        %v1859 = vpop.permute.xlu0 %1858
        %1860 = vset.pattern.permute.xlu0 0
        %1861 = vperm.xlu0 %1860, %v1834
        %v1862 = vpop.permute.xlu0 %1861
        %1863 = vset.pattern.permute.xlu0 0
        %1864 = vperm.xlu0 %1863, %v1836
        %v1865 = vpop.permute.xlu0 %1864
        %1866 = vset.pattern.permute.xlu0 0
        %1867 = vperm.xlu0 %1866, %v1838
        %v1868 = vpop.permute.xlu0 %1867
        %1869 = vset.pattern.permute.xlu0 0
        %1870 = vperm.xlu0 %1869, %v1840
        %v1871 = vpop.permute.xlu0 %1870
        %1872 = vset.pattern.permute.xlu0 0
        %1873 = vperm.xlu0 %1872, %v1842
        %v1874 = vpop.permute.xlu0 %1873
        %v1875 = vperm.slane %v1853, %v1774
        %v1876 = vperm.slane %v1856, %v1774
        %v1877 = vperm.slane %v1859, %v1774
        %v1878 = vperm.slane %v1862, %v1774
        %v1879 = vperm.slane %v1865, %v1774
        %v1880 = vperm.slane %v1868, %v1774
        %v1881 = vperm.slane %v1871, %v1774
        %v1882 = vperm.slane %v1874, %v1774
        %v1883 = vsel %vm1783, %v1876, %v1875
        %v1884 = vsel %vm1785, %v1877, %v1883
        %v1885 = vsel %vm1787, %v1878, %v1884
        %v1886 = vsel %vm1789, %v1879, %v1885
        %v1887 = vsel %vm1791, %v1880, %v1886
        %v1888 = vsel %vm1793, %v1881, %v1887
        %v1889 = vsel %vm1795, %v1882, %v1888
        %v1891 = vsel %vm1798, %v1889, 0.0
        %1892 = vadd.xlane.f32.xlu0 %v1891
        %v1893 = vpop.xlane.xlu0 %1892
        %v1894 = vrcp.pop %v1893
        %v1896 = vperm.slane %v1894, 0
        %v1897 = vperm.slane %v1894, 1
        %v1898 = vperm.slane %v1894, 2
        %v1899 = vperm.slane %v1894, 3
        %v1900 = vperm.slane %v1894, 4
        %v1901 = vperm.slane %v1894, 5
        %v1902 = vperm.slane %v1894, 6
        %v1903 = vperm.slane %v1894, 7
        %v1912 = vmul.f32 %v1828, %v1896
        %v1913 = vmul.f32 %v1830, %v1897
        %v1914 = vmul.f32 %v1832, %v1898
        %v1915 = vmul.f32 %v1834, %v1899
        %v1916 = vmul.f32 %v1836, %v1900
        %v1917 = vmul.f32 %v1838, %v1901
        %v1918 = vmul.f32 %v1840, %v1902
        %v1919 = vmul.f32 %v1842, %v1903
        %1921 = vset.pattern.permute.xlu0 0
        %1922 = vperm.xlu0 %1921, %v1912
        %v1923 = vpop.permute.xlu0 %1922
        %1926 = vset.pattern.permute.xlu0 0
        %1927 = vperm.xlu0 %1926, %v1913
        %v1928 = vpop.permute.xlu0 %1927
        %1931 = vset.pattern.permute.xlu0 0
        %1932 = vperm.xlu0 %1931, %v1914
        %v1933 = vpop.permute.xlu0 %1932
        %1936 = vset.pattern.permute.xlu0 0
        %1937 = vperm.xlu0 %1936, %v1915
        %v1938 = vpop.permute.xlu0 %1937
        %1941 = vset.pattern.permute.xlu0 0
        %1942 = vperm.xlu0 %1941, %v1916
        %v1943 = vpop.permute.xlu0 %1942
        %1946 = vset.pattern.permute.xlu0 0
        %1947 = vperm.xlu0 %1946, %v1917
        %v1948 = vpop.permute.xlu0 %1947
        %1951 = vset.pattern.permute.xlu0 0
        %1952 = vperm.xlu0 %1951, %v1918
        %v1953 = vpop.permute.xlu0 %1952
        %1956 = vset.pattern.permute.xlu0 0
        %1957 = vperm.xlu0 %1956, %v1919
        %v1958 = vpop.permute.xlu0 %1957
        %v1960 = vmul.f32 %v1629, %v1923
        %v1961 = vmul.f32 %v1630, %v1928
        %v1962 = vmul.f32 %v1631, %v1933
        %v1963 = vmul.f32 %v1632, %v1938
        %v1964 = vmul.f32 %v1633, %v1943
        %v1965 = vmul.f32 %v1634, %v1948
        %v1966 = vmul.f32 %v1635, %v1953
        %v1967 = vmul.f32 %v1636, %v1958
        %v1968 = vsel %vm952, %v1960, 0.0
        %v1969 = vrot.slane %v1968, 4
        %v1970 = vadd.f32 %v1968, %v1969
        %v1971 = vrot.slane %v1970, 2
        %v1972 = vadd.f32 %v1970, %v1971
        %v1973 = vrot.slane %v1972, 1
        %v1974 = vadd.f32 %v1972, %v1973
        %v1975 = vsel %vm952, %v1961, 0.0
        %v1976 = vrot.slane %v1975, 4
        %v1977 = vadd.f32 %v1975, %v1976
        %v1978 = vrot.slane %v1977, 2
        %v1979 = vadd.f32 %v1977, %v1978
        %v1980 = vrot.slane %v1979, 1
        %v1981 = vadd.f32 %v1979, %v1980
        %v1982 = vsel %vm952, %v1962, 0.0
        %v1983 = vrot.slane %v1982, 4
        %v1984 = vadd.f32 %v1982, %v1983
        %v1985 = vrot.slane %v1984, 2
        %v1986 = vadd.f32 %v1984, %v1985
        %v1987 = vrot.slane %v1986, 1
        %v1988 = vadd.f32 %v1986, %v1987
        %v1989 = vsel %vm952, %v1963, 0.0
        %v1990 = vrot.slane %v1989, 4
        %v1991 = vadd.f32 %v1989, %v1990
        %v1992 = vrot.slane %v1991, 2
        %v1993 = vadd.f32 %v1991, %v1992
        %v1994 = vrot.slane %v1993, 1
        %v1995 = vadd.f32 %v1993, %v1994
        %v1996 = vsel %vm952, %v1964, 0.0
        %v1997 = vrot.slane %v1996, 4
        %v1998 = vadd.f32 %v1996, %v1997
        %v1999 = vrot.slane %v1998, 2
        %v2000 = vadd.f32 %v1998, %v1999
        %v2001 = vrot.slane %v2000, 1
        %v2002 = vadd.f32 %v2000, %v2001
        %v2003 = vsel %vm952, %v1965, 0.0
        %v2004 = vrot.slane %v2003, 4
        %v2005 = vadd.f32 %v2003, %v2004
        %v2006 = vrot.slane %v2005, 2
        %v2007 = vadd.f32 %v2005, %v2006
        %v2008 = vrot.slane %v2007, 1
        %v2009 = vadd.f32 %v2007, %v2008
        %v2010 = vsel %vm952, %v1966, 0.0
        %v2011 = vrot.slane %v2010, 4
        %v2012 = vadd.f32 %v2010, %v2011
        %v2013 = vrot.slane %v2012, 2
        %v2014 = vadd.f32 %v2012, %v2013
        %v2015 = vrot.slane %v2014, 1
        %v2016 = vadd.f32 %v2014, %v2015
        %v2017 = vsel %vm952, %v1967, 0.0
        %v2018 = vrot.slane %v2017, 4
        %v2019 = vadd.f32 %v2017, %v2018
        %v2020 = vrot.slane %v2019, 2
        %v2021 = vadd.f32 %v2019, %v2020
        %v2022 = vrot.slane %v2021, 1
        %v2023 = vadd.f32 %v2021, %v2022
        %v2024 = vpack.c.bf16 %v1974, %v1974
        %v2025 = vpack.c.bf16 %v1981, %v1981
        %v2026 = vpack.c.bf16 %v1988, %v1988
        %v2027 = vpack.c.bf16 %v1995, %v1995
        %v2028 = vpack.c.bf16 %v2002, %v2002
        %v2029 = vpack.c.bf16 %v2009, %v2009
        %v2030 = vpack.c.bf16 %v2016, %v2016
        %v2031 = vpack.c.bf16 %v2023, %v2023
        %v2032 = vld [vmem:[%s12] sm:$0xf]
        %v2033 = vld [vmem:[%s12 + $0x4] sm:$0xf]
        %v2034 = vld [vmem:[%s12 + $0x8] sm:$0xf]
        %v2035 = vld [vmem:[%s12 + $0xc] sm:$0xf]
        %v2036 = vld [vmem:[%s12 + $0x10] sm:$0xf]
        %v2037 = vld [vmem:[%s12 + $0x14] sm:$0xf]
        %v2038 = vld [vmem:[%s12 + $0x18] sm:$0xf]
        %v2039 = vld [vmem:[%s12 + $0x1c] sm:$0xf]
        %v2040 = vld [vmem:[%s13] sm:$0xf]
        %v2041 = vld [vmem:[%s13 + $0x4] sm:$0xf]
        %v2042 = vld [vmem:[%s13 + $0x8] sm:$0xf]
        %v2043 = vld [vmem:[%s13 + $0xc] sm:$0xf]
        %v2048 = vunpack.c.l.b16 %v2040
        %v2049 = vunpack.c.l.b16 %v2041
        %v2050 = vunpack.c.l.b16 %v2042
        %v2051 = vunpack.c.l.b16 %v2043
        %v2052 = vpack.c.b16 %v2049, %v2048
        %v2053 = vpack.c.b16 %v2051, %v2050
        %2056 = vmatpush.bf16.msra.mxu0 0
        %2057 = vmatpush.bf16.msra.mxu0 0
        %2058 = vmatpush.bf16.msra.mxu0 0
        %2059 = vmatpush.bf16.msra.mxu0 0
        %2060 = vmatpush.bf16.msra.mxu0 0
        %2061 = vmatpush.bf16.msra.mxu0 0
        %2062 = vmatpush.bf16.msra.mxu0 %v2053
        %2063 = vmatpush.bf16.msra.mxu0 %v2052
        %2064 = vmatmul.bf16.gmra.mxu0 %v1694
        %v2065 = vpop.f32.mrf.mxu0
        %v2066 = vadd.f32 0.0, %v2065
        %v2067 = vpop.f32.mrf.mxu0
        %2068 = vdwg.mxu0
        %v2077 = vunpack.c.l.b16 %v2024
        %v2078 = vunpack.c.l.b16 %v2025
        %v2079 = vunpack.c.l.b16 %v2026
        %v2080 = vunpack.c.l.b16 %v2027
        %v2081 = vunpack.c.l.b16 %v2028
        %v2082 = vunpack.c.l.b16 %v2029
        %v2083 = vunpack.c.l.b16 %v2030
        %v2084 = vunpack.c.l.b16 %v2031
        %v2085 = vsel %vm1783, %v2078, %v2077
        %v2086 = vsel %vm1785, %v2079, %v2085
        %v2087 = vsel %vm1787, %v2080, %v2086
        %v2088 = vsel %vm1789, %v2081, %v2087
        %v2089 = vsel %vm1791, %v2082, %v2088
        %v2090 = vsel %vm1793, %v2083, %v2089
        %v2091 = vsel %vm1795, %v2084, %v2090
        %v2092 = vpack.c.b16 %v2091, %v2091
        %v2101 = vunpack.c.l.b16 %v2032
        %v2102 = vunpack.c.l.b16 %v2033
        %v2103 = vunpack.c.l.b16 %v2034
        %v2104 = vunpack.c.l.b16 %v2035
        %v2105 = vunpack.c.l.b16 %v2036
        %v2106 = vunpack.c.l.b16 %v2037
        %v2107 = vunpack.c.l.b16 %v2038
        %v2108 = vunpack.c.l.b16 %v2039
        %v2109 = vpack.c.b16 %v2102, %v2101
        %v2110 = vpack.c.b16 %v2104, %v2103
        %v2111 = vpack.c.b16 %v2106, %v2105
        %v2112 = vpack.c.b16 %v2108, %v2107
        %v2118 = vsel %vm952, %v2092, 0
        %2120 = vmatpush.bf16.msra.mxu0 0
        %2121 = vmatpush.bf16.msra.mxu0 0
        %2122 = vmatpush.bf16.msra.mxu0 0
        %2123 = vmatpush.bf16.msra.mxu0 0
        %2124 = vmatpush.bf16.msra.mxu0 %v2112
        %2125 = vmatpush.bf16.msra.mxu0 %v2111
        %2126 = vmatpush.bf16.msra.mxu0 %v2110
        %2127 = vmatpush.bf16.msra.mxu0 %v2109
        %2128 = vmatmul.bf16.gmra.mxu0 %v2118
        %v2129 = vpop.f32.mrf.mxu0
        %v2130 = vadd.f32 %v2066, %v2129
        %v2131 = vpop.f32.mrf.mxu0
        %2132 = vdwg.mxu0
        %v2133 = vld [vmem:[%s14] sm:$0xf]
        %v2134 = vld [vmem:[%s14 + $0x4] sm:$0xf]
        %v2135 = vld [vmem:[%s14 + $0x8] sm:$0xf]
        %v2136 = vld [vmem:[%s14 + $0xc] sm:$0xf]
        %v2141 = vunpack.c.l.b16 %v2133
        %v2142 = vunpack.c.l.b16 %v2134
        %v2143 = vunpack.c.l.b16 %v2135
        %v2144 = vunpack.c.l.b16 %v2136
        %v2145 = vpack.c.b16 %v2142, %v2141
        %v2146 = vpack.c.b16 %v2144, %v2143
        %2149 = vmatpush.bf16.msra.mxu0 0
        %2150 = vmatpush.bf16.msra.mxu0 0
        %2151 = vmatpush.bf16.msra.mxu0 0
        %2152 = vmatpush.bf16.msra.mxu0 0
        %2153 = vmatpush.bf16.msra.mxu0 0
        %2154 = vmatpush.bf16.msra.mxu0 0
        %2155 = vmatpush.bf16.msra.mxu0 %v2146
        %2156 = vmatpush.bf16.msra.mxu0 %v2145
        %2157 = vmatmul.bf16.gmra.mxu0 %v1663
        %v2158 = vpop.f32.mrf.mxu0
        %v2159 = vadd.f32 0.0, %v2158
        %v2160 = vpop.f32.mrf.mxu0
        %2161 = vdwg.mxu0
        %v2162 = vadd.f32 %v2130, %v2159
        %v2163 = vld [vmem:[%s15] sm:$0x1]
        %v2165 = vperm.slane %v2163, 0
        %v2167 = vadd.f32 %v2162, %v2165
        %v2168 = vtanh.pop %v2167
        %v2169 = vpack.c.bf16 %v2168, %v2168
        %v2170 = vld [vmem:[%s16] sm:$0xf]
        %v2171 = vld [vmem:[%s16 + $0x4] sm:$0xf]
        %v2172 = vld [vmem:[%s16 + $0x8] sm:$0xf]
        %v2173 = vld [vmem:[%s16 + $0xc] sm:$0xf]
        %v2174 = vld [vmem:[%s17] sm:$0x1]
        %v2176 = vperm.slane %v2174, 0
        %v2182 = vunpack.c.l.b16 %v2170
        %v2183 = vunpack.c.l.b16 %v2171
        %v2184 = vunpack.c.l.b16 %v2172
        %v2185 = vunpack.c.l.b16 %v2173
        %v2186 = vpack.c.b16 %v2183, %v2182
        %v2187 = vpack.c.b16 %v2185, %v2184
        %v2191 = vsel %vm849, %v2169, 0
        %2193 = vmatpush.bf16.msra.mxu0 0
        %2194 = vmatpush.bf16.msra.mxu0 0
        %2195 = vmatpush.bf16.msra.mxu0 0
        %2196 = vmatpush.bf16.msra.mxu0 0
        %2197 = vmatpush.bf16.msra.mxu0 0
        %2198 = vmatpush.bf16.msra.mxu0 0
        %2199 = vmatpush.bf16.msra.mxu0 %v2187
        %2200 = vmatpush.bf16.msra.mxu0 %v2186
        %2201 = vmatmul.bf16.gmra.mxu0 %v2191
        %v2202 = vpop.f32.mrf.mxu0
        %v2203 = vadd.f32 %v2176, %v2202
        %v2204 = vpop.f32.mrf.mxu0
        %2205 = vdwg.mxu0
        %2206 = vmax.xlane.f32.xlu0 %v2203
        %v2207 = vpop.xlane.xlu0 %2206
        %v2208 = vsub.f32 %v2203, %v2207
        %v2209 = vmul.f32 %v2208, 1.442695
        %v2210 = vpow.pop %v2209
        %2211 = vadd.xlane.f32.xlu0 %v2210
        %v2212 = vpop.xlane.xlu0 %2211
        %v2213 = vlog2.pop %v2212
        %v2214 = vmul.f32 %v2213, 0.6931472
        %v2215 = vsub.f32 %v2208, %v2214
        %2216 = vst [vmem:[%s794] sm:$0xff] %v2215
        %2218 = vrot.lane.b32.xlu0 %v1606, 96
        %v2219 = vpop.permute.xlu0 %2218
        %2222 = vrot.lane.b32.xlu0 %v1177, 96
        %v2223 = vpop.permute.xlu0 %2222
        %2226 = vrot.lane.b32.xlu0 %v1600, 32
        %v2227 = vpop.permute.xlu0 %2226
        %2230 = vrot.lane.b32.xlu0 %v1622, 64
        %v2231 = vpop.permute.xlu0 %2230
        %v2233 = vsel %vm849, %v1213, %v1208
        %v2234 = vsel %vm952, %v2233, %v2219
        %vm2235 = vcmask 785408
        %v2236 = vsel %vm2235, %v2234, %v1628
        %v2237 = vsel %vm849, %v2223, %v1199
        %v2238 = vsel %vm952, %v2237, %v2227
        %v2239 = vsel %vm2235, %v2238, %v2231
        %2240 = vst [vmem:[%s812] sm:$0xff] %v2236
        %2241 = vst [vmem:[%s812 + $0x8] sm:$0xff] %v2239
        %s2242 = sand.u32 %s440, 1
        %s2243 = scalar_lea.sflag [#allocation6], %s2242
        %s2244 = sand.u32 %s440, 1
        %s2245 = smul.addr %s2244, 8
        %s2246 = scalar_lea.vmem [#allocation5], %s2245
        %p2247 = scmp.lt.s32.totalorder %s34, 1
        %s2248 = scalar_select %p2247, %s34, 1
        %s2249 = smul.addr %s2248, 2
        %s2250 = smul.addr %s2249, 8
        %s2251 = scalar_lea.vmem %s19, %s2250
        // Predicated region
        $region207: #{decoder_attn_forward.1} parent=193 // pred_check
          %p2252 = pneg %p450
        $region208: #{decoder_attn_forward.1} parent=193 // pred_check_branch
          %2254 = sbr.rel (%p2252) target = $region210
        $region209: #{decoder_attn_forward.1} parent=193 // pred_region
          %2256 = vsyncadd %s2243, 0
          %s2257 = smul.addr %s34, 8
          %s2258 = scalar_lea.hbm %s18, %s2257
          %s2260 = sshll.u32 %s2246, 4
          %s2261 = int_to_ptr.vmem [resolvable:$true] %s2260
          %s2262 = sshll.u32 %s2258, 4
          %s2263 = int_to_ptr.hbm [resolvable:$true] %s2262
          %2265 = dma.vmem_to_hbm [thread:$0]  %s2261, 128, %s2263, %s2243
        $region210: #{decoder_attn_forward.1} parent=193 // pred_fallthru
          _
        // Predicated region
        $region211: #{decoder_attn_forward.1} parent=193 // pred_check
          %p2266 = pneg %p476
        $region212: #{decoder_attn_forward.1} parent=193 // pred_check_branch
          %2268 = sbr.rel (%p2266) target = $region214
        $region213: #{decoder_attn_forward.1} parent=193 // pred_region
          _
        $region214: #{decoder_attn_forward.1} parent=193 // pred_fallthru
          _
      $region194: #{decoder_attn_forward.1} parent=5 // pred_fallthru
        _
      %p2269 = scmp.le.s32.totalorder 2, %s29
      // Predicated region
      $region215: #{decoder_attn_forward.1} parent=5 // pred_check
        %p2270 = pneg %p2269
      $region216: #{decoder_attn_forward.1} parent=5 // pred_check_branch
        %2272 = sbr.rel (%p2270) target = $region218
      $region217: #{decoder_attn_forward.1} parent=5 // pred_region
        %s2273 = ssub.s32 %s29, 2
        // Predicated region
        $region219: #{decoder_attn_forward.1} parent=217 // pred_check
          %p2274 = pneg %p456
        $region220: #{decoder_attn_forward.1} parent=217 // pred_check_branch
          %2276 = sbr.rel (%p2274) target = $region222
        $region221: #{decoder_attn_forward.1} parent=217 // pred_region
          %s2277 = sand.u32 %s441, 1
          %s2278 = scalar_lea.sflag [#allocation6], %s2277
          %s2279 = sand.u32 %s441, 1
          %s2280 = smul.addr %s2279, 8
          %s2281 = scalar_lea.vmem [#allocation5], %s2280
          %2283 = dma.done %s2278, 128
        $region222: #{decoder_attn_forward.1} parent=217 // pred_fallthru
          _
        // Predicated region
        $region223: #{decoder_attn_forward.1} parent=217 // pred_check
          %p2284 = pneg %p482
        $region224: #{decoder_attn_forward.1} parent=217 // pred_check_branch
          %2286 = sbr.rel (%p2284) target = $region226
        $region225: #{decoder_attn_forward.1} parent=217 // pred_region
          %p2287 = scmp.lt.s32.totalorder %s35, 1
          %s2288 = scalar_select %p2287, %s35, 1
          %s2289 = smul.addr %s2288, 2
          %s2290 = smul.addr %s2289, 8
          %s2291 = scalar_lea.vmem %s19, %s2290
        $region226: #{decoder_attn_forward.1} parent=217 // pred_fallthru
          _
      $region218: #{decoder_attn_forward.1} parent=5 // pred_fallthru
        _
    $region6: #{decoder_attn_forward.1} parent=1 // loop_footer
      %s33 = sadd.s32 1, %s29
    $region7: #{decoder_attn_forward.1} parent=1 // loop_footer_branch
      %28 = sbr.rel target = $region3
    $region8: #{decoder_attn_forward.1} parent=1 // loop_exit
      _
    %2292 = vsyncpa [#allocation6], 1
    %s2293 = scalar_lea.sflag [#allocation6], 1
    %2294 = vsyncpa %s2293, 1

</llo_original>
